<compile_context>
chip_gen: v7x
topology: tpu7x:2x2x1
jax: 0.10.0
libtpu: 0.0.40
codegen_flags: <defaults>
</compile_context>

<pallas_src>
import math
import jax
import jax.numpy as jnp
from jax import lax
from jax.experimental import pallas as pl
from jax.experimental.pallas import tpu as pltpu

B_J0 = 0.1   # b_j0
BETA = 1.8   # isAdapt=1 branch


def _sigmoid(x):
    return 1.0 / (1.0 + jnp.exp(-x))


def snn_seq_kernel(
    # inputs
    din_ref,                                   # (T, Bb, 3H) f32  = [x@W_in | x@W_in@Wtm_d | x@W_in@Wta_d] + biases
    mem0_ref, spk0_ref, b0_ref, memout0_ref,   # initial state (Bb, H) x3, (Bb, O)
    w_spk_ref,                                 # (H, 3H) bf16 = [W_rec | W_rec@Wtm_d | W_rec@Wta_d]
    wtm_m_ref,                                 # (H, H)  bf16
    wta_b_ref,                                 # (H, H)  bf16
    w3_ref,                                    # (H, O)  bf16
    b3_ref,                                    # (1, O)  f32
    tau_m2_ref,                                # (1, O)  f32 = sigmoid(tau_m_o), hoisted
    # outputs
    fout_ref,                                  # (T, Bb, O) per-step log_softmax
    memf_ref, spkf_ref, bf_ref, memoutf_ref,   # final state
):
    T = din_ref.shape[0]
    Bb = din_ref.shape[1]
    H = mem0_ref.shape[-1]
    out_n = memout0_ref.shape[-1]

    # Resident weights loaded once; bias / tau broadcasts hoisted out of the loop.
    w_spk = w_spk_ref[...]
    wtm_m = wtm_m_ref[...]
    wta_b = wta_b_ref[...]
    w3 = w3_ref[...]
    b3 = jnp.broadcast_to(b3_ref[...], (Bb, out_n))
    tau_m2 = jnp.broadcast_to(tau_m2_ref[...], (Bb, out_n))
    one = jnp.float32(1.0)

    def step(t, carry):
        mem, spk, bt, mem_out = carry

        # Three mutually independent dots (given the state) issued back-to-back.
        pre = din_ref[t] + jnp.dot(spk.astype(jnp.bfloat16), w_spk,
                                   preferred_element_type=jnp.float32)    # (Bb, 3H)
        mem_proj = jnp.dot(mem.astype(jnp.bfloat16), wtm_m,
                           preferred_element_type=jnp.float32)            # (Bb, H)
        b_proj = jnp.dot(bt.astype(jnp.bfloat16), wta_b,
                         preferred_element_type=jnp.float32)              # (Bb, H)

        dense_x = pre[:, :H]
        tau_m = _sigmoid(pre[:, H:2 * H] + mem_proj)
        tau_adp = _sigmoid(pre[:, 2 * H:] + b_proj)

        # mem_update_adp (isAdapt=1)
        b_new = tau_adp * bt + (one - tau_adp) * spk
        b_thr = B_J0 + BETA * b_new
        mem_new = mem + (dense_x - mem) * tau_m
        spike = (mem_new - b_thr > 0.0).astype(jnp.float32)   # ActFun_adp forward
        mem_new = (one - spike) * mem_new

        # dropout(p=0.1) in eval mode == identity
        # readout: leaky integrator (output_Neuron)
        dense3 = jnp.dot(spike.astype(jnp.bfloat16), w3,
                         preferred_element_type=jnp.float32) + b3
        mem_out_new = mem_out + (dense3 - mem_out) * tau_m2

        fout_ref[t] = mem_out_new   # raw membrane; log_softmax done once after loop
        return mem_new, spike, b_new, mem_out_new

    carry0 = (mem0_ref[...], spk0_ref[...], b0_ref[...], memout0_ref[...])
    mem_f, spk_f, b_f, memout_f = lax.fori_loop(0, T, step, carry0,
                                                unroll=(T <= 16))

    memf_ref[...] = mem_f
    spkf_ref[...] = spk_f
    bf_ref[...] = b_f
    memoutf_ref[...] = memout_f

    # One vectorized log_softmax pass over all T steps (amortizes the 16-lane
    # reduction / store instead of T tiny masked passes on the serial path).
    mo = fout_ref[...]
    mx = jnp.max(mo, axis=-1, keepdims=True)
    lse = mx + jnp.log(jnp.sum(jnp.exp(mo - mx), axis=-1, keepdims=True))
    fout_ref[...] = mo - lse


def snn_forward_sequence(inputs_seq, h, params, *, b_block=8):
    """Apply the module's forward over T timesteps in one fused Pallas call.

    inputs_seq: (T, B, C, Himg, Wimg) with C*(Himg//4)*(Wimg//4) == input_size
    h: (mem_3, spk_3, b_3, mem_out)
    returns (f_output_seq of shape (T, B, O), final_state)
    """
    T, B, C, Hi, Wi = inputs_seq.shape
    (w1x_in, w1x_rec, b1, wtm_d, wtm_m, btm, wta_d, wta_b, bta,
     w3, b3, tau_m_o) = params
    hidden = h[0].shape[-1]
    out_dim = h[3].shape[-1]

    # ---- glue (outside the recurrent kernel) -------------------------------
    # 4x4 avg-pool + channel-major flatten for the whole sequence at once.
    x_down = inputs_seq.reshape(T, B, C, Hi // 4, 4, Wi // 4, 4).mean(axis=(4, 6))
    x_down = x_down.reshape(T * B, C * (Hi // 4) * (Wi // 4))

    # Re-associated, hoisted input + gate projection: one batched bf16 MXU matmul
    # with a widened RHS [W_in | W_in@Wtm_d | W_in@Wta_d]; biases folded in.
    w_pre = jnp.concatenate([w1x_in, w1x_in @ wtm_d, w1x_in @ wta_d], axis=1)
    b_pre = jnp.concatenate([b1, b1 @ wtm_d + btm, b1 @ wta_d + bta], axis=1)
    din = jnp.dot(x_down.astype(jnp.bfloat16), w_pre.astype(jnp.bfloat16),
                  preferred_element_type=jnp.float32)
    din = din.reshape(T, B, 3 * hidden) + b_pre

    # Pad batch to the f32 sublane width (8): a (2,128) operand already occupies a
    # full (8,128) vreg / MXU push, so the padding is free and keeps stores dense.
    B_pad = ((B + b_block - 1) // b_block) * b_block
    pad = B_pad - B
    if pad:
        din = jnp.pad(din, ((0, 0), (0, pad), (0, 0)))
        h = tuple(jnp.pad(s, ((0, pad), (0, 0))) for s in h)

    # Resident in-kernel weights: re-associated spk weight + bf16 storage.
    w_spk = jnp.concatenate([w1x_rec, w1x_rec @ wtm_d, w1x_rec @ wta_d],
                            axis=1).astype(jnp.bfloat16)                 # (H, 3H)
    wtm_m_b = wtm_m.astype(jnp.bfloat16)
    wta_b_b = wta_b.astype(jnp.bfloat16)
    w3_b = w3.astype(jnp.bfloat16)
    tau_m2 = _sigmoid(tau_m_o.astype(jnp.float32))                       # (1, O)

    kernel_inputs = (din, h[0], h[1], h[2], h[3],
                     w_spk, wtm_m_b, wta_b_b, w3_b, b3, tau_m2)

    n_blk = B_pad // b_block
    const2 = lambda i: (0, 0)
    grid_spec = pltpu.PrefetchScalarGridSpec(
        num_scalar_prefetch=0,
        grid=(n_blk,),                                   # batch shards only; T is an in-kernel loop
        in_specs=[
            pl.BlockSpec((T, b_block, 3 * hidden), lambda i: (0, i, 0)),  # din (whole T)
            pl.BlockSpec((b_block, hidden), lambda i: (i, 0)),            # mem0
            pl.BlockSpec((b_block, hidden), lambda i: (i, 0)),            # spk0
            pl.BlockSpec((b_block, hidden), lambda i: (i, 0)),            # b0
            pl.BlockSpec((b_block, out_dim), lambda i: (i, 0)),           # mem_out0
            pl.BlockSpec((hidden, 3 * hidden), const2),                   # w_spk
            pl.BlockSpec((hidden, hidden), const2),                       # wtm_m
            pl.BlockSpec((hidden, hidden), const2),                       # wta_b
            pl.BlockSpec((hidden, out_dim), const2),                      # w3
            pl.BlockSpec((1, out_dim), const2),                           # b3
            pl.BlockSpec((1, out_dim), const2),                           # tau_m2
        ],
        out_specs=(
            pl.BlockSpec((T, b_block, out_dim), lambda i: (0, i, 0)),     # per-step log_softmax
            pl.BlockSpec((b_block, hidden), lambda i: (i, 0)),            # final mem
            pl.BlockSpec((b_block, hidden), lambda i: (i, 0)),            # final spk
            pl.BlockSpec((b_block, hidden), lambda i: (i, 0)),            # final b
            pl.BlockSpec((b_block, out_dim), lambda i: (i, 0)),           # final mem_out
        ),
    )

    flops_per_step = 2 * B_pad * hidden * (5 * hidden + out_dim) + 30 * B_pad * hidden
    bytes_accessed = (sum(int(a.size) * a.dtype.itemsize for a in kernel_inputs)
                      + 4 * (T * B_pad * out_dim + 3 * B_pad * hidden + B_pad * out_dim))
    cost = pl.CostEstimate(
        flops=int(T * flops_per_step),
        transcendentals=int(T * B_pad * (2 * hidden + out_dim + 1)),
        bytes_accessed=int(bytes_accessed),
    )

    out_shape = (
        jax.ShapeDtypeStruct((T, B_pad, out_dim), jnp.float32),  # f_output per step
        jax.ShapeDtypeStruct((B_pad, hidden), jnp.float32),      # mem_3
        jax.ShapeDtypeStruct((B_pad, hidden), jnp.float32),      # spk_3
        jax.ShapeDtypeStruct((B_pad, hidden), jnp.float32),      # b_3
        jax.ShapeDtypeStruct((B_pad, out_dim), jnp.float32),     # mem_out
    )

    f_out_pad, mem_f, spk_f, b_f, memout_f = pl.pallas_call(
        snn_seq_kernel,
        out_shape=out_shape,
        grid_spec=grid_spec,
        compiler_params=pltpu.CompilerParams(
            # Batch shards are independent (splits across v7x's 2 TCs when B >= 16);
            # the T recurrence is a serial in-kernel loop.
            dimension_semantics=("parallel",),
        ),
        cost_estimate=cost,
    )(*kernel_inputs)

    f_out_seq = f_out_pad[:, :B, :]
    final_state = (mem_f[:B], spk_f[:B], b_f[:B], memout_f[:B])
    return f_out_seq, final_state


def snn_forward(inputs, h, params):
    """Single step, matching the PyTorch SNN.forward returns (f_output, state, hiddens)."""
    f_out_seq, final_state = snn_forward_sequence(inputs[None], h, params)
    return f_out_seq[0], final_state, [final_state]


def _xavier_uniform(key, fan_in, fan_out, shape):
    bound = math.sqrt(6.0 / (fan_in + fan_out))
    return jax.random.uniform(key, shape, jnp.float32, -bound, bound)


def _bias_uniform(key, fan_in, shape):
    bound = 1.0 / math.sqrt(fan_in)
    return jax.random.uniform(key, shape, jnp.float32, -bound, bound)


def make_params(key, input_size, hidden, output):
    ks = jax.random.split(key, 8)
    # layer1_x: Linear(input_size + hidden, hidden), xavier_uniform (stored (in, out))
    w1x_full = _xavier_uniform(ks[0], input_size + hidden, hidden,
                               (input_size + hidden, hidden))
    w1x_in = w1x_full[:input_size]
    w1x_rec = w1x_full[input_size:]
    b1 = _bias_uniform(ks[1], input_size + hidden, (1, hidden))
    # layer1_tauM: Linear(2*hidden, hidden)  (cat order: dense_x, mem)
    wtm_full = _xavier_uniform(ks[2], 2 * hidden, hidden, (2 * hidden, hidden))
    wtm_d, wtm_m = wtm_full[:hidden], wtm_full[hidden:]
    btm = _bias_uniform(ks[3], 2 * hidden, (1, hidden))
    # layer1_tauAdp: Linear(2*hidden, hidden)  (cat order: dense_x, b)
    wta_full = _xavier_uniform(ks[4], 2 * hidden, hidden, (2 * hidden, hidden))
    wta_d, wta_b = wta_full[:hidden], wta_full[hidden:]
    bta = _bias_uniform(ks[5], 2 * hidden, (1, hidden))
    # layer3_x: Linear(hidden, output)
    w3 = _xavier_uniform(ks[6], hidden, output, (hidden, output))
    b3 = _bias_uniform(ks[7], hidden, (1, output))
    # tau_m_o: constant 0.0
    tau_m_o = jnp.zeros((1, output), jnp.float32)
    return (w1x_in, w1x_rec, b1, wtm_d, wtm_m, btm, wta_d, wta_b, bta,
            w3, b3, tau_m_o)


if __name__ == "__main__":
    key = jax.random.PRNGKey(0)
    k_in, k_par = jax.random.split(key)

    # DVS-gesture-like shapes: 2 channels, 128x128 -> 4x4 avgpool -> 2*32*32 = 2048
    # (2048 is hardwired inside the PyTorch module).
    T, B, C, Hi, Wi = 8, 2, 2, 128, 128
    hidden, output = 128, 16
    input_size = C * (Hi // 4) * (Wi // 4)   # 2048

    inputs_seq = jax.random.normal(k_in, (T, B, C, Hi, Wi), jnp.float32)
    h0 = (
        jnp.zeros((B, hidden), jnp.float32),  # mem_3
        jnp.zeros((B, hidden), jnp.float32),  # spk_3
        jnp.zeros((B, hidden), jnp.float32),  # b_3
        jnp.zeros((B, output), jnp.float32),  # mem_out
    )
    params = make_params(k_par, input_size, hidden, output)

    # Fused sequence forward (the hot path: one pallas_call, T-step loop in-kernel).
    fwd_seq = jax.jit(snn_forward_sequence)
    f_out_seq, final_state = fwd_seq(inputs_seq, h0, params)
    jax.block_until_ready(f_out_seq)
    jax.block_until_ready(final_state)

    # Single-step call matching the PyTorch module's forward signature/returns.
    f_output, new_h, hiddens = snn_forward(inputs_seq[0], h0, params)
    jax.block_until_ready(f_output)
    jax.block_until_ready(new_h)

    print("KERNEL_OK")
</pallas_src>

<mosaic_0001>
module attributes {stable_mosaic.version = 11 : i64} {
  func.func @snn_seq_kernel(%arg0: i32, %arg1: memref<8x8x384xf32, #tpu.memory_space<vmem>>, %arg2: memref<8x128xf32, #tpu.memory_space<vmem>>, %arg3: memref<8x128xf32, #tpu.memory_space<vmem>>, %arg4: memref<8x128xf32, #tpu.memory_space<vmem>>, %arg5: memref<8x16xf32, #tpu.memory_space<vmem>>, %arg6: memref<128x384xbf16, #tpu.memory_space<vmem>>, %arg7: memref<128x128xbf16, #tpu.memory_space<vmem>>, %arg8: memref<128x128xbf16, #tpu.memory_space<vmem>>, %arg9: memref<128x16xbf16, #tpu.memory_space<vmem>>, %arg10: memref<1x16xf32, #tpu.memory_space<vmem>>, %arg11: memref<1x16xf32, #tpu.memory_space<vmem>>, %arg12: memref<8x8x16xf32, #tpu.memory_space<vmem>>, %arg13: memref<8x128xf32, #tpu.memory_space<vmem>>, %arg14: memref<8x128xf32, #tpu.memory_space<vmem>>, %arg15: memref<8x128xf32, #tpu.memory_space<vmem>>, %arg16: memref<8x16xf32, #tpu.memory_space<vmem>>) attributes {dimension_semantics = [#tpu.dimension_semantics<parallel>], iteration_bounds = array<i64: 1>, scalar_prefetch = 0 : i64, scratch_operands = 0 : i64, tpu.core_type = #tpu.core_type<tc>, window_params = [{transform_indices = @transform_0, window_bounds = array<i64: 8, 8, 384>}, {transform_indices = @transform_1, window_bounds = array<i64: 8, 128>}, {transform_indices = @transform_2, window_bounds = array<i64: 8, 128>}, {transform_indices = @transform_3, window_bounds = array<i64: 8, 128>}, {transform_indices = @transform_4, window_bounds = array<i64: 8, 16>}, {pipeline_mode = #tpu.pipeline_mode<synchronous>, transform_indices = @transform_5, window_bounds = array<i64: 128, 384>}, {pipeline_mode = #tpu.pipeline_mode<synchronous>, transform_indices = @transform_6, window_bounds = array<i64: 128, 128>}, {pipeline_mode = #tpu.pipeline_mode<synchronous>, transform_indices = @transform_7, window_bounds = array<i64: 128, 128>}, {pipeline_mode = #tpu.pipeline_mode<synchronous>, transform_indices = @transform_8, window_bounds = array<i64: 128, 16>}, {pipeline_mode = #tpu.pipeline_mode<synchronous>, transform_indices = @transform_9, window_bounds = array<i64: 1, 16>}, {pipeline_mode = #tpu.pipeline_mode<synchronous>, transform_indices = @transform_10, window_bounds = array<i64: 1, 16>}, {transform_indices = @transform_11, window_bounds = array<i64: 8, 8, 16>}, {transform_indices = @transform_12, window_bounds = array<i64: 8, 128>}, {transform_indices = @transform_13, window_bounds = array<i64: 8, 128>}, {transform_indices = @transform_14, window_bounds = array<i64: 8, 128>}, {transform_indices = @transform_15, window_bounds = array<i64: 8, 16>}]} {
    %c0 = arith.constant 0 : index
    %c0_0 = arith.constant 0 : index
    %0 = vector.load %arg6[%c0, %c0_0] : memref<128x384xbf16, #tpu.memory_space<vmem>>, vector<128x384xbf16>
    %c0_1 = arith.constant 0 : index
    %c0_2 = arith.constant 0 : index
    %1 = vector.load %arg7[%c0_1, %c0_2] : memref<128x128xbf16, #tpu.memory_space<vmem>>, vector<128x128xbf16>
    %c0_3 = arith.constant 0 : index
    %c0_4 = arith.constant 0 : index
    %2 = vector.load %arg8[%c0_3, %c0_4] : memref<128x128xbf16, #tpu.memory_space<vmem>>, vector<128x128xbf16>
    %c0_5 = arith.constant 0 : index
    %c0_6 = arith.constant 0 : index
    %3 = vector.load %arg9[%c0_5, %c0_6] : memref<128x16xbf16, #tpu.memory_space<vmem>>, vector<128x16xbf16>
    %c0_7 = arith.constant 0 : index
    %c0_8 = arith.constant 0 : index
    %4 = vector.load %arg10[%c0_7, %c0_8] : memref<1x16xf32, #tpu.memory_space<vmem>>, vector<1x16xf32>
    %5 = vector.shape_cast %4 : vector<1x16xf32> to vector<1x16xf32>
    %6 = vector.broadcast %5 : vector<1x16xf32> to vector<8x16xf32>
    %c0_9 = arith.constant 0 : index
    %c0_10 = arith.constant 0 : index
    %7 = vector.load %arg11[%c0_9, %c0_10] : memref<1x16xf32, #tpu.memory_space<vmem>>, vector<1x16xf32>
    %8 = vector.shape_cast %7 : vector<1x16xf32> to vector<1x16xf32>
    %9 = vector.broadcast %8 : vector<1x16xf32> to vector<8x16xf32>
    %c0_11 = arith.constant 0 : index
    %c0_12 = arith.constant 0 : index
    %10 = vector.load %arg2[%c0_11, %c0_12] : memref<8x128xf32, #tpu.memory_space<vmem>>, vector<8x128xf32>
    %c0_13 = arith.constant 0 : index
    %c0_14 = arith.constant 0 : index
    %11 = vector.load %arg3[%c0_13, %c0_14] : memref<8x128xf32, #tpu.memory_space<vmem>>, vector<8x128xf32>
    %c0_15 = arith.constant 0 : index
    %c0_16 = arith.constant 0 : index
    %12 = vector.load %arg4[%c0_15, %c0_16] : memref<8x128xf32, #tpu.memory_space<vmem>>, vector<8x128xf32>
    %c0_17 = arith.constant 0 : index
    %c0_18 = arith.constant 0 : index
    %13 = vector.load %arg5[%c0_17, %c0_18] : memref<8x16xf32, #tpu.memory_space<vmem>>, vector<8x16xf32>
    %cst = arith.constant 1.000000e+00 : f32
    %c0_i32 = arith.constant 0 : i32
    %14 = arith.index_cast %c0_i32 : i32 to index
    %c0_19 = arith.constant 0 : index
    %c0_20 = arith.constant 0 : index
    %15 = vector.load %arg1[%14, %c0_19, %c0_20] : memref<8x8x384xf32, #tpu.memory_space<vmem>>, vector<1x8x384xf32>
    %16 = vector.shape_cast %15 : vector<1x8x384xf32> to vector<8x384xf32>
    %17 = arith.truncf %11 : vector<8x128xf32> to vector<8x128xbf16>
    %cst_21 = arith.constant dense<0.000000e+00> : vector<8x384xf32>
    %18 = tpu.matmul %17, %0, %cst_21 {dimension_numbers = #tpu.dot_dimension_numbers<[1], [0], [0], [1], [0, 0, 1, 1], [], []>} : vector<8x128xbf16>, vector<128x384xbf16>, vector<8x384xf32> -> vector<8x384xf32>
    %19 = arith.addf %16, %18 : vector<8x384xf32>
    %20 = arith.truncf %10 : vector<8x128xf32> to vector<8x128xbf16>
    %cst_22 = arith.constant dense<0.000000e+00> : vector<8x128xf32>
    %21 = tpu.matmul %20, %1, %cst_22 {dimension_numbers = #tpu.dot_dimension_numbers<[1], [0], [0], [1], [0, 0, 1, 1], [], []>} : vector<8x128xbf16>, vector<128x128xbf16>, vector<8x128xf32> -> vector<8x128xf32>
    %22 = arith.truncf %12 : vector<8x128xf32> to vector<8x128xbf16>
    %cst_23 = arith.constant dense<0.000000e+00> : vector<8x128xf32>
    %23 = tpu.matmul %22, %2, %cst_23 {dimension_numbers = #tpu.dot_dimension_numbers<[1], [0], [0], [1], [0, 0, 1, 1], [], []>} : vector<8x128xbf16>, vector<128x128xbf16>, vector<8x128xf32> -> vector<8x128xf32>
    %24 = vector.extract_strided_slice %19 {offsets = [0, 0], sizes = [8, 128], strides = [1, 1]} : vector<8x384xf32> to vector<8x128xf32>
    %25 = vector.extract_strided_slice %19 {offsets = [0, 128], sizes = [8, 128], strides = [1, 1]} : vector<8x384xf32> to vector<8x128xf32>
    %26 = arith.addf %25, %21 : vector<8x128xf32>
    %cst_24 = arith.constant 0.000000e+00 : f32
    %27 = vector.broadcast %cst_24 : f32 to vector<8x128xf32>
    %28 = arith.subf %27, %26 : vector<8x128xf32>
    %29 = math.exp %28 : vector<8x128xf32>
    %cst_25 = arith.constant 1.000000e+00 : f32
    %30 = vector.broadcast %cst_25 : f32 to vector<8x128xf32>
    %31 = arith.addf %30, %29 : vector<8x128xf32>
    %cst_26 = arith.constant 1.000000e+00 : f32
    %32 = vector.broadcast %cst_26 : f32 to vector<8x128xf32>
    %33 = arith.divf %32, %31 : vector<8x128xf32>
    %34 = vector.extract_strided_slice %19 {offsets = [0, 256], sizes = [8, 128], strides = [1, 1]} : vector<8x384xf32> to vector<8x128xf32>
    %35 = arith.addf %34, %23 : vector<8x128xf32>
    %cst_27 = arith.constant 0.000000e+00 : f32
    %36 = vector.broadcast %cst_27 : f32 to vector<8x128xf32>
    %37 = arith.subf %36, %35 : vector<8x128xf32>
    %38 = math.exp %37 : vector<8x128xf32>
    %cst_28 = arith.constant 1.000000e+00 : f32
    %39 = vector.broadcast %cst_28 : f32 to vector<8x128xf32>
    %40 = arith.addf %39, %38 : vector<8x128xf32>
    %cst_29 = arith.constant 1.000000e+00 : f32
    %41 = vector.broadcast %cst_29 : f32 to vector<8x128xf32>
    %42 = arith.divf %41, %40 : vector<8x128xf32>
    %43 = arith.mulf %42, %12 : vector<8x128xf32>
    %44 = vector.broadcast %cst : f32 to vector<8x128xf32>
    %45 = arith.subf %44, %42 : vector<8x128xf32>
    %46 = arith.mulf %45, %11 : vector<8x128xf32>
    %47 = arith.addf %43, %46 : vector<8x128xf32>
    %cst_30 = arith.constant 1.800000e+00 : f32
    %48 = vector.broadcast %cst_30 : f32 to vector<8x128xf32>
    %49 = arith.mulf %48, %47 : vector<8x128xf32>
    %cst_31 = arith.constant 1.000000e-01 : f32
    %50 = vector.broadcast %cst_31 : f32 to vector<8x128xf32>
    %51 = arith.addf %50, %49 : vector<8x128xf32>
    %52 = arith.subf %24, %10 : vector<8x128xf32>
    %53 = arith.mulf %52, %33 : vector<8x128xf32>
    %54 = arith.addf %10, %53 : vector<8x128xf32>
    %55 = arith.subf %54, %51 : vector<8x128xf32>
    %cst_32 = arith.constant 0.000000e+00 : f32
    %56 = vector.broadcast %cst_32 : f32 to vector<8x128xf32>
    %57 = arith.cmpf ogt, %55, %56 : vector<8x128xf32>
    %58 = arith.extui %57 : vector<8x128xi1> to vector<8x128xi32>
    %59 = arith.sitofp %58 : vector<8x128xi32> to vector<8x128xf32>
    %60 = vector.broadcast %cst : f32 to vector<8x128xf32>
    %61 = arith.subf %60, %59 : vector<8x128xf32>
    %62 = arith.mulf %61, %54 : vector<8x128xf32>
    %63 = arith.truncf %59 : vector<8x128xf32> to vector<8x128xbf16>
    %cst_33 = arith.constant dense<0.000000e+00> : vector<8x16xf32>
    %64 = tpu.matmul %63, %3, %cst_33 {dimension_numbers = #tpu.dot_dimension_numbers<[1], [0], [0], [1], [0, 0, 1, 1], [], []>} : vector<8x128xbf16>, vector<128x16xbf16>, vector<8x16xf32> -> vector<8x16xf32>
    %65 = arith.addf %64, %6 : vector<8x16xf32>
    %66 = arith.subf %65, %13 : vector<8x16xf32>
    %67 = arith.mulf %66, %9 : vector<8x16xf32>
    %68 = arith.addf %13, %67 : vector<8x16xf32>
    %69 = arith.index_cast %c0_i32 : i32 to index
    %c0_34 = arith.constant 0 : index
    %c0_35 = arith.constant 0 : index
    %70 = vector.load %arg12[%69, %c0_34, %c0_35] : memref<8x8x16xf32, #tpu.memory_space<vmem>>, vector<1x8x16xf32>
    %71 = vector.shape_cast %70 : vector<1x8x16xf32> to vector<8x16xf32>
    %72 = vector.shape_cast %68 : vector<8x16xf32> to vector<1x8x16xf32>
    tpu.vector_store %arg12[%69, %c0_34, %c0_35], %72 {strides = array<i32>} : memref<8x8x16xf32, #tpu.memory_space<vmem>>, vector<1x8x16xf32>,
    %c1_i32 = arith.constant 1 : i32
    %73 = arith.index_cast %c1_i32 : i32 to index
    %c0_36 = arith.constant 0 : index
    %c0_37 = arith.constant 0 : index
    %74 = vector.load %arg1[%73, %c0_36, %c0_37] : memref<8x8x384xf32, #tpu.memory_space<vmem>>, vector<1x8x384xf32>
    %75 = vector.shape_cast %74 : vector<1x8x384xf32> to vector<8x384xf32>
    %76 = arith.truncf %59 : vector<8x128xf32> to vector<8x128xbf16>
    %cst_38 = arith.constant dense<0.000000e+00> : vector<8x384xf32>
    %77 = tpu.matmul %76, %0, %cst_38 {dimension_numbers = #tpu.dot_dimension_numbers<[1], [0], [0], [1], [0, 0, 1, 1], [], []>} : vector<8x128xbf16>, vector<128x384xbf16>, vector<8x384xf32> -> vector<8x384xf32>
    %78 = arith.addf %75, %77 : vector<8x384xf32>
    %79 = arith.truncf %62 : vector<8x128xf32> to vector<8x128xbf16>
    %cst_39 = arith.constant dense<0.000000e+00> : vector<8x128xf32>
    %80 = tpu.matmul %79, %1, %cst_39 {dimension_numbers = #tpu.dot_dimension_numbers<[1], [0], [0], [1], [0, 0, 1, 1], [], []>} : vector<8x128xbf16>, vector<128x128xbf16>, vector<8x128xf32> -> vector<8x128xf32>
    %81 = arith.truncf %47 : vector<8x128xf32> to vector<8x128xbf16>
    %cst_40 = arith.constant dense<0.000000e+00> : vector<8x128xf32>
    %82 = tpu.matmul %81, %2, %cst_40 {dimension_numbers = #tpu.dot_dimension_numbers<[1], [0], [0], [1], [0, 0, 1, 1], [], []>} : vector<8x128xbf16>, vector<128x128xbf16>, vector<8x128xf32> -> vector<8x128xf32>
    %83 = vector.extract_strided_slice %78 {offsets = [0, 0], sizes = [8, 128], strides = [1, 1]} : vector<8x384xf32> to vector<8x128xf32>
    %84 = vector.extract_strided_slice %78 {offsets = [0, 128], sizes = [8, 128], strides = [1, 1]} : vector<8x384xf32> to vector<8x128xf32>
    %85 = arith.addf %84, %80 : vector<8x128xf32>
    %cst_41 = arith.constant 0.000000e+00 : f32
    %86 = vector.broadcast %cst_41 : f32 to vector<8x128xf32>
    %87 = arith.subf %86, %85 : vector<8x128xf32>
    %88 = math.exp %87 : vector<8x128xf32>
    %cst_42 = arith.constant 1.000000e+00 : f32
    %89 = vector.broadcast %cst_42 : f32 to vector<8x128xf32>
    %90 = arith.addf %89, %88 : vector<8x128xf32>
    %cst_43 = arith.constant 1.000000e+00 : f32
    %91 = vector.broadcast %cst_43 : f32 to vector<8x128xf32>
    %92 = arith.divf %91, %90 : vector<8x128xf32>
    %93 = vector.extract_strided_slice %78 {offsets = [0, 256], sizes = [8, 128], strides = [1, 1]} : vector<8x384xf32> to vector<8x128xf32>
    %94 = arith.addf %93, %82 : vector<8x128xf32>
    %cst_44 = arith.constant 0.000000e+00 : f32
    %95 = vector.broadcast %cst_44 : f32 to vector<8x128xf32>
    %96 = arith.subf %95, %94 : vector<8x128xf32>
    %97 = math.exp %96 : vector<8x128xf32>
    %cst_45 = arith.constant 1.000000e+00 : f32
    %98 = vector.broadcast %cst_45 : f32 to vector<8x128xf32>
    %99 = arith.addf %98, %97 : vector<8x128xf32>
    %cst_46 = arith.constant 1.000000e+00 : f32
    %100 = vector.broadcast %cst_46 : f32 to vector<8x128xf32>
    %101 = arith.divf %100, %99 : vector<8x128xf32>
    %102 = arith.mulf %101, %47 : vector<8x128xf32>
    %103 = vector.broadcast %cst : f32 to vector<8x128xf32>
    %104 = arith.subf %103, %101 : vector<8x128xf32>
    %105 = arith.mulf %104, %59 : vector<8x128xf32>
    %106 = arith.addf %102, %105 : vector<8x128xf32>
    %cst_47 = arith.constant 1.800000e+00 : f32
    %107 = vector.broadcast %cst_47 : f32 to vector<8x128xf32>
    %108 = arith.mulf %107, %106 : vector<8x128xf32>
    %cst_48 = arith.constant 1.000000e-01 : f32
    %109 = vector.broadcast %cst_48 : f32 to vector<8x128xf32>
    %110 = arith.addf %109, %108 : vector<8x128xf32>
    %111 = arith.subf %83, %62 : vector<8x128xf32>
    %112 = arith.mulf %111, %92 : vector<8x128xf32>
    %113 = arith.addf %62, %112 : vector<8x128xf32>
    %114 = arith.subf %113, %110 : vector<8x128xf32>
    %cst_49 = arith.constant 0.000000e+00 : f32
    %115 = vector.broadcast %cst_49 : f32 to vector<8x128xf32>
    %116 = arith.cmpf ogt, %114, %115 : vector<8x128xf32>
    %117 = arith.extui %116 : vector<8x128xi1> to vector<8x128xi32>
    %118 = arith.sitofp %117 : vector<8x128xi32> to vector<8x128xf32>
    %119 = vector.broadcast %cst : f32 to vector<8x128xf32>
    %120 = arith.subf %119, %118 : vector<8x128xf32>
    %121 = arith.mulf %120, %113 : vector<8x128xf32>
    %122 = arith.truncf %118 : vector<8x128xf32> to vector<8x128xbf16>
    %cst_50 = arith.constant dense<0.000000e+00> : vector<8x16xf32>
    %123 = tpu.matmul %122, %3, %cst_50 {dimension_numbers = #tpu.dot_dimension_numbers<[1], [0], [0], [1], [0, 0, 1, 1], [], []>} : vector<8x128xbf16>, vector<128x16xbf16>, vector<8x16xf32> -> vector<8x16xf32>
    %124 = arith.addf %123, %6 : vector<8x16xf32>
    %125 = arith.subf %124, %68 : vector<8x16xf32>
    %126 = arith.mulf %125, %9 : vector<8x16xf32>
    %127 = arith.addf %68, %126 : vector<8x16xf32>
    %128 = arith.index_cast %c1_i32 : i32 to index
    %c0_51 = arith.constant 0 : index
    %c0_52 = arith.constant 0 : index
    %129 = vector.load %arg12[%128, %c0_51, %c0_52] : memref<8x8x16xf32, #tpu.memory_space<vmem>>, vector<1x8x16xf32>
    %130 = vector.shape_cast %129 : vector<1x8x16xf32> to vector<8x16xf32>
    %131 = vector.shape_cast %127 : vector<8x16xf32> to vector<1x8x16xf32>
    tpu.vector_store %arg12[%128, %c0_51, %c0_52], %131 {strides = array<i32>} : memref<8x8x16xf32, #tpu.memory_space<vmem>>, vector<1x8x16xf32>,
    %c2_i32 = arith.constant 2 : i32
    %132 = arith.index_cast %c2_i32 : i32 to index
    %c0_53 = arith.constant 0 : index
    %c0_54 = arith.constant 0 : index
    %133 = vector.load %arg1[%132, %c0_53, %c0_54] : memref<8x8x384xf32, #tpu.memory_space<vmem>>, vector<1x8x384xf32>
    %134 = vector.shape_cast %133 : vector<1x8x384xf32> to vector<8x384xf32>
    %135 = arith.truncf %118 : vector<8x128xf32> to vector<8x128xbf16>
    %cst_55 = arith.constant dense<0.000000e+00> : vector<8x384xf32>
    %136 = tpu.matmul %135, %0, %cst_55 {dimension_numbers = #tpu.dot_dimension_numbers<[1], [0], [0], [1], [0, 0, 1, 1], [], []>} : vector<8x128xbf16>, vector<128x384xbf16>, vector<8x384xf32> -> vector<8x384xf32>
    %137 = arith.addf %134, %136 : vector<8x384xf32>
    %138 = arith.truncf %121 : vector<8x128xf32> to vector<8x128xbf16>
    %cst_56 = arith.constant dense<0.000000e+00> : vector<8x128xf32>
    %139 = tpu.matmul %138, %1, %cst_56 {dimension_numbers = #tpu.dot_dimension_numbers<[1], [0], [0], [1], [0, 0, 1, 1], [], []>} : vector<8x128xbf16>, vector<128x128xbf16>, vector<8x128xf32> -> vector<8x128xf32>
    %140 = arith.truncf %106 : vector<8x128xf32> to vector<8x128xbf16>
    %cst_57 = arith.constant dense<0.000000e+00> : vector<8x128xf32>
    %141 = tpu.matmul %140, %2, %cst_57 {dimension_numbers = #tpu.dot_dimension_numbers<[1], [0], [0], [1], [0, 0, 1, 1], [], []>} : vector<8x128xbf16>, vector<128x128xbf16>, vector<8x128xf32> -> vector<8x128xf32>
    %142 = vector.extract_strided_slice %137 {offsets = [0, 0], sizes = [8, 128], strides = [1, 1]} : vector<8x384xf32> to vector<8x128xf32>
    %143 = vector.extract_strided_slice %137 {offsets = [0, 128], sizes = [8, 128], strides = [1, 1]} : vector<8x384xf32> to vector<8x128xf32>
    %144 = arith.addf %143, %139 : vector<8x128xf32>
    %cst_58 = arith.constant 0.000000e+00 : f32
    %145 = vector.broadcast %cst_58 : f32 to vector<8x128xf32>
    %146 = arith.subf %145, %144 : vector<8x128xf32>
    %147 = math.exp %146 : vector<8x128xf32>
    %cst_59 = arith.constant 1.000000e+00 : f32
    %148 = vector.broadcast %cst_59 : f32 to vector<8x128xf32>
    %149 = arith.addf %148, %147 : vector<8x128xf32>
    %cst_60 = arith.constant 1.000000e+00 : f32
    %150 = vector.broadcast %cst_60 : f32 to vector<8x128xf32>
    %151 = arith.divf %150, %149 : vector<8x128xf32>
    %152 = vector.extract_strided_slice %137 {offsets = [0, 256], sizes = [8, 128], strides = [1, 1]} : vector<8x384xf32> to vector<8x128xf32>
    %153 = arith.addf %152, %141 : vector<8x128xf32>
    %cst_61 = arith.constant 0.000000e+00 : f32
    %154 = vector.broadcast %cst_61 : f32 to vector<8x128xf32>
    %155 = arith.subf %154, %153 : vector<8x128xf32>
    %156 = math.exp %155 : vector<8x128xf32>
    %cst_62 = arith.constant 1.000000e+00 : f32
    %157 = vector.broadcast %cst_62 : f32 to vector<8x128xf32>
    %158 = arith.addf %157, %156 : vector<8x128xf32>
    %cst_63 = arith.constant 1.000000e+00 : f32
    %159 = vector.broadcast %cst_63 : f32 to vector<8x128xf32>
    %160 = arith.divf %159, %158 : vector<8x128xf32>
    %161 = arith.mulf %160, %106 : vector<8x128xf32>
    %162 = vector.broadcast %cst : f32 to vector<8x128xf32>
    %163 = arith.subf %162, %160 : vector<8x128xf32>
    %164 = arith.mulf %163, %118 : vector<8x128xf32>
    %165 = arith.addf %161, %164 : vector<8x128xf32>
    %cst_64 = arith.constant 1.800000e+00 : f32
    %166 = vector.broadcast %cst_64 : f32 to vector<8x128xf32>
    %167 = arith.mulf %166, %165 : vector<8x128xf32>
    %cst_65 = arith.constant 1.000000e-01 : f32
    %168 = vector.broadcast %cst_65 : f32 to vector<8x128xf32>
    %169 = arith.addf %168, %167 : vector<8x128xf32>
    %170 = arith.subf %142, %121 : vector<8x128xf32>
    %171 = arith.mulf %170, %151 : vector<8x128xf32>
    %172 = arith.addf %121, %171 : vector<8x128xf32>
    %173 = arith.subf %172, %169 : vector<8x128xf32>
    %cst_66 = arith.constant 0.000000e+00 : f32
    %174 = vector.broadcast %cst_66 : f32 to vector<8x128xf32>
    %175 = arith.cmpf ogt, %173, %174 : vector<8x128xf32>
    %176 = arith.extui %175 : vector<8x128xi1> to vector<8x128xi32>
    %177 = arith.sitofp %176 : vector<8x128xi32> to vector<8x128xf32>
    %178 = vector.broadcast %cst : f32 to vector<8x128xf32>
    %179 = arith.subf %178, %177 : vector<8x128xf32>
    %180 = arith.mulf %179, %172 : vector<8x128xf32>
    %181 = arith.truncf %177 : vector<8x128xf32> to vector<8x128xbf16>
    %cst_67 = arith.constant dense<0.000000e+00> : vector<8x16xf32>
    %182 = tpu.matmul %181, %3, %cst_67 {dimension_numbers = #tpu.dot_dimension_numbers<[1], [0], [0], [1], [0, 0, 1, 1], [], []>} : vector<8x128xbf16>, vector<128x16xbf16>, vector<8x16xf32> -> vector<8x16xf32>
    %183 = arith.addf %182, %6 : vector<8x16xf32>
    %184 = arith.subf %183, %127 : vector<8x16xf32>
    %185 = arith.mulf %184, %9 : vector<8x16xf32>
    %186 = arith.addf %127, %185 : vector<8x16xf32>
    %187 = arith.index_cast %c2_i32 : i32 to index
    %c0_68 = arith.constant 0 : index
    %c0_69 = arith.constant 0 : index
    %188 = vector.load %arg12[%187, %c0_68, %c0_69] : memref<8x8x16xf32, #tpu.memory_space<vmem>>, vector<1x8x16xf32>
    %189 = vector.shape_cast %188 : vector<1x8x16xf32> to vector<8x16xf32>
    %190 = vector.shape_cast %186 : vector<8x16xf32> to vector<1x8x16xf32>
    tpu.vector_store %arg12[%187, %c0_68, %c0_69], %190 {strides = array<i32>} : memref<8x8x16xf32, #tpu.memory_space<vmem>>, vector<1x8x16xf32>,
    %c3_i32 = arith.constant 3 : i32
    %191 = arith.index_cast %c3_i32 : i32 to index
    %c0_70 = arith.constant 0 : index
    %c0_71 = arith.constant 0 : index
    %192 = vector.load %arg1[%191, %c0_70, %c0_71] : memref<8x8x384xf32, #tpu.memory_space<vmem>>, vector<1x8x384xf32>
    %193 = vector.shape_cast %192 : vector<1x8x384xf32> to vector<8x384xf32>
    %194 = arith.truncf %177 : vector<8x128xf32> to vector<8x128xbf16>
    %cst_72 = arith.constant dense<0.000000e+00> : vector<8x384xf32>
    %195 = tpu.matmul %194, %0, %cst_72 {dimension_numbers = #tpu.dot_dimension_numbers<[1], [0], [0], [1], [0, 0, 1, 1], [], []>} : vector<8x128xbf16>, vector<128x384xbf16>, vector<8x384xf32> -> vector<8x384xf32>
    %196 = arith.addf %193, %195 : vector<8x384xf32>
    %197 = arith.truncf %180 : vector<8x128xf32> to vector<8x128xbf16>
    %cst_73 = arith.constant dense<0.000000e+00> : vector<8x128xf32>
    %198 = tpu.matmul %197, %1, %cst_73 {dimension_numbers = #tpu.dot_dimension_numbers<[1], [0], [0], [1], [0, 0, 1, 1], [], []>} : vector<8x128xbf16>, vector<128x128xbf16>, vector<8x128xf32> -> vector<8x128xf32>
    %199 = arith.truncf %165 : vector<8x128xf32> to vector<8x128xbf16>
    %cst_74 = arith.constant dense<0.000000e+00> : vector<8x128xf32>
    %200 = tpu.matmul %199, %2, %cst_74 {dimension_numbers = #tpu.dot_dimension_numbers<[1], [0], [0], [1], [0, 0, 1, 1], [], []>} : vector<8x128xbf16>, vector<128x128xbf16>, vector<8x128xf32> -> vector<8x128xf32>
    %201 = vector.extract_strided_slice %196 {offsets = [0, 0], sizes = [8, 128], strides = [1, 1]} : vector<8x384xf32> to vector<8x128xf32>
    %202 = vector.extract_strided_slice %196 {offsets = [0, 128], sizes = [8, 128], strides = [1, 1]} : vector<8x384xf32> to vector<8x128xf32>
    %203 = arith.addf %202, %198 : vector<8x128xf32>
    %cst_75 = arith.constant 0.000000e+00 : f32
    %204 = vector.broadcast %cst_75 : f32 to vector<8x128xf32>
    %205 = arith.subf %204, %203 : vector<8x128xf32>
    %206 = math.exp %205 : vector<8x128xf32>
    %cst_76 = arith.constant 1.000000e+00 : f32
    %207 = vector.broadcast %cst_76 : f32 to vector<8x128xf32>
    %208 = arith.addf %207, %206 : vector<8x128xf32>
    %cst_77 = arith.constant 1.000000e+00 : f32
    %209 = vector.broadcast %cst_77 : f32 to vector<8x128xf32>
    %210 = arith.divf %209, %208 : vector<8x128xf32>
    %211 = vector.extract_strided_slice %196 {offsets = [0, 256], sizes = [8, 128], strides = [1, 1]} : vector<8x384xf32> to vector<8x128xf32>
    %212 = arith.addf %211, %200 : vector<8x128xf32>
    %cst_78 = arith.constant 0.000000e+00 : f32
    %213 = vector.broadcast %cst_78 : f32 to vector<8x128xf32>
    %214 = arith.subf %213, %212 : vector<8x128xf32>
    %215 = math.exp %214 : vector<8x128xf32>
    %cst_79 = arith.constant 1.000000e+00 : f32
    %216 = vector.broadcast %cst_79 : f32 to vector<8x128xf32>
    %217 = arith.addf %216, %215 : vector<8x128xf32>
    %cst_80 = arith.constant 1.000000e+00 : f32
    %218 = vector.broadcast %cst_80 : f32 to vector<8x128xf32>
    %219 = arith.divf %218, %217 : vector<8x128xf32>
    %220 = arith.mulf %219, %165 : vector<8x128xf32>
    %221 = vector.broadcast %cst : f32 to vector<8x128xf32>
    %222 = arith.subf %221, %219 : vector<8x128xf32>
    %223 = arith.mulf %222, %177 : vector<8x128xf32>
    %224 = arith.addf %220, %223 : vector<8x128xf32>
    %cst_81 = arith.constant 1.800000e+00 : f32
    %225 = vector.broadcast %cst_81 : f32 to vector<8x128xf32>
    %226 = arith.mulf %225, %224 : vector<8x128xf32>
    %cst_82 = arith.constant 1.000000e-01 : f32
    %227 = vector.broadcast %cst_82 : f32 to vector<8x128xf32>
    %228 = arith.addf %227, %226 : vector<8x128xf32>
    %229 = arith.subf %201, %180 : vector<8x128xf32>
    %230 = arith.mulf %229, %210 : vector<8x128xf32>
    %231 = arith.addf %180, %230 : vector<8x128xf32>
    %232 = arith.subf %231, %228 : vector<8x128xf32>
    %cst_83 = arith.constant 0.000000e+00 : f32
    %233 = vector.broadcast %cst_83 : f32 to vector<8x128xf32>
    %234 = arith.cmpf ogt, %232, %233 : vector<8x128xf32>
    %235 = arith.extui %234 : vector<8x128xi1> to vector<8x128xi32>
    %236 = arith.sitofp %235 : vector<8x128xi32> to vector<8x128xf32>
    %237 = vector.broadcast %cst : f32 to vector<8x128xf32>
    %238 = arith.subf %237, %236 : vector<8x128xf32>
    %239 = arith.mulf %238, %231 : vector<8x128xf32>
    %240 = arith.truncf %236 : vector<8x128xf32> to vector<8x128xbf16>
    %cst_84 = arith.constant dense<0.000000e+00> : vector<8x16xf32>
    %241 = tpu.matmul %240, %3, %cst_84 {dimension_numbers = #tpu.dot_dimension_numbers<[1], [0], [0], [1], [0, 0, 1, 1], [], []>} : vector<8x128xbf16>, vector<128x16xbf16>, vector<8x16xf32> -> vector<8x16xf32>
    %242 = arith.addf %241, %6 : vector<8x16xf32>
    %243 = arith.subf %242, %186 : vector<8x16xf32>
    %244 = arith.mulf %243, %9 : vector<8x16xf32>
    %245 = arith.addf %186, %244 : vector<8x16xf32>
    %246 = arith.index_cast %c3_i32 : i32 to index
    %c0_85 = arith.constant 0 : index
    %c0_86 = arith.constant 0 : index
    %247 = vector.load %arg12[%246, %c0_85, %c0_86] : memref<8x8x16xf32, #tpu.memory_space<vmem>>, vector<1x8x16xf32>
    %248 = vector.shape_cast %247 : vector<1x8x16xf32> to vector<8x16xf32>
    %249 = vector.shape_cast %245 : vector<8x16xf32> to vector<1x8x16xf32>
    tpu.vector_store %arg12[%246, %c0_85, %c0_86], %249 {strides = array<i32>} : memref<8x8x16xf32, #tpu.memory_space<vmem>>, vector<1x8x16xf32>,
    %c4_i32 = arith.constant 4 : i32
    %250 = arith.index_cast %c4_i32 : i32 to index
    %c0_87 = arith.constant 0 : index
    %c0_88 = arith.constant 0 : index
    %251 = vector.load %arg1[%250, %c0_87, %c0_88] : memref<8x8x384xf32, #tpu.memory_space<vmem>>, vector<1x8x384xf32>
    %252 = vector.shape_cast %251 : vector<1x8x384xf32> to vector<8x384xf32>
    %253 = arith.truncf %236 : vector<8x128xf32> to vector<8x128xbf16>
    %cst_89 = arith.constant dense<0.000000e+00> : vector<8x384xf32>
    %254 = tpu.matmul %253, %0, %cst_89 {dimension_numbers = #tpu.dot_dimension_numbers<[1], [0], [0], [1], [0, 0, 1, 1], [], []>} : vector<8x128xbf16>, vector<128x384xbf16>, vector<8x384xf32> -> vector<8x384xf32>
    %255 = arith.addf %252, %254 : vector<8x384xf32>
    %256 = arith.truncf %239 : vector<8x128xf32> to vector<8x128xbf16>
    %cst_90 = arith.constant dense<0.000000e+00> : vector<8x128xf32>
    %257 = tpu.matmul %256, %1, %cst_90 {dimension_numbers = #tpu.dot_dimension_numbers<[1], [0], [0], [1], [0, 0, 1, 1], [], []>} : vector<8x128xbf16>, vector<128x128xbf16>, vector<8x128xf32> -> vector<8x128xf32>
    %258 = arith.truncf %224 : vector<8x128xf32> to vector<8x128xbf16>
    %cst_91 = arith.constant dense<0.000000e+00> : vector<8x128xf32>
    %259 = tpu.matmul %258, %2, %cst_91 {dimension_numbers = #tpu.dot_dimension_numbers<[1], [0], [0], [1], [0, 0, 1, 1], [], []>} : vector<8x128xbf16>, vector<128x128xbf16>, vector<8x128xf32> -> vector<8x128xf32>
    %260 = vector.extract_strided_slice %255 {offsets = [0, 0], sizes = [8, 128], strides = [1, 1]} : vector<8x384xf32> to vector<8x128xf32>
    %261 = vector.extract_strided_slice %255 {offsets = [0, 128], sizes = [8, 128], strides = [1, 1]} : vector<8x384xf32> to vector<8x128xf32>
    %262 = arith.addf %261, %257 : vector<8x128xf32>
    %cst_92 = arith.constant 0.000000e+00 : f32
    %263 = vector.broadcast %cst_92 : f32 to vector<8x128xf32>
    %264 = arith.subf %263, %262 : vector<8x128xf32>
    %265 = math.exp %264 : vector<8x128xf32>
    %cst_93 = arith.constant 1.000000e+00 : f32
    %266 = vector.broadcast %cst_93 : f32 to vector<8x128xf32>
    %267 = arith.addf %266, %265 : vector<8x128xf32>
    %cst_94 = arith.constant 1.000000e+00 : f32
    %268 = vector.broadcast %cst_94 : f32 to vector<8x128xf32>
    %269 = arith.divf %268, %267 : vector<8x128xf32>
    %270 = vector.extract_strided_slice %255 {offsets = [0, 256], sizes = [8, 128], strides = [1, 1]} : vector<8x384xf32> to vector<8x128xf32>
    %271 = arith.addf %270, %259 : vector<8x128xf32>
    %cst_95 = arith.constant 0.000000e+00 : f32
    %272 = vector.broadcast %cst_95 : f32 to vector<8x128xf32>
    %273 = arith.subf %272, %271 : vector<8x128xf32>
    %274 = math.exp %273 : vector<8x128xf32>
    %cst_96 = arith.constant 1.000000e+00 : f32
    %275 = vector.broadcast %cst_96 : f32 to vector<8x128xf32>
    %276 = arith.addf %275, %274 : vector<8x128xf32>
    %cst_97 = arith.constant 1.000000e+00 : f32
    %277 = vector.broadcast %cst_97 : f32 to vector<8x128xf32>
    %278 = arith.divf %277, %276 : vector<8x128xf32>
    %279 = arith.mulf %278, %224 : vector<8x128xf32>
    %280 = vector.broadcast %cst : f32 to vector<8x128xf32>
    %281 = arith.subf %280, %278 : vector<8x128xf32>
    %282 = arith.mulf %281, %236 : vector<8x128xf32>
    %283 = arith.addf %279, %282 : vector<8x128xf32>
    %cst_98 = arith.constant 1.800000e+00 : f32
    %284 = vector.broadcast %cst_98 : f32 to vector<8x128xf32>
    %285 = arith.mulf %284, %283 : vector<8x128xf32>
    %cst_99 = arith.constant 1.000000e-01 : f32
    %286 = vector.broadcast %cst_99 : f32 to vector<8x128xf32>
    %287 = arith.addf %286, %285 : vector<8x128xf32>
    %288 = arith.subf %260, %239 : vector<8x128xf32>
    %289 = arith.mulf %288, %269 : vector<8x128xf32>
    %290 = arith.addf %239, %289 : vector<8x128xf32>
    %291 = arith.subf %290, %287 : vector<8x128xf32>
    %cst_100 = arith.constant 0.000000e+00 : f32
    %292 = vector.broadcast %cst_100 : f32 to vector<8x128xf32>
    %293 = arith.cmpf ogt, %291, %292 : vector<8x128xf32>
    %294 = arith.extui %293 : vector<8x128xi1> to vector<8x128xi32>
    %295 = arith.sitofp %294 : vector<8x128xi32> to vector<8x128xf32>
    %296 = vector.broadcast %cst : f32 to vector<8x128xf32>
    %297 = arith.subf %296, %295 : vector<8x128xf32>
    %298 = arith.mulf %297, %290 : vector<8x128xf32>
    %299 = arith.truncf %295 : vector<8x128xf32> to vector<8x128xbf16>
    %cst_101 = arith.constant dense<0.000000e+00> : vector<8x16xf32>
    %300 = tpu.matmul %299, %3, %cst_101 {dimension_numbers = #tpu.dot_dimension_numbers<[1], [0], [0], [1], [0, 0, 1, 1], [], []>} : vector<8x128xbf16>, vector<128x16xbf16>, vector<8x16xf32> -> vector<8x16xf32>
    %301 = arith.addf %300, %6 : vector<8x16xf32>
    %302 = arith.subf %301, %245 : vector<8x16xf32>
    %303 = arith.mulf %302, %9 : vector<8x16xf32>
    %304 = arith.addf %245, %303 : vector<8x16xf32>
    %305 = arith.index_cast %c4_i32 : i32 to index
    %c0_102 = arith.constant 0 : index
    %c0_103 = arith.constant 0 : index
    %306 = vector.load %arg12[%305, %c0_102, %c0_103] : memref<8x8x16xf32, #tpu.memory_space<vmem>>, vector<1x8x16xf32>
    %307 = vector.shape_cast %306 : vector<1x8x16xf32> to vector<8x16xf32>
    %308 = vector.shape_cast %304 : vector<8x16xf32> to vector<1x8x16xf32>
    tpu.vector_store %arg12[%305, %c0_102, %c0_103], %308 {strides = array<i32>} : memref<8x8x16xf32, #tpu.memory_space<vmem>>, vector<1x8x16xf32>,
    %c5_i32 = arith.constant 5 : i32
    %309 = arith.index_cast %c5_i32 : i32 to index
    %c0_104 = arith.constant 0 : index
    %c0_105 = arith.constant 0 : index
    %310 = vector.load %arg1[%309, %c0_104, %c0_105] : memref<8x8x384xf32, #tpu.memory_space<vmem>>, vector<1x8x384xf32>
    %311 = vector.shape_cast %310 : vector<1x8x384xf32> to vector<8x384xf32>
    %312 = arith.truncf %295 : vector<8x128xf32> to vector<8x128xbf16>
    %cst_106 = arith.constant dense<0.000000e+00> : vector<8x384xf32>
    %313 = tpu.matmul %312, %0, %cst_106 {dimension_numbers = #tpu.dot_dimension_numbers<[1], [0], [0], [1], [0, 0, 1, 1], [], []>} : vector<8x128xbf16>, vector<128x384xbf16>, vector<8x384xf32> -> vector<8x384xf32>
    %314 = arith.addf %311, %313 : vector<8x384xf32>
    %315 = arith.truncf %298 : vector<8x128xf32> to vector<8x128xbf16>
    %cst_107 = arith.constant dense<0.000000e+00> : vector<8x128xf32>
    %316 = tpu.matmul %315, %1, %cst_107 {dimension_numbers = #tpu.dot_dimension_numbers<[1], [0], [0], [1], [0, 0, 1, 1], [], []>} : vector<8x128xbf16>, vector<128x128xbf16>, vector<8x128xf32> -> vector<8x128xf32>
    %317 = arith.truncf %283 : vector<8x128xf32> to vector<8x128xbf16>
    %cst_108 = arith.constant dense<0.000000e+00> : vector<8x128xf32>
    %318 = tpu.matmul %317, %2, %cst_108 {dimension_numbers = #tpu.dot_dimension_numbers<[1], [0], [0], [1], [0, 0, 1, 1], [], []>} : vector<8x128xbf16>, vector<128x128xbf16>, vector<8x128xf32> -> vector<8x128xf32>
    %319 = vector.extract_strided_slice %314 {offsets = [0, 0], sizes = [8, 128], strides = [1, 1]} : vector<8x384xf32> to vector<8x128xf32>
    %320 = vector.extract_strided_slice %314 {offsets = [0, 128], sizes = [8, 128], strides = [1, 1]} : vector<8x384xf32> to vector<8x128xf32>
    %321 = arith.addf %320, %316 : vector<8x128xf32>
    %cst_109 = arith.constant 0.000000e+00 : f32
    %322 = vector.broadcast %cst_109 : f32 to vector<8x128xf32>
    %323 = arith.subf %322, %321 : vector<8x128xf32>
    %324 = math.exp %323 : vector<8x128xf32>
    %cst_110 = arith.constant 1.000000e+00 : f32
    %325 = vector.broadcast %cst_110 : f32 to vector<8x128xf32>
    %326 = arith.addf %325, %324 : vector<8x128xf32>
    %cst_111 = arith.constant 1.000000e+00 : f32
    %327 = vector.broadcast %cst_111 : f32 to vector<8x128xf32>
    %328 = arith.divf %327, %326 : vector<8x128xf32>
    %329 = vector.extract_strided_slice %314 {offsets = [0, 256], sizes = [8, 128], strides = [1, 1]} : vector<8x384xf32> to vector<8x128xf32>
    %330 = arith.addf %329, %318 : vector<8x128xf32>
    %cst_112 = arith.constant 0.000000e+00 : f32
    %331 = vector.broadcast %cst_112 : f32 to vector<8x128xf32>
    %332 = arith.subf %331, %330 : vector<8x128xf32>
    %333 = math.exp %332 : vector<8x128xf32>
    %cst_113 = arith.constant 1.000000e+00 : f32
    %334 = vector.broadcast %cst_113 : f32 to vector<8x128xf32>
    %335 = arith.addf %334, %333 : vector<8x128xf32>
    %cst_114 = arith.constant 1.000000e+00 : f32
    %336 = vector.broadcast %cst_114 : f32 to vector<8x128xf32>
    %337 = arith.divf %336, %335 : vector<8x128xf32>
    %338 = arith.mulf %337, %283 : vector<8x128xf32>
    %339 = vector.broadcast %cst : f32 to vector<8x128xf32>
    %340 = arith.subf %339, %337 : vector<8x128xf32>
    %341 = arith.mulf %340, %295 : vector<8x128xf32>
    %342 = arith.addf %338, %341 : vector<8x128xf32>
    %cst_115 = arith.constant 1.800000e+00 : f32
    %343 = vector.broadcast %cst_115 : f32 to vector<8x128xf32>
    %344 = arith.mulf %343, %342 : vector<8x128xf32>
    %cst_116 = arith.constant 1.000000e-01 : f32
    %345 = vector.broadcast %cst_116 : f32 to vector<8x128xf32>
    %346 = arith.addf %345, %344 : vector<8x128xf32>
    %347 = arith.subf %319, %298 : vector<8x128xf32>
    %348 = arith.mulf %347, %328 : vector<8x128xf32>
    %349 = arith.addf %298, %348 : vector<8x128xf32>
    %350 = arith.subf %349, %346 : vector<8x128xf32>
    %cst_117 = arith.constant 0.000000e+00 : f32
    %351 = vector.broadcast %cst_117 : f32 to vector<8x128xf32>
    %352 = arith.cmpf ogt, %350, %351 : vector<8x128xf32>
    %353 = arith.extui %352 : vector<8x128xi1> to vector<8x128xi32>
    %354 = arith.sitofp %353 : vector<8x128xi32> to vector<8x128xf32>
    %355 = vector.broadcast %cst : f32 to vector<8x128xf32>
    %356 = arith.subf %355, %354 : vector<8x128xf32>
    %357 = arith.mulf %356, %349 : vector<8x128xf32>
    %358 = arith.truncf %354 : vector<8x128xf32> to vector<8x128xbf16>
    %cst_118 = arith.constant dense<0.000000e+00> : vector<8x16xf32>
    %359 = tpu.matmul %358, %3, %cst_118 {dimension_numbers = #tpu.dot_dimension_numbers<[1], [0], [0], [1], [0, 0, 1, 1], [], []>} : vector<8x128xbf16>, vector<128x16xbf16>, vector<8x16xf32> -> vector<8x16xf32>
    %360 = arith.addf %359, %6 : vector<8x16xf32>
    %361 = arith.subf %360, %304 : vector<8x16xf32>
    %362 = arith.mulf %361, %9 : vector<8x16xf32>
    %363 = arith.addf %304, %362 : vector<8x16xf32>
    %364 = arith.index_cast %c5_i32 : i32 to index
    %c0_119 = arith.constant 0 : index
    %c0_120 = arith.constant 0 : index
    %365 = vector.load %arg12[%364, %c0_119, %c0_120] : memref<8x8x16xf32, #tpu.memory_space<vmem>>, vector<1x8x16xf32>
    %366 = vector.shape_cast %365 : vector<1x8x16xf32> to vector<8x16xf32>
    %367 = vector.shape_cast %363 : vector<8x16xf32> to vector<1x8x16xf32>
    tpu.vector_store %arg12[%364, %c0_119, %c0_120], %367 {strides = array<i32>} : memref<8x8x16xf32, #tpu.memory_space<vmem>>, vector<1x8x16xf32>,
    %c6_i32 = arith.constant 6 : i32
    %368 = arith.index_cast %c6_i32 : i32 to index
    %c0_121 = arith.constant 0 : index
    %c0_122 = arith.constant 0 : index
    %369 = vector.load %arg1[%368, %c0_121, %c0_122] : memref<8x8x384xf32, #tpu.memory_space<vmem>>, vector<1x8x384xf32>
    %370 = vector.shape_cast %369 : vector<1x8x384xf32> to vector<8x384xf32>
    %371 = arith.truncf %354 : vector<8x128xf32> to vector<8x128xbf16>
    %cst_123 = arith.constant dense<0.000000e+00> : vector<8x384xf32>
    %372 = tpu.matmul %371, %0, %cst_123 {dimension_numbers = #tpu.dot_dimension_numbers<[1], [0], [0], [1], [0, 0, 1, 1], [], []>} : vector<8x128xbf16>, vector<128x384xbf16>, vector<8x384xf32> -> vector<8x384xf32>
    %373 = arith.addf %370, %372 : vector<8x384xf32>
    %374 = arith.truncf %357 : vector<8x128xf32> to vector<8x128xbf16>
    %cst_124 = arith.constant dense<0.000000e+00> : vector<8x128xf32>
    %375 = tpu.matmul %374, %1, %cst_124 {dimension_numbers = #tpu.dot_dimension_numbers<[1], [0], [0], [1], [0, 0, 1, 1], [], []>} : vector<8x128xbf16>, vector<128x128xbf16>, vector<8x128xf32> -> vector<8x128xf32>
    %376 = arith.truncf %342 : vector<8x128xf32> to vector<8x128xbf16>
    %cst_125 = arith.constant dense<0.000000e+00> : vector<8x128xf32>
    %377 = tpu.matmul %376, %2, %cst_125 {dimension_numbers = #tpu.dot_dimension_numbers<[1], [0], [0], [1], [0, 0, 1, 1], [], []>} : vector<8x128xbf16>, vector<128x128xbf16>, vector<8x128xf32> -> vector<8x128xf32>
    %378 = vector.extract_strided_slice %373 {offsets = [0, 0], sizes = [8, 128], strides = [1, 1]} : vector<8x384xf32> to vector<8x128xf32>
    %379 = vector.extract_strided_slice %373 {offsets = [0, 128], sizes = [8, 128], strides = [1, 1]} : vector<8x384xf32> to vector<8x128xf32>
    %380 = arith.addf %379, %375 : vector<8x128xf32>
    %cst_126 = arith.constant 0.000000e+00 : f32
    %381 = vector.broadcast %cst_126 : f32 to vector<8x128xf32>
    %382 = arith.subf %381, %380 : vector<8x128xf32>
    %383 = math.exp %382 : vector<8x128xf32>
    %cst_127 = arith.constant 1.000000e+00 : f32
    %384 = vector.broadcast %cst_127 : f32 to vector<8x128xf32>
    %385 = arith.addf %384, %383 : vector<8x128xf32>
    %cst_128 = arith.constant 1.000000e+00 : f32
    %386 = vector.broadcast %cst_128 : f32 to vector<8x128xf32>
    %387 = arith.divf %386, %385 : vector<8x128xf32>
    %388 = vector.extract_strided_slice %373 {offsets = [0, 256], sizes = [8, 128], strides = [1, 1]} : vector<8x384xf32> to vector<8x128xf32>
    %389 = arith.addf %388, %377 : vector<8x128xf32>
    %cst_129 = arith.constant 0.000000e+00 : f32
    %390 = vector.broadcast %cst_129 : f32 to vector<8x128xf32>
    %391 = arith.subf %390, %389 : vector<8x128xf32>
    %392 = math.exp %391 : vector<8x128xf32>
    %cst_130 = arith.constant 1.000000e+00 : f32
    %393 = vector.broadcast %cst_130 : f32 to vector<8x128xf32>
    %394 = arith.addf %393, %392 : vector<8x128xf32>
    %cst_131 = arith.constant 1.000000e+00 : f32
    %395 = vector.broadcast %cst_131 : f32 to vector<8x128xf32>
    %396 = arith.divf %395, %394 : vector<8x128xf32>
    %397 = arith.mulf %396, %342 : vector<8x128xf32>
    %398 = vector.broadcast %cst : f32 to vector<8x128xf32>
    %399 = arith.subf %398, %396 : vector<8x128xf32>
    %400 = arith.mulf %399, %354 : vector<8x128xf32>
    %401 = arith.addf %397, %400 : vector<8x128xf32>
    %cst_132 = arith.constant 1.800000e+00 : f32
    %402 = vector.broadcast %cst_132 : f32 to vector<8x128xf32>
    %403 = arith.mulf %402, %401 : vector<8x128xf32>
    %cst_133 = arith.constant 1.000000e-01 : f32
    %404 = vector.broadcast %cst_133 : f32 to vector<8x128xf32>
    %405 = arith.addf %404, %403 : vector<8x128xf32>
    %406 = arith.subf %378, %357 : vector<8x128xf32>
    %407 = arith.mulf %406, %387 : vector<8x128xf32>
    %408 = arith.addf %357, %407 : vector<8x128xf32>
    %409 = arith.subf %408, %405 : vector<8x128xf32>
    %cst_134 = arith.constant 0.000000e+00 : f32
    %410 = vector.broadcast %cst_134 : f32 to vector<8x128xf32>
    %411 = arith.cmpf ogt, %409, %410 : vector<8x128xf32>
    %412 = arith.extui %411 : vector<8x128xi1> to vector<8x128xi32>
    %413 = arith.sitofp %412 : vector<8x128xi32> to vector<8x128xf32>
    %414 = vector.broadcast %cst : f32 to vector<8x128xf32>
    %415 = arith.subf %414, %413 : vector<8x128xf32>
    %416 = arith.mulf %415, %408 : vector<8x128xf32>
    %417 = arith.truncf %413 : vector<8x128xf32> to vector<8x128xbf16>
    %cst_135 = arith.constant dense<0.000000e+00> : vector<8x16xf32>
    %418 = tpu.matmul %417, %3, %cst_135 {dimension_numbers = #tpu.dot_dimension_numbers<[1], [0], [0], [1], [0, 0, 1, 1], [], []>} : vector<8x128xbf16>, vector<128x16xbf16>, vector<8x16xf32> -> vector<8x16xf32>
    %419 = arith.addf %418, %6 : vector<8x16xf32>
    %420 = arith.subf %419, %363 : vector<8x16xf32>
    %421 = arith.mulf %420, %9 : vector<8x16xf32>
    %422 = arith.addf %363, %421 : vector<8x16xf32>
    %423 = arith.index_cast %c6_i32 : i32 to index
    %c0_136 = arith.constant 0 : index
    %c0_137 = arith.constant 0 : index
    %424 = vector.load %arg12[%423, %c0_136, %c0_137] : memref<8x8x16xf32, #tpu.memory_space<vmem>>, vector<1x8x16xf32>
    %425 = vector.shape_cast %424 : vector<1x8x16xf32> to vector<8x16xf32>
    %426 = vector.shape_cast %422 : vector<8x16xf32> to vector<1x8x16xf32>
    tpu.vector_store %arg12[%423, %c0_136, %c0_137], %426 {strides = array<i32>} : memref<8x8x16xf32, #tpu.memory_space<vmem>>, vector<1x8x16xf32>,
    %c7_i32 = arith.constant 7 : i32
    %427 = arith.index_cast %c7_i32 : i32 to index
    %c0_138 = arith.constant 0 : index
    %c0_139 = arith.constant 0 : index
    %428 = vector.load %arg1[%427, %c0_138, %c0_139] : memref<8x8x384xf32, #tpu.memory_space<vmem>>, vector<1x8x384xf32>
    %429 = vector.shape_cast %428 : vector<1x8x384xf32> to vector<8x384xf32>
    %430 = arith.truncf %413 : vector<8x128xf32> to vector<8x128xbf16>
    %cst_140 = arith.constant dense<0.000000e+00> : vector<8x384xf32>
    %431 = tpu.matmul %430, %0, %cst_140 {dimension_numbers = #tpu.dot_dimension_numbers<[1], [0], [0], [1], [0, 0, 1, 1], [], []>} : vector<8x128xbf16>, vector<128x384xbf16>, vector<8x384xf32> -> vector<8x384xf32>
    %432 = arith.addf %429, %431 : vector<8x384xf32>
    %433 = arith.truncf %416 : vector<8x128xf32> to vector<8x128xbf16>
    %cst_141 = arith.constant dense<0.000000e+00> : vector<8x128xf32>
    %434 = tpu.matmul %433, %1, %cst_141 {dimension_numbers = #tpu.dot_dimension_numbers<[1], [0], [0], [1], [0, 0, 1, 1], [], []>} : vector<8x128xbf16>, vector<128x128xbf16>, vector<8x128xf32> -> vector<8x128xf32>
    %435 = arith.truncf %401 : vector<8x128xf32> to vector<8x128xbf16>
    %cst_142 = arith.constant dense<0.000000e+00> : vector<8x128xf32>
    %436 = tpu.matmul %435, %2, %cst_142 {dimension_numbers = #tpu.dot_dimension_numbers<[1], [0], [0], [1], [0, 0, 1, 1], [], []>} : vector<8x128xbf16>, vector<128x128xbf16>, vector<8x128xf32> -> vector<8x128xf32>
    %437 = vector.extract_strided_slice %432 {offsets = [0, 0], sizes = [8, 128], strides = [1, 1]} : vector<8x384xf32> to vector<8x128xf32>
    %438 = vector.extract_strided_slice %432 {offsets = [0, 128], sizes = [8, 128], strides = [1, 1]} : vector<8x384xf32> to vector<8x128xf32>
    %439 = arith.addf %438, %434 : vector<8x128xf32>
    %cst_143 = arith.constant 0.000000e+00 : f32
    %440 = vector.broadcast %cst_143 : f32 to vector<8x128xf32>
    %441 = arith.subf %440, %439 : vector<8x128xf32>
    %442 = math.exp %441 : vector<8x128xf32>
    %cst_144 = arith.constant 1.000000e+00 : f32
    %443 = vector.broadcast %cst_144 : f32 to vector<8x128xf32>
    %444 = arith.addf %443, %442 : vector<8x128xf32>
    %cst_145 = arith.constant 1.000000e+00 : f32
    %445 = vector.broadcast %cst_145 : f32 to vector<8x128xf32>
    %446 = arith.divf %445, %444 : vector<8x128xf32>
    %447 = vector.extract_strided_slice %432 {offsets = [0, 256], sizes = [8, 128], strides = [1, 1]} : vector<8x384xf32> to vector<8x128xf32>
    %448 = arith.addf %447, %436 : vector<8x128xf32>
    %cst_146 = arith.constant 0.000000e+00 : f32
    %449 = vector.broadcast %cst_146 : f32 to vector<8x128xf32>
    %450 = arith.subf %449, %448 : vector<8x128xf32>
    %451 = math.exp %450 : vector<8x128xf32>
    %cst_147 = arith.constant 1.000000e+00 : f32
    %452 = vector.broadcast %cst_147 : f32 to vector<8x128xf32>
    %453 = arith.addf %452, %451 : vector<8x128xf32>
    %cst_148 = arith.constant 1.000000e+00 : f32
    %454 = vector.broadcast %cst_148 : f32 to vector<8x128xf32>
    %455 = arith.divf %454, %453 : vector<8x128xf32>
    %456 = arith.mulf %455, %401 : vector<8x128xf32>
    %457 = vector.broadcast %cst : f32 to vector<8x128xf32>
    %458 = arith.subf %457, %455 : vector<8x128xf32>
    %459 = arith.mulf %458, %413 : vector<8x128xf32>
    %460 = arith.addf %456, %459 : vector<8x128xf32>
    %cst_149 = arith.constant 1.800000e+00 : f32
    %461 = vector.broadcast %cst_149 : f32 to vector<8x128xf32>
    %462 = arith.mulf %461, %460 : vector<8x128xf32>
    %cst_150 = arith.constant 1.000000e-01 : f32
    %463 = vector.broadcast %cst_150 : f32 to vector<8x128xf32>
    %464 = arith.addf %463, %462 : vector<8x128xf32>
    %465 = arith.subf %437, %416 : vector<8x128xf32>
    %466 = arith.mulf %465, %446 : vector<8x128xf32>
    %467 = arith.addf %416, %466 : vector<8x128xf32>
    %468 = arith.subf %467, %464 : vector<8x128xf32>
    %cst_151 = arith.constant 0.000000e+00 : f32
    %469 = vector.broadcast %cst_151 : f32 to vector<8x128xf32>
    %470 = arith.cmpf ogt, %468, %469 : vector<8x128xf32>
    %471 = arith.extui %470 : vector<8x128xi1> to vector<8x128xi32>
    %472 = arith.sitofp %471 : vector<8x128xi32> to vector<8x128xf32>
    %473 = vector.broadcast %cst : f32 to vector<8x128xf32>
    %474 = arith.subf %473, %472 : vector<8x128xf32>
    %475 = arith.mulf %474, %467 : vector<8x128xf32>
    %476 = arith.truncf %472 : vector<8x128xf32> to vector<8x128xbf16>
    %cst_152 = arith.constant dense<0.000000e+00> : vector<8x16xf32>
    %477 = tpu.matmul %476, %3, %cst_152 {dimension_numbers = #tpu.dot_dimension_numbers<[1], [0], [0], [1], [0, 0, 1, 1], [], []>} : vector<8x128xbf16>, vector<128x16xbf16>, vector<8x16xf32> -> vector<8x16xf32>
    %478 = arith.addf %477, %6 : vector<8x16xf32>
    %479 = arith.subf %478, %422 : vector<8x16xf32>
    %480 = arith.mulf %479, %9 : vector<8x16xf32>
    %481 = arith.addf %422, %480 : vector<8x16xf32>
    %482 = arith.index_cast %c7_i32 : i32 to index
    %c0_153 = arith.constant 0 : index
    %c0_154 = arith.constant 0 : index
    %483 = vector.load %arg12[%482, %c0_153, %c0_154] : memref<8x8x16xf32, #tpu.memory_space<vmem>>, vector<1x8x16xf32>
    %484 = vector.shape_cast %483 : vector<1x8x16xf32> to vector<8x16xf32>
    %485 = vector.shape_cast %481 : vector<8x16xf32> to vector<1x8x16xf32>
    tpu.vector_store %arg12[%482, %c0_153, %c0_154], %485 {strides = array<i32>} : memref<8x8x16xf32, #tpu.memory_space<vmem>>, vector<1x8x16xf32>,
    %c8_i32 = arith.constant 8 : i32
    %c0_155 = arith.constant 0 : index
    %c0_156 = arith.constant 0 : index
    %486 = vector.load %arg13[%c0_155, %c0_156] : memref<8x128xf32, #tpu.memory_space<vmem>>, vector<8x128xf32>
    tpu.vector_store %arg13[%c0_155, %c0_156], %475 {strides = array<i32>} : memref<8x128xf32, #tpu.memory_space<vmem>>, vector<8x128xf32>,
    %c0_157 = arith.constant 0 : index
    %c0_158 = arith.constant 0 : index
    %487 = vector.load %arg14[%c0_157, %c0_158] : memref<8x128xf32, #tpu.memory_space<vmem>>, vector<8x128xf32>
    tpu.vector_store %arg14[%c0_157, %c0_158], %472 {strides = array<i32>} : memref<8x128xf32, #tpu.memory_space<vmem>>, vector<8x128xf32>,
    %c0_159 = arith.constant 0 : index
    %c0_160 = arith.constant 0 : index
    %488 = vector.load %arg15[%c0_159, %c0_160] : memref<8x128xf32, #tpu.memory_space<vmem>>, vector<8x128xf32>
    tpu.vector_store %arg15[%c0_159, %c0_160], %460 {strides = array<i32>} : memref<8x128xf32, #tpu.memory_space<vmem>>, vector<8x128xf32>,
    %c0_161 = arith.constant 0 : index
    %c0_162 = arith.constant 0 : index
    %489 = vector.load %arg16[%c0_161, %c0_162] : memref<8x16xf32, #tpu.memory_space<vmem>>, vector<8x16xf32>
    tpu.vector_store %arg16[%c0_161, %c0_162], %481 {strides = array<i32>} : memref<8x16xf32, #tpu.memory_space<vmem>>, vector<8x16xf32>,
    %c0_163 = arith.constant 0 : index
    %c0_164 = arith.constant 0 : index
    %c0_165 = arith.constant 0 : index
    %490 = vector.load %arg12[%c0_163, %c0_164, %c0_165] : memref<8x8x16xf32, #tpu.memory_space<vmem>>, vector<8x8x16xf32>
    %cst_166 = arith.constant dense<0xFF800000> : vector<8x8xf32>
    %491 = vector.multi_reduction <maximumf>, %490, %cst_166 [2] : vector<8x8x16xf32> to vector<8x8xf32>
    %492 = vector.shape_cast %491 : vector<8x8xf32> to vector<8x8x1xf32>
    %493 = vector.broadcast %492 : vector<8x8x1xf32> to vector<8x8x16xf32>
    %494 = arith.subf %490, %493 : vector<8x8x16xf32>
    %495 = math.exp %494 : vector<8x8x16xf32>
    %cst_167 = arith.constant dense<0.000000e+00> : vector<8x8xf32>
    %496 = vector.multi_reduction <add>, %495, %cst_167 [2] : vector<8x8x16xf32> to vector<8x8xf32>
    %497 = vector.shape_cast %496 : vector<8x8xf32> to vector<8x8x1xf32>
    %498 = math.log %497 : vector<8x8x1xf32>
    %499 = arith.addf %492, %498 : vector<8x8x1xf32>
    %500 = vector.broadcast %499 : vector<8x8x1xf32> to vector<8x8x16xf32>
    %501 = arith.subf %490, %500 : vector<8x8x16xf32>
    %c0_168 = arith.constant 0 : index
    %c0_169 = arith.constant 0 : index
    %c0_170 = arith.constant 0 : index
    %502 = vector.load %arg12[%c0_168, %c0_169, %c0_170] : memref<8x8x16xf32, #tpu.memory_space<vmem>>, vector<8x8x16xf32>
    tpu.vector_store %arg12[%c0_168, %c0_169, %c0_170], %501 {strides = array<i32>} : memref<8x8x16xf32, #tpu.memory_space<vmem>>, vector<8x8x16xf32>,
    return
  }
  func.func @transform_0(%arg0: i32) -> (i32, i32, i32) {
    %c0_i32 = arith.constant 0 : i32
    %c0_i32_0 = arith.constant 0 : i32
    %c0_i32_1 = arith.constant 0 : i32
    return %c0_i32, %arg0, %c0_i32_0 : i32, i32, i32
  }
  func.func @transform_1(%arg0: i32) -> (i32, i32) {
    %c0_i32 = arith.constant 0 : i32
    %c0_i32_0 = arith.constant 0 : i32
    return %arg0, %c0_i32 : i32, i32
  }
  func.func @transform_2(%arg0: i32) -> (i32, i32) {
    %c0_i32 = arith.constant 0 : i32
    %c0_i32_0 = arith.constant 0 : i32
    return %arg0, %c0_i32 : i32, i32
  }
  func.func @transform_3(%arg0: i32) -> (i32, i32) {
    %c0_i32 = arith.constant 0 : i32
    %c0_i32_0 = arith.constant 0 : i32
    return %arg0, %c0_i32 : i32, i32
  }
  func.func @transform_4(%arg0: i32) -> (i32, i32) {
    %c0_i32 = arith.constant 0 : i32
    %c0_i32_0 = arith.constant 0 : i32
    return %arg0, %c0_i32 : i32, i32
  }
  func.func @transform_5(%arg0: i32) -> (i32, i32) {
    %c0_i32 = arith.constant 0 : i32
    %c0_i32_0 = arith.constant 0 : i32
    %c0_i32_1 = arith.constant 0 : i32
    return %c0_i32, %c0_i32_0 : i32, i32
  }
  func.func @transform_6(%arg0: i32) -> (i32, i32) {
    %c0_i32 = arith.constant 0 : i32
    %c0_i32_0 = arith.constant 0 : i32
    %c0_i32_1 = arith.constant 0 : i32
    return %c0_i32, %c0_i32_0 : i32, i32
  }
  func.func @transform_7(%arg0: i32) -> (i32, i32) {
    %c0_i32 = arith.constant 0 : i32
    %c0_i32_0 = arith.constant 0 : i32
    %c0_i32_1 = arith.constant 0 : i32
    return %c0_i32, %c0_i32_0 : i32, i32
  }
  func.func @transform_8(%arg0: i32) -> (i32, i32) {
    %c0_i32 = arith.constant 0 : i32
    %c0_i32_0 = arith.constant 0 : i32
    %c0_i32_1 = arith.constant 0 : i32
    return %c0_i32, %c0_i32_0 : i32, i32
  }
  func.func @transform_9(%arg0: i32) -> (i32, i32) {
    %c0_i32 = arith.constant 0 : i32
    %c0_i32_0 = arith.constant 0 : i32
    %c0_i32_1 = arith.constant 0 : i32
    return %c0_i32, %c0_i32_0 : i32, i32
  }
  func.func @transform_10(%arg0: i32) -> (i32, i32) {
    %c0_i32 = arith.constant 0 : i32
    %c0_i32_0 = arith.constant 0 : i32
    %c0_i32_1 = arith.constant 0 : i32
    return %c0_i32, %c0_i32_0 : i32, i32
  }
  func.func @transform_11(%arg0: i32) -> (i32, i32, i32) {
    %c0_i32 = arith.constant 0 : i32
    %c0_i32_0 = arith.constant 0 : i32
    %c0_i32_1 = arith.constant 0 : i32
    return %c0_i32, %arg0, %c0_i32_0 : i32, i32, i32
  }
  func.func @transform_12(%arg0: i32) -> (i32, i32) {
    %c0_i32 = arith.constant 0 : i32
    %c0_i32_0 = arith.constant 0 : i32
    return %arg0, %c0_i32 : i32, i32
  }
  func.func @transform_13(%arg0: i32) -> (i32, i32) {
    %c0_i32 = arith.constant 0 : i32
    %c0_i32_0 = arith.constant 0 : i32
    return %arg0, %c0_i32 : i32, i32
  }
  func.func @transform_14(%arg0: i32) -> (i32, i32) {
    %c0_i32 = arith.constant 0 : i32
    %c0_i32_0 = arith.constant 0 : i32
    return %arg0, %c0_i32 : i32, i32
  }
  func.func @transform_15(%arg0: i32) -> (i32, i32) {
    %c0_i32 = arith.constant 0 : i32
    %c0_i32_0 = arith.constant 0 : i32
    return %arg0, %c0_i32 : i32, i32
  }
}

</mosaic_0001>

<llo_original>
// kernel: snn_forward_sequence.1
$region0: #{snn_forward_sequence.1}
  #allocation0 [shape = 'u32[]', space=smem, size = 0x4, offset = 0x4, fixed_abs, tag = 'smem constant byte address 0x4 - core index']
  #allocation1 [shape = 'u32[144,128]{1,0:T(1,128)}', space=vmem, size = 0x12000, scoped, tag = 'internal scratch']
  %s0 = inlined_call_operand.vmem [shape: f32[8,8,384], index: 0, kind: input, shape index: {}]
  %s1 = inlined_call_operand.vmem [shape: f32[8,128], index: 1, kind: input, shape index: {}]
  %s2 = inlined_call_operand.vmem [shape: f32[8,128], index: 2, kind: input, shape index: {}]
  %s3 = inlined_call_operand.vmem [shape: f32[8,128], index: 3, kind: input, shape index: {}]
  %s4 = inlined_call_operand.vmem [shape: f32[8,16], index: 4, kind: input, shape index: {}]
  %s5 = inlined_call_operand.vmem [shape: bf16[128,384], index: 5, kind: input, shape index: {}]
  %s6 = inlined_call_operand.vmem [shape: bf16[128,128], index: 6, kind: input, shape index: {}]
  %s7 = inlined_call_operand.vmem [shape: bf16[128,128], index: 7, kind: input, shape index: {}]
  %s8 = inlined_call_operand.vmem [shape: bf16[128,16], index: 8, kind: input, shape index: {}]
  %s9 = inlined_call_operand.vmem [shape: f32[1,16], index: 9, kind: input, shape index: {}]
  %s10 = inlined_call_operand.vmem [shape: f32[1,16], index: 10, kind: input, shape index: {}]
  %s11 = inlined_call_operand.vmem [shape: f32[8,8,16], index: 11, kind: output, shape index: {0}]
  %s12 = inlined_call_operand.vmem [shape: f32[8,128], index: 12, kind: output, shape index: {1}]
  %s13 = inlined_call_operand.vmem [shape: f32[8,128], index: 13, kind: output, shape index: {2}]
  %s14 = inlined_call_operand.vmem [shape: f32[8,128], index: 14, kind: output, shape index: {3}]
  %s15 = inlined_call_operand.vmem [shape: f32[8,16], index: 15, kind: output, shape index: {4}]
  %16 = xla_tuple %s11, %s12, %s13, %s14, %s15
  %s17 = sld [smem:[#allocation0]]
  $region86: #{snn_forward_sequence.1} parent=0
    _
  %s19 = ssub.s32 1, %s17
  %s20 = scalar_select 0, %s19, %s17
  // Predicated region
  $region2: #{snn_forward_sequence.1} parent=0 // pred_check
    _
  $region3: #{snn_forward_sequence.1} parent=0 // pred_check_branch
    %22 = sbr.rel (0) target = $region5
  $region4: #{snn_forward_sequence.1} parent=0 // pred_region
    _
  $region5: #{snn_forward_sequence.1} parent=0 // pred_fallthru
    _
  // Predicated region
  $region6: #{snn_forward_sequence.1} parent=0 // pred_check
    _
  $region7: #{snn_forward_sequence.1} parent=0 // pred_check_branch
    %24 = sbr.rel (0) target = $region9
  $region8: #{snn_forward_sequence.1} parent=0 // pred_region
    _
  $region9: #{snn_forward_sequence.1} parent=0 // pred_fallthru
    _
  // Predicated region
  $region10: #{snn_forward_sequence.1} parent=0 // pred_check
    _
  $region11: #{snn_forward_sequence.1} parent=0 // pred_check_branch
    %26 = sbr.rel (0) target = $region13
  $region12: #{snn_forward_sequence.1} parent=0 // pred_region
    _
  $region13: #{snn_forward_sequence.1} parent=0 // pred_fallthru
    _
  // Predicated region
  $region14: #{snn_forward_sequence.1} parent=0 // pred_check
    _
  $region15: #{snn_forward_sequence.1} parent=0 // pred_check_branch
    %28 = sbr.rel (0) target = $region17
  $region16: #{snn_forward_sequence.1} parent=0 // pred_region
    _
  $region17: #{snn_forward_sequence.1} parent=0 // pred_fallthru
    _
  // Predicated region
  $region18: #{snn_forward_sequence.1} parent=0 // pred_check
    _
  $region19: #{snn_forward_sequence.1} parent=0 // pred_check_branch
    %30 = sbr.rel (0) target = $region21
  $region20: #{snn_forward_sequence.1} parent=0 // pred_region
    _
  $region21: #{snn_forward_sequence.1} parent=0 // pred_fallthru
    _
  // Predicated region
  $region22: #{snn_forward_sequence.1} parent=0 // pred_check
    _
  $region23: #{snn_forward_sequence.1} parent=0 // pred_check_branch
    %32 = sbr.rel (0) target = $region25
  $region24: #{snn_forward_sequence.1} parent=0 // pred_region
    _
  $region25: #{snn_forward_sequence.1} parent=0 // pred_fallthru
    _
  // Predicated region
  $region26: #{snn_forward_sequence.1} parent=0 // pred_check
    _
  $region27: #{snn_forward_sequence.1} parent=0 // pred_check_branch
    %34 = sbr.rel (0) target = $region29
  $region28: #{snn_forward_sequence.1} parent=0 // pred_region
    _
  $region29: #{snn_forward_sequence.1} parent=0 // pred_fallthru
    _
  // Predicated region
  $region30: #{snn_forward_sequence.1} parent=0 // pred_check
    _
  $region31: #{snn_forward_sequence.1} parent=0 // pred_check_branch
    %36 = sbr.rel (0) target = $region33
  $region32: #{snn_forward_sequence.1} parent=0 // pred_region
    _
  $region33: #{snn_forward_sequence.1} parent=0 // pred_fallthru
    _
  // Predicated region
  $region34: #{snn_forward_sequence.1} parent=0 // pred_check
    _
  $region35: #{snn_forward_sequence.1} parent=0 // pred_check_branch
    %38 = sbr.rel (0) target = $region37
  $region36: #{snn_forward_sequence.1} parent=0 // pred_region
    _
  $region37: #{snn_forward_sequence.1} parent=0 // pred_fallthru
    _
  // Predicated region
  $region38: #{snn_forward_sequence.1} parent=0 // pred_check
    _
  $region39: #{snn_forward_sequence.1} parent=0 // pred_check_branch
    %40 = sbr.rel (0) target = $region41
  $region40: #{snn_forward_sequence.1} parent=0 // pred_region
    _
  $region41: #{snn_forward_sequence.1} parent=0 // pred_fallthru
    _
  // Predicated region
  $region42: #{snn_forward_sequence.1} parent=0 // pred_check
    _
  $region43: #{snn_forward_sequence.1} parent=0 // pred_check_branch
    %42 = sbr.rel (0) target = $region45
  $region44: #{snn_forward_sequence.1} parent=0 // pred_region
    _
  $region45: #{snn_forward_sequence.1} parent=0 // pred_fallthru
    _
  %v44 = vld [vmem:[%s5] sm:$0xff]
  %v45 = vld [vmem:[%s5 + $0x8] sm:$0xf]
  %v46 = vld [vmem:[%s5 + $0xc] sm:$0xff]
  %v47 = vld [vmem:[%s5 + $0x14] sm:$0xf]
  %v48 = vld [vmem:[%s5 + $0x18] sm:$0xff]
  %v49 = vld [vmem:[%s5 + $0x20] sm:$0xf]
  %v50 = vld [vmem:[%s5 + $0x24] sm:$0xff]
  %v51 = vld [vmem:[%s5 + $0x2c] sm:$0xf]
  %v52 = vld [vmem:[%s5 + $0x30] sm:$0xff]
  %v53 = vld [vmem:[%s5 + $0x38] sm:$0xf]
  %v54 = vld [vmem:[%s5 + $0x3c] sm:$0xff]
  %v55 = vld [vmem:[%s5 + $0x44] sm:$0xf]
  %v56 = vld [vmem:[%s5 + $0x48] sm:$0xff]
  %v57 = vld [vmem:[%s5 + $0x50] sm:$0xf]
  %v58 = vld [vmem:[%s5 + $0x54] sm:$0xff]
  %v59 = vld [vmem:[%s5 + $0x5c] sm:$0xf]
  %v60 = vld [vmem:[%s5 + $0x60] sm:$0xff]
  %v61 = vld [vmem:[%s5 + $0x68] sm:$0xf]
  %v62 = vld [vmem:[%s5 + $0x6c] sm:$0xff]
  %v63 = vld [vmem:[%s5 + $0x74] sm:$0xf]
  %v64 = vld [vmem:[%s5 + $0x78] sm:$0xff]
  %v65 = vld [vmem:[%s5 + $0x80] sm:$0xf]
  %v66 = vld [vmem:[%s5 + $0x84] sm:$0xff]
  %v67 = vld [vmem:[%s5 + $0x8c] sm:$0xf]
  %v68 = vld [vmem:[%s5 + $0x90] sm:$0xff]
  %v69 = vld [vmem:[%s5 + $0x98] sm:$0xf]
  %v70 = vld [vmem:[%s5 + $0x9c] sm:$0xff]
  %v71 = vld [vmem:[%s5 + $0xa4] sm:$0xf]
  %v72 = vld [vmem:[%s5 + $0xa8] sm:$0xff]
  %v73 = vld [vmem:[%s5 + $0xb0] sm:$0xf]
  %v74 = vld [vmem:[%s5 + $0xb4] sm:$0xff]
  %v75 = vld [vmem:[%s5 + $0xbc] sm:$0xf]
  %v76 = vld [vmem:[%s6] sm:$0xf]
  %v77 = vld [vmem:[%s6 + $0x4] sm:$0xf]
  %v78 = vld [vmem:[%s6 + $0x8] sm:$0xf]
  %v79 = vld [vmem:[%s6 + $0xc] sm:$0xf]
  %v80 = vld [vmem:[%s6 + $0x10] sm:$0xf]
  %v81 = vld [vmem:[%s6 + $0x14] sm:$0xf]
  %v82 = vld [vmem:[%s6 + $0x18] sm:$0xf]
  %v83 = vld [vmem:[%s6 + $0x1c] sm:$0xf]
  %v84 = vld [vmem:[%s6 + $0x20] sm:$0xf]
  %v85 = vld [vmem:[%s6 + $0x24] sm:$0xf]
  %v86 = vld [vmem:[%s6 + $0x28] sm:$0xf]
  %v87 = vld [vmem:[%s6 + $0x2c] sm:$0xf]
  %v88 = vld [vmem:[%s6 + $0x30] sm:$0xf]
  %v89 = vld [vmem:[%s6 + $0x34] sm:$0xf]
  %v90 = vld [vmem:[%s6 + $0x38] sm:$0xf]
  %v91 = vld [vmem:[%s6 + $0x3c] sm:$0xf]
  %v92 = vld [vmem:[%s7] sm:$0xf]
  %v93 = vld [vmem:[%s7 + $0x4] sm:$0xf]
  %v94 = vld [vmem:[%s7 + $0x8] sm:$0xf]
  %v95 = vld [vmem:[%s7 + $0xc] sm:$0xf]
  %v96 = vld [vmem:[%s7 + $0x10] sm:$0xf]
  %v97 = vld [vmem:[%s7 + $0x14] sm:$0xf]
  %v98 = vld [vmem:[%s7 + $0x18] sm:$0xf]
  %v99 = vld [vmem:[%s7 + $0x1c] sm:$0xf]
  %v100 = vld [vmem:[%s7 + $0x20] sm:$0xf]
  %v101 = vld [vmem:[%s7 + $0x24] sm:$0xf]
  %v102 = vld [vmem:[%s7 + $0x28] sm:$0xf]
  %v103 = vld [vmem:[%s7 + $0x2c] sm:$0xf]
  %v104 = vld [vmem:[%s7 + $0x30] sm:$0xf]
  %v105 = vld [vmem:[%s7 + $0x34] sm:$0xf]
  %v106 = vld [vmem:[%s7 + $0x38] sm:$0xf]
  %v107 = vld [vmem:[%s7 + $0x3c] sm:$0xf]
  %v108 = vld [vmem:[%s8] sm:$0xf]
  %v109 = vld [vmem:[%s8 + $0x4] sm:$0xf]
  %v110 = vld [vmem:[%s8 + $0x8] sm:$0xf]
  %v111 = vld [vmem:[%s8 + $0xc] sm:$0xf]
  %v112 = vld [vmem:[%s8 + $0x10] sm:$0xf]
  %v113 = vld [vmem:[%s8 + $0x14] sm:$0xf]
  %v114 = vld [vmem:[%s8 + $0x18] sm:$0xf]
  %v115 = vld [vmem:[%s8 + $0x1c] sm:$0xf]
  %v116 = vld [vmem:[%s8 + $0x20] sm:$0xf]
  %v117 = vld [vmem:[%s8 + $0x24] sm:$0xf]
  %v118 = vld [vmem:[%s8 + $0x28] sm:$0xf]
  %v119 = vld [vmem:[%s8 + $0x2c] sm:$0xf]
  %v120 = vld [vmem:[%s8 + $0x30] sm:$0xf]
  %v121 = vld [vmem:[%s8 + $0x34] sm:$0xf]
  %v122 = vld [vmem:[%s8 + $0x38] sm:$0xf]
  %v123 = vld [vmem:[%s8 + $0x3c] sm:$0xf]
  %v124 = vld [vmem:[%s9] sm:$0x1]
  %v126 = vlaneseq
  %v127 = vshrl.u32 %v126, 7
  %v128 = vsub.s32 0, %v127
  %v129 = vrot.slane %v124, %v128
  %v131 = vld [vmem:[%s10] sm:$0x1]
  %v133 = vlaneseq
  %v134 = vshrl.u32 %v133, 7
  %v135 = vsub.s32 0, %v134
  %v136 = vrot.slane %v131, %v135
  %v138 = vld [vmem:[%s1] sm:$0xff]
  %v139 = vld [vmem:[%s2] sm:$0xff]
  %v140 = vld [vmem:[%s3] sm:$0xff]
  %v141 = vld [vmem:[%s4] sm:$0xff]
  %v142 = vld [vmem:[%s0] sm:$0xff]
  %v143 = vld [vmem:[%s0 + $0x8] sm:$0xff]
  %v144 = vld [vmem:[%s0 + $0x10] sm:$0xff]
  %v145 = vpack.c.bf16 %v139, %v139
  %v178 = vunpack.c.l.b16 %v44
  %v179 = vunpack.c.h.b16 %v44
  %v180 = vunpack.c.l.b16 %v45
  %v181 = vunpack.c.l.b16 %v46
  %v182 = vunpack.c.h.b16 %v46
  %v183 = vunpack.c.l.b16 %v47
  %v184 = vunpack.c.l.b16 %v48
  %v185 = vunpack.c.h.b16 %v48
  %v186 = vunpack.c.l.b16 %v49
  %v187 = vunpack.c.l.b16 %v50
  %v188 = vunpack.c.h.b16 %v50
  %v189 = vunpack.c.l.b16 %v51
  %v190 = vunpack.c.l.b16 %v52
  %v191 = vunpack.c.h.b16 %v52
  %v192 = vunpack.c.l.b16 %v53
  %v193 = vunpack.c.l.b16 %v54
  %v194 = vunpack.c.h.b16 %v54
  %v195 = vunpack.c.l.b16 %v55
  %v196 = vunpack.c.l.b16 %v56
  %v197 = vunpack.c.h.b16 %v56
  %v198 = vunpack.c.l.b16 %v57
  %v199 = vunpack.c.l.b16 %v58
  %v200 = vunpack.c.h.b16 %v58
  %v201 = vunpack.c.l.b16 %v59
  %v202 = vunpack.c.l.b16 %v60
  %v203 = vunpack.c.h.b16 %v60
  %v204 = vunpack.c.l.b16 %v61
  %v205 = vunpack.c.l.b16 %v62
  %v206 = vunpack.c.h.b16 %v62
  %v207 = vunpack.c.l.b16 %v63
  %v208 = vunpack.c.l.b16 %v64
  %v209 = vunpack.c.h.b16 %v64
  %v210 = vunpack.c.l.b16 %v65
  %v211 = vunpack.c.l.b16 %v66
  %v212 = vunpack.c.h.b16 %v66
  %v213 = vunpack.c.l.b16 %v67
  %v214 = vunpack.c.l.b16 %v68
  %v215 = vunpack.c.h.b16 %v68
  %v216 = vunpack.c.l.b16 %v69
  %v217 = vunpack.c.l.b16 %v70
  %v218 = vunpack.c.h.b16 %v70
  %v219 = vunpack.c.l.b16 %v71
  %v220 = vunpack.c.l.b16 %v72
  %v221 = vunpack.c.h.b16 %v72
  %v222 = vunpack.c.l.b16 %v73
  %v223 = vunpack.c.l.b16 %v74
  %v224 = vunpack.c.h.b16 %v74
  %v225 = vunpack.c.l.b16 %v75
  %v226 = vpack.c.b16 %v181, %v178
  %v227 = vpack.c.b16 %v182, %v179
  %v228 = vpack.c.b16 %v183, %v180
  %v229 = vpack.c.b16 %v187, %v184
  %v230 = vpack.c.b16 %v188, %v185
  %v231 = vpack.c.b16 %v189, %v186
  %v232 = vpack.c.b16 %v193, %v190
  %v233 = vpack.c.b16 %v194, %v191
  %v234 = vpack.c.b16 %v195, %v192
  %v235 = vpack.c.b16 %v199, %v196
  %v236 = vpack.c.b16 %v200, %v197
  %v237 = vpack.c.b16 %v201, %v198
  %v238 = vpack.c.b16 %v205, %v202
  %v239 = vpack.c.b16 %v206, %v203
  %v240 = vpack.c.b16 %v207, %v204
  %v241 = vpack.c.b16 %v211, %v208
  %v242 = vpack.c.b16 %v212, %v209
  %v243 = vpack.c.b16 %v213, %v210
  %v244 = vpack.c.b16 %v217, %v214
  %v245 = vpack.c.b16 %v218, %v215
  %v246 = vpack.c.b16 %v219, %v216
  %v247 = vpack.c.b16 %v223, %v220
  %v248 = vpack.c.b16 %v224, %v221
  %v249 = vpack.c.b16 %v225, %v222
  %274 = vmatprep.subr.bf16.mxu0 %v227
  %275 = vmatpush1.bf16.msra.mxu0 %v226
  %276 = vmatprep.subr.bf16.mxu0 %v230
  %277 = vmatpush1.bf16.msra.mxu0 %v229
  %278 = vmatprep.subr.bf16.mxu0 %v233
  %279 = vmatpush1.bf16.msra.mxu0 %v232
  %280 = vmatprep.subr.bf16.mxu0 %v236
  %281 = vmatpush1.bf16.msra.mxu0 %v235
  %282 = vmatprep.subr.bf16.mxu0 %v239
  %283 = vmatpush1.bf16.msra.mxu0 %v238
  %284 = vmatprep.subr.bf16.mxu0 %v242
  %285 = vmatpush1.bf16.msra.mxu0 %v241
  %286 = vmatprep.subr.bf16.mxu0 %v245
  %287 = vmatpush1.bf16.msra.mxu0 %v244
  %288 = vmatprep.subr.bf16.mxu0 %v248
  %289 = vmatpush1.bf16.msra.mxu0 %v247
  %290 = vmatprep.subr.bf16.mxu0 0
  %291 = vmatpush1.bf16.msra.mxu0 0
  %292 = vmatprep.subr.bf16.mxu0 0
  %293 = vmatpush1.bf16.msra.mxu0 0
  %294 = vmatprep.subr.bf16.mxu0 0
  %295 = vmatpush1.bf16.msra.mxu0 0
  %296 = vmatprep.subr.bf16.mxu0 0
  %297 = vmatpush1.bf16.msra.mxu0 0
  %298 = vmatprep.subr.bf16.mxu0 0
  %299 = vmatpush1.bf16.msra.mxu0 0
  %300 = vmatprep.subr.bf16.mxu0 0
  %301 = vmatpush1.bf16.msra.mxu0 0
  %302 = vmatprep.subr.bf16.mxu0 0
  %303 = vmatpush1.bf16.msra.mxu0 0
  %304 = vmatprep.subr.bf16.mxu0 0
  %305 = vmatpush1.bf16.msra.mxu0 0
  %306 = vmatprep.mubr.bf16.mxu0 0
  %307 = vmatmul.mubr.bf16.gmra.mrb[0].mxu0 %v145
  %v308 = vpop.f32.mrb[0].mxu0
  %v309 = vadd.f32 0.0, %v308
  %v310 = vpop.f32.mrb[0].mxu0
  %v311 = vadd.f32 0.0, %v310
  %v312 = vpop.f32.mrb[0].mxu0
  %v313 = vpop.f32.mrb[0].mxu0
  %314 = vdwg.mxu0
  %315 = vmatprep.subr.bf16.mxu0 0
  %316 = vmatpush1.bf16.msra.mxu0 %v228
  %317 = vmatprep.subr.bf16.mxu0 0
  %318 = vmatpush1.bf16.msra.mxu0 %v231
  %319 = vmatprep.subr.bf16.mxu0 0
  %320 = vmatpush1.bf16.msra.mxu0 %v234
  %321 = vmatprep.subr.bf16.mxu0 0
  %322 = vmatpush1.bf16.msra.mxu0 %v237
  %323 = vmatprep.subr.bf16.mxu0 0
  %324 = vmatpush1.bf16.msra.mxu0 %v240
  %325 = vmatprep.subr.bf16.mxu0 0
  %326 = vmatpush1.bf16.msra.mxu0 %v243
  %327 = vmatprep.subr.bf16.mxu0 0
  %328 = vmatpush1.bf16.msra.mxu0 %v246
  %329 = vmatprep.subr.bf16.mxu0 0
  %330 = vmatpush1.bf16.msra.mxu0 %v249
  %331 = vmatprep.subr.bf16.mxu0 0
  %332 = vmatpush1.bf16.msra.mxu0 0
  %333 = vmatprep.subr.bf16.mxu0 0
  %334 = vmatpush1.bf16.msra.mxu0 0
  %335 = vmatprep.subr.bf16.mxu0 0
  %336 = vmatpush1.bf16.msra.mxu0 0
  %337 = vmatprep.subr.bf16.mxu0 0
  %338 = vmatpush1.bf16.msra.mxu0 0
  %339 = vmatprep.subr.bf16.mxu0 0
  %340 = vmatpush1.bf16.msra.mxu0 0
  %341 = vmatprep.subr.bf16.mxu0 0
  %342 = vmatpush1.bf16.msra.mxu0 0
  %343 = vmatprep.subr.bf16.mxu0 0
  %344 = vmatpush1.bf16.msra.mxu0 0
  %345 = vmatprep.subr.bf16.mxu0 0
  %346 = vmatpush1.bf16.msra.mxu0 0
  %347 = vmatprep.mubr.bf16.mxu0 0
  %348 = vmatmul.mubr.bf16.gmra.mrb[0].mxu0 %v145
  %v349 = vpop.f32.mrb[0].mxu0
  %v350 = vadd.f32 0.0, %v349
  %v351 = vpop.f32.mrb[0].mxu0
  %v352 = vpop.f32.mrb[0].mxu0
  %v353 = vpop.f32.mrb[0].mxu0
  %354 = vdwg.mxu0
  %v355 = vadd.f32 %v142, %v309
  %v356 = vadd.f32 %v143, %v311
  %v357 = vadd.f32 %v144, %v350
  %v358 = vpack.c.bf16 %v138, %v138
  %v375 = vunpack.c.l.b16 %v76
  %v376 = vunpack.c.l.b16 %v77
  %v377 = vunpack.c.l.b16 %v78
  %v378 = vunpack.c.l.b16 %v79
  %v379 = vunpack.c.l.b16 %v80
  %v380 = vunpack.c.l.b16 %v81
  %v381 = vunpack.c.l.b16 %v82
  %v382 = vunpack.c.l.b16 %v83
  %v383 = vunpack.c.l.b16 %v84
  %v384 = vunpack.c.l.b16 %v85
  %v385 = vunpack.c.l.b16 %v86
  %v386 = vunpack.c.l.b16 %v87
  %v387 = vunpack.c.l.b16 %v88
  %v388 = vunpack.c.l.b16 %v89
  %v389 = vunpack.c.l.b16 %v90
  %v390 = vunpack.c.l.b16 %v91
  %v391 = vpack.c.b16 %v376, %v375
  %v392 = vpack.c.b16 %v378, %v377
  %v393 = vpack.c.b16 %v380, %v379
  %v394 = vpack.c.b16 %v382, %v381
  %v395 = vpack.c.b16 %v384, %v383
  %v396 = vpack.c.b16 %v386, %v385
  %v397 = vpack.c.b16 %v388, %v387
  %v398 = vpack.c.b16 %v390, %v389
  %407 = vmatprep.subr.bf16.mxu0 0
  %408 = vmatpush1.bf16.msra.mxu0 %v391
  %409 = vmatprep.subr.bf16.mxu0 0
  %410 = vmatpush1.bf16.msra.mxu0 %v392
  %411 = vmatprep.subr.bf16.mxu0 0
  %412 = vmatpush1.bf16.msra.mxu0 %v393
  %413 = vmatprep.subr.bf16.mxu0 0
  %414 = vmatpush1.bf16.msra.mxu0 %v394
  %415 = vmatprep.subr.bf16.mxu0 0
  %416 = vmatpush1.bf16.msra.mxu0 %v395
  %417 = vmatprep.subr.bf16.mxu0 0
  %418 = vmatpush1.bf16.msra.mxu0 %v396
  %419 = vmatprep.subr.bf16.mxu0 0
  %420 = vmatpush1.bf16.msra.mxu0 %v397
  %421 = vmatprep.subr.bf16.mxu0 0
  %422 = vmatpush1.bf16.msra.mxu0 %v398
  %423 = vmatprep.subr.bf16.mxu0 0
  %424 = vmatpush1.bf16.msra.mxu0 0
  %425 = vmatprep.subr.bf16.mxu0 0
  %426 = vmatpush1.bf16.msra.mxu0 0
  %427 = vmatprep.subr.bf16.mxu0 0
  %428 = vmatpush1.bf16.msra.mxu0 0
  %429 = vmatprep.subr.bf16.mxu0 0
  %430 = vmatpush1.bf16.msra.mxu0 0
  %431 = vmatprep.subr.bf16.mxu0 0
  %432 = vmatpush1.bf16.msra.mxu0 0
  %433 = vmatprep.subr.bf16.mxu0 0
  %434 = vmatpush1.bf16.msra.mxu0 0
  %435 = vmatprep.subr.bf16.mxu0 0
  %436 = vmatpush1.bf16.msra.mxu0 0
  %437 = vmatprep.subr.bf16.mxu0 0
  %438 = vmatpush1.bf16.msra.mxu0 0
  %439 = vmatprep.mubr.bf16.mxu0 0
  %440 = vmatmul.mubr.bf16.gmra.mrb[0].mxu0 %v358
  %v441 = vpop.f32.mrb[0].mxu0
  %v442 = vadd.f32 0.0, %v441
  %v443 = vpop.f32.mrb[0].mxu0
  %v444 = vpop.f32.mrb[0].mxu0
  %v445 = vpop.f32.mrb[0].mxu0
  %446 = vdwg.mxu0
  %v447 = vpack.c.bf16 %v140, %v140
  %v464 = vunpack.c.l.b16 %v92
  %v465 = vunpack.c.l.b16 %v93
  %v466 = vunpack.c.l.b16 %v94
  %v467 = vunpack.c.l.b16 %v95
  %v468 = vunpack.c.l.b16 %v96
  %v469 = vunpack.c.l.b16 %v97
  %v470 = vunpack.c.l.b16 %v98
  %v471 = vunpack.c.l.b16 %v99
  %v472 = vunpack.c.l.b16 %v100
  %v473 = vunpack.c.l.b16 %v101
  %v474 = vunpack.c.l.b16 %v102
  %v475 = vunpack.c.l.b16 %v103
  %v476 = vunpack.c.l.b16 %v104
  %v477 = vunpack.c.l.b16 %v105
  %v478 = vunpack.c.l.b16 %v106
  %v479 = vunpack.c.l.b16 %v107
  %v480 = vpack.c.b16 %v465, %v464
  %v481 = vpack.c.b16 %v467, %v466
  %v482 = vpack.c.b16 %v469, %v468
  %v483 = vpack.c.b16 %v471, %v470
  %v484 = vpack.c.b16 %v473, %v472
  %v485 = vpack.c.b16 %v475, %v474
  %v486 = vpack.c.b16 %v477, %v476
  %v487 = vpack.c.b16 %v479, %v478
  %496 = vmatprep.subr.bf16.mxu0 0
  %497 = vmatpush1.bf16.msra.mxu0 %v480
  %498 = vmatprep.subr.bf16.mxu0 0
  %499 = vmatpush1.bf16.msra.mxu0 %v481
  %500 = vmatprep.subr.bf16.mxu0 0
  %501 = vmatpush1.bf16.msra.mxu0 %v482
  %502 = vmatprep.subr.bf16.mxu0 0
  %503 = vmatpush1.bf16.msra.mxu0 %v483
  %504 = vmatprep.subr.bf16.mxu0 0
  %505 = vmatpush1.bf16.msra.mxu0 %v484
  %506 = vmatprep.subr.bf16.mxu0 0
  %507 = vmatpush1.bf16.msra.mxu0 %v485
  %508 = vmatprep.subr.bf16.mxu0 0
  %509 = vmatpush1.bf16.msra.mxu0 %v486
  %510 = vmatprep.subr.bf16.mxu0 0
  %511 = vmatpush1.bf16.msra.mxu0 %v487
  %512 = vmatprep.subr.bf16.mxu0 0
  %513 = vmatpush1.bf16.msra.mxu0 0
  %514 = vmatprep.subr.bf16.mxu0 0
  %515 = vmatpush1.bf16.msra.mxu0 0
  %516 = vmatprep.subr.bf16.mxu0 0
  %517 = vmatpush1.bf16.msra.mxu0 0
  %518 = vmatprep.subr.bf16.mxu0 0
  %519 = vmatpush1.bf16.msra.mxu0 0
  %520 = vmatprep.subr.bf16.mxu0 0
  %521 = vmatpush1.bf16.msra.mxu0 0
  %522 = vmatprep.subr.bf16.mxu0 0
  %523 = vmatpush1.bf16.msra.mxu0 0
  %524 = vmatprep.subr.bf16.mxu0 0
  %525 = vmatpush1.bf16.msra.mxu0 0
  %526 = vmatprep.subr.bf16.mxu0 0
  %527 = vmatpush1.bf16.msra.mxu0 0
  %528 = vmatprep.mubr.bf16.mxu0 0
  %529 = vmatmul.mubr.bf16.gmra.mrb[0].mxu0 %v447
  %v530 = vpop.f32.mrb[0].mxu0
  %v531 = vadd.f32 0.0, %v530
  %v532 = vpop.f32.mrb[0].mxu0
  %v533 = vpop.f32.mrb[0].mxu0
  %v534 = vpop.f32.mrb[0].mxu0
  %535 = vdwg.mxu0
  %v536 = vadd.f32 %v356, %v442
  %v537 = vsub.f32 0.0, %v536
  %v538 = vmul.f32 %v537, 1.442695
  %v539 = vpow.pop %v538
  %v540 = vadd.f32 %v539, 1.0
  %v541 = vrcp.pop %v540
  %v542 = vmul.f32 1.0, %v541
  %v543 = vadd.f32 %v357, %v531
  %v544 = vsub.f32 0.0, %v543
  %v545 = vmul.f32 %v544, 1.442695
  %v546 = vpow.pop %v545
  %v547 = vadd.f32 %v546, 1.0
  %v548 = vrcp.pop %v547
  %v549 = vmul.f32 1.0, %v548
  %v550 = vmul.f32 %v549, %v140
  %v551 = vsub.f32 1.0, %v549
  %v552 = vmul.f32 %v551, %v139
  %v553 = vadd.f32 %v550, %v552
  %v554 = vmul.f32 %v553, 1.8
  %v555 = vadd.f32 %v554, 0.1
  %v556 = vsub.f32 %v355, %v138
  %v557 = vmul.f32 %v556, %v542
  %v558 = vadd.f32 %v138, %v557
  %v559 = vsub.f32 %v558, %v555
  %vm560 = vcmp.gt.f32.partialorder %v559, 0.0
  %v561 = vsel %vm560, 1, 0
  %v562 = vcvt.s32.f32 %v561
  %v563 = vsub.f32 1.0, %v562
  %v564 = vmul.f32 %v563, %v558
  %v565 = vpack.c.bf16 %v562, %v562
  %v582 = vunpack.c.l.b16 %v108
  %v583 = vunpack.c.l.b16 %v109
  %v584 = vunpack.c.l.b16 %v110
  %v585 = vunpack.c.l.b16 %v111
  %v586 = vunpack.c.l.b16 %v112
  %v587 = vunpack.c.l.b16 %v113
  %v588 = vunpack.c.l.b16 %v114
  %v589 = vunpack.c.l.b16 %v115
  %v590 = vunpack.c.l.b16 %v116
  %v591 = vunpack.c.l.b16 %v117
  %v592 = vunpack.c.l.b16 %v118
  %v593 = vunpack.c.l.b16 %v119
  %v594 = vunpack.c.l.b16 %v120
  %v595 = vunpack.c.l.b16 %v121
  %v596 = vunpack.c.l.b16 %v122
  %v597 = vunpack.c.l.b16 %v123
  %v598 = vpack.c.b16 %v583, %v582
  %v599 = vpack.c.b16 %v585, %v584
  %v600 = vpack.c.b16 %v587, %v586
  %v601 = vpack.c.b16 %v589, %v588
  %v602 = vpack.c.b16 %v591, %v590
  %v603 = vpack.c.b16 %v593, %v592
  %v604 = vpack.c.b16 %v595, %v594
  %v605 = vpack.c.b16 %v597, %v596
  %614 = vmatprep.subr.bf16.mxu0 0
  %615 = vmatpush1.bf16.msra.mxu0 %v598
  %616 = vmatprep.subr.bf16.mxu0 0
  %617 = vmatpush1.bf16.msra.mxu0 %v599
  %618 = vmatprep.subr.bf16.mxu0 0
  %619 = vmatpush1.bf16.msra.mxu0 %v600
  %620 = vmatprep.subr.bf16.mxu0 0
  %621 = vmatpush1.bf16.msra.mxu0 %v601
  %622 = vmatprep.subr.bf16.mxu0 0
  %623 = vmatpush1.bf16.msra.mxu0 %v602
  %624 = vmatprep.subr.bf16.mxu0 0
  %625 = vmatpush1.bf16.msra.mxu0 %v603
  %626 = vmatprep.subr.bf16.mxu0 0
  %627 = vmatpush1.bf16.msra.mxu0 %v604
  %628 = vmatprep.subr.bf16.mxu0 0
  %629 = vmatpush1.bf16.msra.mxu0 %v605
  %630 = vmatprep.subr.bf16.mxu0 0
  %631 = vmatpush1.bf16.msra.mxu0 0
  %632 = vmatprep.subr.bf16.mxu0 0
  %633 = vmatpush1.bf16.msra.mxu0 0
  %634 = vmatprep.subr.bf16.mxu0 0
  %635 = vmatpush1.bf16.msra.mxu0 0
  %636 = vmatprep.subr.bf16.mxu0 0
  %637 = vmatpush1.bf16.msra.mxu0 0
  %638 = vmatprep.subr.bf16.mxu0 0
  %639 = vmatpush1.bf16.msra.mxu0 0
  %640 = vmatprep.subr.bf16.mxu0 0
  %641 = vmatpush1.bf16.msra.mxu0 0
  %642 = vmatprep.subr.bf16.mxu0 0
  %643 = vmatpush1.bf16.msra.mxu0 0
  %644 = vmatprep.subr.bf16.mxu0 0
  %645 = vmatpush1.bf16.msra.mxu0 0
  %646 = vmatprep.mubr.bf16.mxu0 0
  %647 = vmatmul.mubr.bf16.gmra.mrb[0].mxu0 %v565
  %v648 = vpop.f32.mrb[0].mxu0
  %v649 = vadd.f32 %v129, %v648
  %v650 = vpop.f32.mrb[0].mxu0
  %v651 = vpop.f32.mrb[0].mxu0
  %v652 = vpop.f32.mrb[0].mxu0
  %653 = vdwg.mxu0
  %v654 = vsub.f32 %v649, %v141
  %v655 = vmul.f32 %v654, %v136
  %v656 = vadd.f32 %v141, %v655
  %vm657 = vcmask 130048
  %658 = vst.msk [vmem:[%s11] sm:$0xff] %vm657, %v656
  %s659 = scalar_lea.vmem %s0, 24
  %v660 = vld [vmem:[%s659] sm:$0xff]
  %v661 = vld [vmem:[%s659 + $0x8] sm:$0xff]
  %v662 = vld [vmem:[%s659 + $0x10] sm:$0xff]
  %663 = vmatprep.subr.bf16.mxu0 %v227
  %664 = vmatpush1.bf16.msra.mxu0 %v226
  %665 = vmatprep.subr.bf16.mxu0 %v230
  %666 = vmatpush1.bf16.msra.mxu0 %v229
  %667 = vmatprep.subr.bf16.mxu0 %v233
  %668 = vmatpush1.bf16.msra.mxu0 %v232
  %669 = vmatprep.subr.bf16.mxu0 %v236
  %670 = vmatpush1.bf16.msra.mxu0 %v235
  %671 = vmatprep.subr.bf16.mxu0 %v239
  %672 = vmatpush1.bf16.msra.mxu0 %v238
  %673 = vmatprep.subr.bf16.mxu0 %v242
  %674 = vmatpush1.bf16.msra.mxu0 %v241
  %675 = vmatprep.subr.bf16.mxu0 %v245
  %676 = vmatpush1.bf16.msra.mxu0 %v244
  %677 = vmatprep.subr.bf16.mxu0 %v248
  %678 = vmatpush1.bf16.msra.mxu0 %v247
  %679 = vmatprep.subr.bf16.mxu0 0
  %680 = vmatpush1.bf16.msra.mxu0 0
  %681 = vmatprep.subr.bf16.mxu0 0
  %682 = vmatpush1.bf16.msra.mxu0 0
  %683 = vmatprep.subr.bf16.mxu0 0
  %684 = vmatpush1.bf16.msra.mxu0 0
  %685 = vmatprep.subr.bf16.mxu0 0
  %686 = vmatpush1.bf16.msra.mxu0 0
  %687 = vmatprep.subr.bf16.mxu0 0
  %688 = vmatpush1.bf16.msra.mxu0 0
  %689 = vmatprep.subr.bf16.mxu0 0
  %690 = vmatpush1.bf16.msra.mxu0 0
  %691 = vmatprep.subr.bf16.mxu0 0
  %692 = vmatpush1.bf16.msra.mxu0 0
  %693 = vmatprep.subr.bf16.mxu0 0
  %694 = vmatpush1.bf16.msra.mxu0 0
  %695 = vmatprep.mubr.bf16.mxu0 0
  %696 = vmatmul.mubr.bf16.gmra.mrb[0].mxu0 %v565
  %v697 = vpop.f32.mrb[0].mxu0
  %v698 = vadd.f32 0.0, %v697
  %v699 = vpop.f32.mrb[0].mxu0
  %v700 = vadd.f32 0.0, %v699
  %v701 = vpop.f32.mrb[0].mxu0
  %v702 = vpop.f32.mrb[0].mxu0
  %703 = vdwg.mxu0
  %704 = vmatprep.subr.bf16.mxu0 0
  %705 = vmatpush1.bf16.msra.mxu0 %v228
  %706 = vmatprep.subr.bf16.mxu0 0
  %707 = vmatpush1.bf16.msra.mxu0 %v231
  %708 = vmatprep.subr.bf16.mxu0 0
  %709 = vmatpush1.bf16.msra.mxu0 %v234
  %710 = vmatprep.subr.bf16.mxu0 0
  %711 = vmatpush1.bf16.msra.mxu0 %v237
  %712 = vmatprep.subr.bf16.mxu0 0
  %713 = vmatpush1.bf16.msra.mxu0 %v240
  %714 = vmatprep.subr.bf16.mxu0 0
  %715 = vmatpush1.bf16.msra.mxu0 %v243
  %716 = vmatprep.subr.bf16.mxu0 0
  %717 = vmatpush1.bf16.msra.mxu0 %v246
  %718 = vmatprep.subr.bf16.mxu0 0
  %719 = vmatpush1.bf16.msra.mxu0 %v249
  %720 = vmatprep.subr.bf16.mxu0 0
  %721 = vmatpush1.bf16.msra.mxu0 0
  %722 = vmatprep.subr.bf16.mxu0 0
  %723 = vmatpush1.bf16.msra.mxu0 0
  %724 = vmatprep.subr.bf16.mxu0 0
  %725 = vmatpush1.bf16.msra.mxu0 0
  %726 = vmatprep.subr.bf16.mxu0 0
  %727 = vmatpush1.bf16.msra.mxu0 0
  %728 = vmatprep.subr.bf16.mxu0 0
  %729 = vmatpush1.bf16.msra.mxu0 0
  %730 = vmatprep.subr.bf16.mxu0 0
  %731 = vmatpush1.bf16.msra.mxu0 0
  %732 = vmatprep.subr.bf16.mxu0 0
  %733 = vmatpush1.bf16.msra.mxu0 0
  %734 = vmatprep.subr.bf16.mxu0 0
  %735 = vmatpush1.bf16.msra.mxu0 0
  %736 = vmatprep.mubr.bf16.mxu0 0
  %737 = vmatmul.mubr.bf16.gmra.mrb[0].mxu0 %v565
  %v738 = vpop.f32.mrb[0].mxu0
  %v739 = vadd.f32 0.0, %v738
  %v740 = vpop.f32.mrb[0].mxu0
  %v741 = vpop.f32.mrb[0].mxu0
  %v742 = vpop.f32.mrb[0].mxu0
  %743 = vdwg.mxu0
  %v744 = vadd.f32 %v660, %v698
  %v745 = vadd.f32 %v661, %v700
  %v746 = vadd.f32 %v662, %v739
  %v747 = vpack.c.bf16 %v564, %v564
  %748 = vmatprep.subr.bf16.mxu0 0
  %749 = vmatpush1.bf16.msra.mxu0 %v391
  %750 = vmatprep.subr.bf16.mxu0 0
  %751 = vmatpush1.bf16.msra.mxu0 %v392
  %752 = vmatprep.subr.bf16.mxu0 0
  %753 = vmatpush1.bf16.msra.mxu0 %v393
  %754 = vmatprep.subr.bf16.mxu0 0
  %755 = vmatpush1.bf16.msra.mxu0 %v394
  %756 = vmatprep.subr.bf16.mxu0 0
  %757 = vmatpush1.bf16.msra.mxu0 %v395
  %758 = vmatprep.subr.bf16.mxu0 0
  %759 = vmatpush1.bf16.msra.mxu0 %v396
  %760 = vmatprep.subr.bf16.mxu0 0
  %761 = vmatpush1.bf16.msra.mxu0 %v397
  %762 = vmatprep.subr.bf16.mxu0 0
  %763 = vmatpush1.bf16.msra.mxu0 %v398
  %764 = vmatprep.subr.bf16.mxu0 0
  %765 = vmatpush1.bf16.msra.mxu0 0
  %766 = vmatprep.subr.bf16.mxu0 0
  %767 = vmatpush1.bf16.msra.mxu0 0
  %768 = vmatprep.subr.bf16.mxu0 0
  %769 = vmatpush1.bf16.msra.mxu0 0
  %770 = vmatprep.subr.bf16.mxu0 0
  %771 = vmatpush1.bf16.msra.mxu0 0
  %772 = vmatprep.subr.bf16.mxu0 0
  %773 = vmatpush1.bf16.msra.mxu0 0
  %774 = vmatprep.subr.bf16.mxu0 0
  %775 = vmatpush1.bf16.msra.mxu0 0
  %776 = vmatprep.subr.bf16.mxu0 0
  %777 = vmatpush1.bf16.msra.mxu0 0
  %778 = vmatprep.subr.bf16.mxu0 0
  %779 = vmatpush1.bf16.msra.mxu0 0
  %780 = vmatprep.mubr.bf16.mxu0 0
  %781 = vmatmul.mubr.bf16.gmra.mrb[0].mxu0 %v747
  %v782 = vpop.f32.mrb[0].mxu0
  %v783 = vadd.f32 0.0, %v782
  %v784 = vpop.f32.mrb[0].mxu0
  %v785 = vpop.f32.mrb[0].mxu0
  %v786 = vpop.f32.mrb[0].mxu0
  %787 = vdwg.mxu0
  %v788 = vpack.c.bf16 %v553, %v553
  %789 = vmatprep.subr.bf16.mxu0 0
  %790 = vmatpush1.bf16.msra.mxu0 %v480
  %791 = vmatprep.subr.bf16.mxu0 0
  %792 = vmatpush1.bf16.msra.mxu0 %v481
  %793 = vmatprep.subr.bf16.mxu0 0
  %794 = vmatpush1.bf16.msra.mxu0 %v482
  %795 = vmatprep.subr.bf16.mxu0 0
  %796 = vmatpush1.bf16.msra.mxu0 %v483
  %797 = vmatprep.subr.bf16.mxu0 0
  %798 = vmatpush1.bf16.msra.mxu0 %v484
  %799 = vmatprep.subr.bf16.mxu0 0
  %800 = vmatpush1.bf16.msra.mxu0 %v485
  %801 = vmatprep.subr.bf16.mxu0 0
  %802 = vmatpush1.bf16.msra.mxu0 %v486
  %803 = vmatprep.subr.bf16.mxu0 0
  %804 = vmatpush1.bf16.msra.mxu0 %v487
  %805 = vmatprep.subr.bf16.mxu0 0
  %806 = vmatpush1.bf16.msra.mxu0 0
  %807 = vmatprep.subr.bf16.mxu0 0
  %808 = vmatpush1.bf16.msra.mxu0 0
  %809 = vmatprep.subr.bf16.mxu0 0
  %810 = vmatpush1.bf16.msra.mxu0 0
  %811 = vmatprep.subr.bf16.mxu0 0
  %812 = vmatpush1.bf16.msra.mxu0 0
  %813 = vmatprep.subr.bf16.mxu0 0
  %814 = vmatpush1.bf16.msra.mxu0 0
  %815 = vmatprep.subr.bf16.mxu0 0
  %816 = vmatpush1.bf16.msra.mxu0 0
  %817 = vmatprep.subr.bf16.mxu0 0
  %818 = vmatpush1.bf16.msra.mxu0 0
  %819 = vmatprep.subr.bf16.mxu0 0
  %820 = vmatpush1.bf16.msra.mxu0 0
  %821 = vmatprep.mubr.bf16.mxu0 0
  %822 = vmatmul.mubr.bf16.gmra.mrb[0].mxu0 %v788
  %v823 = vpop.f32.mrb[0].mxu0
  %v824 = vadd.f32 0.0, %v823
  %v825 = vpop.f32.mrb[0].mxu0
  %v826 = vpop.f32.mrb[0].mxu0
  %v827 = vpop.f32.mrb[0].mxu0
  %828 = vdwg.mxu0
  %v829 = vadd.f32 %v745, %v783
  %v830 = vsub.f32 0.0, %v829
  %v831 = vmul.f32 %v830, 1.442695
  %v832 = vpow.pop %v831
  %v833 = vadd.f32 %v832, 1.0
  %v834 = vrcp.pop %v833
  %v835 = vmul.f32 1.0, %v834
  %v836 = vadd.f32 %v746, %v824
  %v837 = vsub.f32 0.0, %v836
  %v838 = vmul.f32 %v837, 1.442695
  %v839 = vpow.pop %v838
  %v840 = vadd.f32 %v839, 1.0
  %v841 = vrcp.pop %v840
  %v842 = vmul.f32 1.0, %v841
  %v843 = vmul.f32 %v842, %v553
  %v844 = vsub.f32 1.0, %v842
  %v845 = vmul.f32 %v844, %v562
  %v846 = vadd.f32 %v843, %v845
  %v847 = vmul.f32 %v846, 1.8
  %v848 = vadd.f32 %v847, 0.1
  %v849 = vsub.f32 %v744, %v564
  %v850 = vmul.f32 %v849, %v835
  %v851 = vadd.f32 %v564, %v850
  %v852 = vsub.f32 %v851, %v848
  %vm853 = vcmp.gt.f32.partialorder %v852, 0.0
  %v854 = vsel %vm853, 1, 0
  %v855 = vcvt.s32.f32 %v854
  %v856 = vsub.f32 1.0, %v855
  %v857 = vmul.f32 %v856, %v851
  %v858 = vpack.c.bf16 %v855, %v855
  %859 = vmatprep.subr.bf16.mxu0 0
  %860 = vmatpush1.bf16.msra.mxu0 %v598
  %861 = vmatprep.subr.bf16.mxu0 0
  %862 = vmatpush1.bf16.msra.mxu0 %v599
  %863 = vmatprep.subr.bf16.mxu0 0
  %864 = vmatpush1.bf16.msra.mxu0 %v600
  %865 = vmatprep.subr.bf16.mxu0 0
  %866 = vmatpush1.bf16.msra.mxu0 %v601
  %867 = vmatprep.subr.bf16.mxu0 0
  %868 = vmatpush1.bf16.msra.mxu0 %v602
  %869 = vmatprep.subr.bf16.mxu0 0
  %870 = vmatpush1.bf16.msra.mxu0 %v603
  %871 = vmatprep.subr.bf16.mxu0 0
  %872 = vmatpush1.bf16.msra.mxu0 %v604
  %873 = vmatprep.subr.bf16.mxu0 0
  %874 = vmatpush1.bf16.msra.mxu0 %v605
  %875 = vmatprep.subr.bf16.mxu0 0
  %876 = vmatpush1.bf16.msra.mxu0 0
  %877 = vmatprep.subr.bf16.mxu0 0
  %878 = vmatpush1.bf16.msra.mxu0 0
  %879 = vmatprep.subr.bf16.mxu0 0
  %880 = vmatpush1.bf16.msra.mxu0 0
  %881 = vmatprep.subr.bf16.mxu0 0
  %882 = vmatpush1.bf16.msra.mxu0 0
  %883 = vmatprep.subr.bf16.mxu0 0
  %884 = vmatpush1.bf16.msra.mxu0 0
  %885 = vmatprep.subr.bf16.mxu0 0
  %886 = vmatpush1.bf16.msra.mxu0 0
  %887 = vmatprep.subr.bf16.mxu0 0
  %888 = vmatpush1.bf16.msra.mxu0 0
  %889 = vmatprep.subr.bf16.mxu0 0
  %890 = vmatpush1.bf16.msra.mxu0 0
  %891 = vmatprep.mubr.bf16.mxu0 0
  %892 = vmatmul.mubr.bf16.gmra.mrb[0].mxu0 %v858
  %v893 = vpop.f32.mrb[0].mxu0
  %v894 = vadd.f32 %v129, %v893
  %v895 = vpop.f32.mrb[0].mxu0
  %v896 = vpop.f32.mrb[0].mxu0
  %v897 = vpop.f32.mrb[0].mxu0
  %898 = vdwg.mxu0
  %v899 = vsub.f32 %v894, %v656
  %v900 = vmul.f32 %v899, %v136
  %v901 = vadd.f32 %v656, %v900
  %s902 = scalar_lea.vmem %s11, 8
  %903 = vst.msk [vmem:[%s902] sm:$0xff] %vm657, %v901
  %s904 = scalar_lea.vmem %s0, 48
  %v905 = vld [vmem:[%s904] sm:$0xff]
  %v906 = vld [vmem:[%s904 + $0x8] sm:$0xff]
  %v907 = vld [vmem:[%s904 + $0x10] sm:$0xff]
  %908 = vmatprep.subr.bf16.mxu0 %v227
  %909 = vmatpush1.bf16.msra.mxu0 %v226
  %910 = vmatprep.subr.bf16.mxu0 %v230
  %911 = vmatpush1.bf16.msra.mxu0 %v229
  %912 = vmatprep.subr.bf16.mxu0 %v233
  %913 = vmatpush1.bf16.msra.mxu0 %v232
  %914 = vmatprep.subr.bf16.mxu0 %v236
  %915 = vmatpush1.bf16.msra.mxu0 %v235
  %916 = vmatprep.subr.bf16.mxu0 %v239
  %917 = vmatpush1.bf16.msra.mxu0 %v238
  %918 = vmatprep.subr.bf16.mxu0 %v242
  %919 = vmatpush1.bf16.msra.mxu0 %v241
  %920 = vmatprep.subr.bf16.mxu0 %v245
  %921 = vmatpush1.bf16.msra.mxu0 %v244
  %922 = vmatprep.subr.bf16.mxu0 %v248
  %923 = vmatpush1.bf16.msra.mxu0 %v247
  %924 = vmatprep.subr.bf16.mxu0 0
  %925 = vmatpush1.bf16.msra.mxu0 0
  %926 = vmatprep.subr.bf16.mxu0 0
  %927 = vmatpush1.bf16.msra.mxu0 0
  %928 = vmatprep.subr.bf16.mxu0 0
  %929 = vmatpush1.bf16.msra.mxu0 0
  %930 = vmatprep.subr.bf16.mxu0 0
  %931 = vmatpush1.bf16.msra.mxu0 0
  %932 = vmatprep.subr.bf16.mxu0 0
  %933 = vmatpush1.bf16.msra.mxu0 0
  %934 = vmatprep.subr.bf16.mxu0 0
  %935 = vmatpush1.bf16.msra.mxu0 0
  %936 = vmatprep.subr.bf16.mxu0 0
  %937 = vmatpush1.bf16.msra.mxu0 0
  %938 = vmatprep.subr.bf16.mxu0 0
  %939 = vmatpush1.bf16.msra.mxu0 0
  %940 = vmatprep.mubr.bf16.mxu0 0
  %941 = vmatmul.mubr.bf16.gmra.mrb[0].mxu0 %v858
  %v942 = vpop.f32.mrb[0].mxu0
  %v943 = vadd.f32 0.0, %v942
  %v944 = vpop.f32.mrb[0].mxu0
  %v945 = vadd.f32 0.0, %v944
  %v946 = vpop.f32.mrb[0].mxu0
  %v947 = vpop.f32.mrb[0].mxu0
  %948 = vdwg.mxu0
  %949 = vmatprep.subr.bf16.mxu0 0
  %950 = vmatpush1.bf16.msra.mxu0 %v228
  %951 = vmatprep.subr.bf16.mxu0 0
  %952 = vmatpush1.bf16.msra.mxu0 %v231
  %953 = vmatprep.subr.bf16.mxu0 0
  %954 = vmatpush1.bf16.msra.mxu0 %v234
  %955 = vmatprep.subr.bf16.mxu0 0
  %956 = vmatpush1.bf16.msra.mxu0 %v237
  %957 = vmatprep.subr.bf16.mxu0 0
  %958 = vmatpush1.bf16.msra.mxu0 %v240
  %959 = vmatprep.subr.bf16.mxu0 0
  %960 = vmatpush1.bf16.msra.mxu0 %v243
  %961 = vmatprep.subr.bf16.mxu0 0
  %962 = vmatpush1.bf16.msra.mxu0 %v246
  %963 = vmatprep.subr.bf16.mxu0 0
  %964 = vmatpush1.bf16.msra.mxu0 %v249
  %965 = vmatprep.subr.bf16.mxu0 0
  %966 = vmatpush1.bf16.msra.mxu0 0
  %967 = vmatprep.subr.bf16.mxu0 0
  %968 = vmatpush1.bf16.msra.mxu0 0
  %969 = vmatprep.subr.bf16.mxu0 0
  %970 = vmatpush1.bf16.msra.mxu0 0
  %971 = vmatprep.subr.bf16.mxu0 0
  %972 = vmatpush1.bf16.msra.mxu0 0
  %973 = vmatprep.subr.bf16.mxu0 0
  %974 = vmatpush1.bf16.msra.mxu0 0
  %975 = vmatprep.subr.bf16.mxu0 0
  %976 = vmatpush1.bf16.msra.mxu0 0
  %977 = vmatprep.subr.bf16.mxu0 0
  %978 = vmatpush1.bf16.msra.mxu0 0
  %979 = vmatprep.subr.bf16.mxu0 0
  %980 = vmatpush1.bf16.msra.mxu0 0
  %981 = vmatprep.mubr.bf16.mxu0 0
  %982 = vmatmul.mubr.bf16.gmra.mrb[0].mxu0 %v858
  %v983 = vpop.f32.mrb[0].mxu0
  %v984 = vadd.f32 0.0, %v983
  %v985 = vpop.f32.mrb[0].mxu0
  %v986 = vpop.f32.mrb[0].mxu0
  %v987 = vpop.f32.mrb[0].mxu0
  %988 = vdwg.mxu0
  %v989 = vadd.f32 %v905, %v943
  %v990 = vadd.f32 %v906, %v945
  %v991 = vadd.f32 %v907, %v984
  %v992 = vpack.c.bf16 %v857, %v857
  %993 = vmatprep.subr.bf16.mxu0 0
  %994 = vmatpush1.bf16.msra.mxu0 %v391
  %995 = vmatprep.subr.bf16.mxu0 0
  %996 = vmatpush1.bf16.msra.mxu0 %v392
  %997 = vmatprep.subr.bf16.mxu0 0
  %998 = vmatpush1.bf16.msra.mxu0 %v393
  %999 = vmatprep.subr.bf16.mxu0 0
  %1000 = vmatpush1.bf16.msra.mxu0 %v394
  %1001 = vmatprep.subr.bf16.mxu0 0
  %1002 = vmatpush1.bf16.msra.mxu0 %v395
  %1003 = vmatprep.subr.bf16.mxu0 0
  %1004 = vmatpush1.bf16.msra.mxu0 %v396
  %1005 = vmatprep.subr.bf16.mxu0 0
  %1006 = vmatpush1.bf16.msra.mxu0 %v397
  %1007 = vmatprep.subr.bf16.mxu0 0
  %1008 = vmatpush1.bf16.msra.mxu0 %v398
  %1009 = vmatprep.subr.bf16.mxu0 0
  %1010 = vmatpush1.bf16.msra.mxu0 0
  %1011 = vmatprep.subr.bf16.mxu0 0
  %1012 = vmatpush1.bf16.msra.mxu0 0
  %1013 = vmatprep.subr.bf16.mxu0 0
  %1014 = vmatpush1.bf16.msra.mxu0 0
  %1015 = vmatprep.subr.bf16.mxu0 0
  %1016 = vmatpush1.bf16.msra.mxu0 0
  %1017 = vmatprep.subr.bf16.mxu0 0
  %1018 = vmatpush1.bf16.msra.mxu0 0
  %1019 = vmatprep.subr.bf16.mxu0 0
  %1020 = vmatpush1.bf16.msra.mxu0 0
  %1021 = vmatprep.subr.bf16.mxu0 0
  %1022 = vmatpush1.bf16.msra.mxu0 0
  %1023 = vmatprep.subr.bf16.mxu0 0
  %1024 = vmatpush1.bf16.msra.mxu0 0
  %1025 = vmatprep.mubr.bf16.mxu0 0
  %1026 = vmatmul.mubr.bf16.gmra.mrb[0].mxu0 %v992
  %v1027 = vpop.f32.mrb[0].mxu0
  %v1028 = vadd.f32 0.0, %v1027
  %v1029 = vpop.f32.mrb[0].mxu0
  %v1030 = vpop.f32.mrb[0].mxu0
  %v1031 = vpop.f32.mrb[0].mxu0
  %1032 = vdwg.mxu0
  %v1033 = vpack.c.bf16 %v846, %v846
  %1034 = vmatprep.subr.bf16.mxu0 0
  %1035 = vmatpush1.bf16.msra.mxu0 %v480
  %1036 = vmatprep.subr.bf16.mxu0 0
  %1037 = vmatpush1.bf16.msra.mxu0 %v481
  %1038 = vmatprep.subr.bf16.mxu0 0
  %1039 = vmatpush1.bf16.msra.mxu0 %v482
  %1040 = vmatprep.subr.bf16.mxu0 0
  %1041 = vmatpush1.bf16.msra.mxu0 %v483
  %1042 = vmatprep.subr.bf16.mxu0 0
  %1043 = vmatpush1.bf16.msra.mxu0 %v484
  %1044 = vmatprep.subr.bf16.mxu0 0
  %1045 = vmatpush1.bf16.msra.mxu0 %v485
  %1046 = vmatprep.subr.bf16.mxu0 0
  %1047 = vmatpush1.bf16.msra.mxu0 %v486
  %1048 = vmatprep.subr.bf16.mxu0 0
  %1049 = vmatpush1.bf16.msra.mxu0 %v487
  %1050 = vmatprep.subr.bf16.mxu0 0
  %1051 = vmatpush1.bf16.msra.mxu0 0
  %1052 = vmatprep.subr.bf16.mxu0 0
  %1053 = vmatpush1.bf16.msra.mxu0 0
  %1054 = vmatprep.subr.bf16.mxu0 0
  %1055 = vmatpush1.bf16.msra.mxu0 0
  %1056 = vmatprep.subr.bf16.mxu0 0
  %1057 = vmatpush1.bf16.msra.mxu0 0
  %1058 = vmatprep.subr.bf16.mxu0 0
  %1059 = vmatpush1.bf16.msra.mxu0 0
  %1060 = vmatprep.subr.bf16.mxu0 0
  %1061 = vmatpush1.bf16.msra.mxu0 0
  %1062 = vmatprep.subr.bf16.mxu0 0
  %1063 = vmatpush1.bf16.msra.mxu0 0
  %1064 = vmatprep.subr.bf16.mxu0 0
  %1065 = vmatpush1.bf16.msra.mxu0 0
  %1066 = vmatprep.mubr.bf16.mxu0 0
  %1067 = vmatmul.mubr.bf16.gmra.mrb[0].mxu0 %v1033
  %v1068 = vpop.f32.mrb[0].mxu0
  %v1069 = vadd.f32 0.0, %v1068
  %v1070 = vpop.f32.mrb[0].mxu0
  %v1071 = vpop.f32.mrb[0].mxu0
  %v1072 = vpop.f32.mrb[0].mxu0
  %1073 = vdwg.mxu0
  %v1074 = vadd.f32 %v990, %v1028
  %v1075 = vsub.f32 0.0, %v1074
  %v1076 = vmul.f32 %v1075, 1.442695
  %v1077 = vpow.pop %v1076
  %v1078 = vadd.f32 %v1077, 1.0
  %v1079 = vrcp.pop %v1078
  %v1080 = vmul.f32 1.0, %v1079
  %v1081 = vadd.f32 %v991, %v1069
  %v1082 = vsub.f32 0.0, %v1081
  %v1083 = vmul.f32 %v1082, 1.442695
  %v1084 = vpow.pop %v1083
  %v1085 = vadd.f32 %v1084, 1.0
  %v1086 = vrcp.pop %v1085
  %v1087 = vmul.f32 1.0, %v1086
  %v1088 = vmul.f32 %v1087, %v846
  %v1089 = vsub.f32 1.0, %v1087
  %v1090 = vmul.f32 %v1089, %v855
  %v1091 = vadd.f32 %v1088, %v1090
  %v1092 = vmul.f32 %v1091, 1.8
  %v1093 = vadd.f32 %v1092, 0.1
  %v1094 = vsub.f32 %v989, %v857
  %v1095 = vmul.f32 %v1094, %v1080
  %v1096 = vadd.f32 %v857, %v1095
  %v1097 = vsub.f32 %v1096, %v1093
  %vm1098 = vcmp.gt.f32.partialorder %v1097, 0.0
  %v1099 = vsel %vm1098, 1, 0
  %v1100 = vcvt.s32.f32 %v1099
  %v1101 = vsub.f32 1.0, %v1100
  %v1102 = vmul.f32 %v1101, %v1096
  %v1103 = vpack.c.bf16 %v1100, %v1100
  %1104 = vmatprep.subr.bf16.mxu0 0
  %1105 = vmatpush1.bf16.msra.mxu0 %v598
  %1106 = vmatprep.subr.bf16.mxu0 0
  %1107 = vmatpush1.bf16.msra.mxu0 %v599
  %1108 = vmatprep.subr.bf16.mxu0 0
  %1109 = vmatpush1.bf16.msra.mxu0 %v600
  %1110 = vmatprep.subr.bf16.mxu0 0
  %1111 = vmatpush1.bf16.msra.mxu0 %v601
  %1112 = vmatprep.subr.bf16.mxu0 0
  %1113 = vmatpush1.bf16.msra.mxu0 %v602
  %1114 = vmatprep.subr.bf16.mxu0 0
  %1115 = vmatpush1.bf16.msra.mxu0 %v603
  %1116 = vmatprep.subr.bf16.mxu0 0
  %1117 = vmatpush1.bf16.msra.mxu0 %v604
  %1118 = vmatprep.subr.bf16.mxu0 0
  %1119 = vmatpush1.bf16.msra.mxu0 %v605
  %1120 = vmatprep.subr.bf16.mxu0 0
  %1121 = vmatpush1.bf16.msra.mxu0 0
  %1122 = vmatprep.subr.bf16.mxu0 0
  %1123 = vmatpush1.bf16.msra.mxu0 0
  %1124 = vmatprep.subr.bf16.mxu0 0
  %1125 = vmatpush1.bf16.msra.mxu0 0
  %1126 = vmatprep.subr.bf16.mxu0 0
  %1127 = vmatpush1.bf16.msra.mxu0 0
  %1128 = vmatprep.subr.bf16.mxu0 0
  %1129 = vmatpush1.bf16.msra.mxu0 0
  %1130 = vmatprep.subr.bf16.mxu0 0
  %1131 = vmatpush1.bf16.msra.mxu0 0
  %1132 = vmatprep.subr.bf16.mxu0 0
  %1133 = vmatpush1.bf16.msra.mxu0 0
  %1134 = vmatprep.subr.bf16.mxu0 0
  %1135 = vmatpush1.bf16.msra.mxu0 0
  %1136 = vmatprep.mubr.bf16.mxu0 0
  %1137 = vmatmul.mubr.bf16.gmra.mrb[0].mxu0 %v1103
  %v1138 = vpop.f32.mrb[0].mxu0
  %v1139 = vadd.f32 %v129, %v1138
  %v1140 = vpop.f32.mrb[0].mxu0
  %v1141 = vpop.f32.mrb[0].mxu0
  %v1142 = vpop.f32.mrb[0].mxu0
  %1143 = vdwg.mxu0
  %v1144 = vsub.f32 %v1139, %v901
  %v1145 = vmul.f32 %v1144, %v136
  %v1146 = vadd.f32 %v901, %v1145
  %s1147 = scalar_lea.vmem %s11, 16
  %1148 = vst.msk [vmem:[%s1147] sm:$0xff] %vm657, %v1146
  %s1149 = scalar_lea.vmem %s0, 72
  %v1150 = vld [vmem:[%s1149] sm:$0xff]
  %v1151 = vld [vmem:[%s1149 + $0x8] sm:$0xff]
  %v1152 = vld [vmem:[%s1149 + $0x10] sm:$0xff]
  %1153 = vmatprep.subr.bf16.mxu0 %v227
  %1154 = vmatpush1.bf16.msra.mxu0 %v226
  %1155 = vmatprep.subr.bf16.mxu0 %v230
  %1156 = vmatpush1.bf16.msra.mxu0 %v229
  %1157 = vmatprep.subr.bf16.mxu0 %v233
  %1158 = vmatpush1.bf16.msra.mxu0 %v232
  %1159 = vmatprep.subr.bf16.mxu0 %v236
  %1160 = vmatpush1.bf16.msra.mxu0 %v235
  %1161 = vmatprep.subr.bf16.mxu0 %v239
  %1162 = vmatpush1.bf16.msra.mxu0 %v238
  %1163 = vmatprep.subr.bf16.mxu0 %v242
  %1164 = vmatpush1.bf16.msra.mxu0 %v241
  %1165 = vmatprep.subr.bf16.mxu0 %v245
  %1166 = vmatpush1.bf16.msra.mxu0 %v244
  %1167 = vmatprep.subr.bf16.mxu0 %v248
  %1168 = vmatpush1.bf16.msra.mxu0 %v247
  %1169 = vmatprep.subr.bf16.mxu0 0
  %1170 = vmatpush1.bf16.msra.mxu0 0
  %1171 = vmatprep.subr.bf16.mxu0 0
  %1172 = vmatpush1.bf16.msra.mxu0 0
  %1173 = vmatprep.subr.bf16.mxu0 0
  %1174 = vmatpush1.bf16.msra.mxu0 0
  %1175 = vmatprep.subr.bf16.mxu0 0
  %1176 = vmatpush1.bf16.msra.mxu0 0
  %1177 = vmatprep.subr.bf16.mxu0 0
  %1178 = vmatpush1.bf16.msra.mxu0 0
  %1179 = vmatprep.subr.bf16.mxu0 0
  %1180 = vmatpush1.bf16.msra.mxu0 0
  %1181 = vmatprep.subr.bf16.mxu0 0
  %1182 = vmatpush1.bf16.msra.mxu0 0
  %1183 = vmatprep.subr.bf16.mxu0 0
  %1184 = vmatpush1.bf16.msra.mxu0 0
  %1185 = vmatprep.mubr.bf16.mxu0 0
  %1186 = vmatmul.mubr.bf16.gmra.mrb[0].mxu0 %v1103
  %v1187 = vpop.f32.mrb[0].mxu0
  %v1188 = vadd.f32 0.0, %v1187
  %v1189 = vpop.f32.mrb[0].mxu0
  %v1190 = vadd.f32 0.0, %v1189
  %v1191 = vpop.f32.mrb[0].mxu0
  %v1192 = vpop.f32.mrb[0].mxu0
  %1193 = vdwg.mxu0
  %1194 = vmatprep.subr.bf16.mxu0 0
  %1195 = vmatpush1.bf16.msra.mxu0 %v228
  %1196 = vmatprep.subr.bf16.mxu0 0
  %1197 = vmatpush1.bf16.msra.mxu0 %v231
  %1198 = vmatprep.subr.bf16.mxu0 0
  %1199 = vmatpush1.bf16.msra.mxu0 %v234
  %1200 = vmatprep.subr.bf16.mxu0 0
  %1201 = vmatpush1.bf16.msra.mxu0 %v237
  %1202 = vmatprep.subr.bf16.mxu0 0
  %1203 = vmatpush1.bf16.msra.mxu0 %v240
  %1204 = vmatprep.subr.bf16.mxu0 0
  %1205 = vmatpush1.bf16.msra.mxu0 %v243
  %1206 = vmatprep.subr.bf16.mxu0 0
  %1207 = vmatpush1.bf16.msra.mxu0 %v246
  %1208 = vmatprep.subr.bf16.mxu0 0
  %1209 = vmatpush1.bf16.msra.mxu0 %v249
  %1210 = vmatprep.subr.bf16.mxu0 0
  %1211 = vmatpush1.bf16.msra.mxu0 0
  %1212 = vmatprep.subr.bf16.mxu0 0
  %1213 = vmatpush1.bf16.msra.mxu0 0
  %1214 = vmatprep.subr.bf16.mxu0 0
  %1215 = vmatpush1.bf16.msra.mxu0 0
  %1216 = vmatprep.subr.bf16.mxu0 0
  %1217 = vmatpush1.bf16.msra.mxu0 0
  %1218 = vmatprep.subr.bf16.mxu0 0
  %1219 = vmatpush1.bf16.msra.mxu0 0
  %1220 = vmatprep.subr.bf16.mxu0 0
  %1221 = vmatpush1.bf16.msra.mxu0 0
  %1222 = vmatprep.subr.bf16.mxu0 0
  %1223 = vmatpush1.bf16.msra.mxu0 0
  %1224 = vmatprep.subr.bf16.mxu0 0
  %1225 = vmatpush1.bf16.msra.mxu0 0
  %1226 = vmatprep.mubr.bf16.mxu0 0
  %1227 = vmatmul.mubr.bf16.gmra.mrb[0].mxu0 %v1103
  %v1228 = vpop.f32.mrb[0].mxu0
  %v1229 = vadd.f32 0.0, %v1228
  %v1230 = vpop.f32.mrb[0].mxu0
  %v1231 = vpop.f32.mrb[0].mxu0
  %v1232 = vpop.f32.mrb[0].mxu0
  %1233 = vdwg.mxu0
  %v1234 = vadd.f32 %v1150, %v1188
  %v1235 = vadd.f32 %v1151, %v1190
  %v1236 = vadd.f32 %v1152, %v1229
  %v1237 = vpack.c.bf16 %v1102, %v1102
  %1238 = vmatprep.subr.bf16.mxu0 0
  %1239 = vmatpush1.bf16.msra.mxu0 %v391
  %1240 = vmatprep.subr.bf16.mxu0 0
  %1241 = vmatpush1.bf16.msra.mxu0 %v392
  %1242 = vmatprep.subr.bf16.mxu0 0
  %1243 = vmatpush1.bf16.msra.mxu0 %v393
  %1244 = vmatprep.subr.bf16.mxu0 0
  %1245 = vmatpush1.bf16.msra.mxu0 %v394
  %1246 = vmatprep.subr.bf16.mxu0 0
  %1247 = vmatpush1.bf16.msra.mxu0 %v395
  %1248 = vmatprep.subr.bf16.mxu0 0
  %1249 = vmatpush1.bf16.msra.mxu0 %v396
  %1250 = vmatprep.subr.bf16.mxu0 0
  %1251 = vmatpush1.bf16.msra.mxu0 %v397
  %1252 = vmatprep.subr.bf16.mxu0 0
  %1253 = vmatpush1.bf16.msra.mxu0 %v398
  %1254 = vmatprep.subr.bf16.mxu0 0
  %1255 = vmatpush1.bf16.msra.mxu0 0
  %1256 = vmatprep.subr.bf16.mxu0 0
  %1257 = vmatpush1.bf16.msra.mxu0 0
  %1258 = vmatprep.subr.bf16.mxu0 0
  %1259 = vmatpush1.bf16.msra.mxu0 0
  %1260 = vmatprep.subr.bf16.mxu0 0
  %1261 = vmatpush1.bf16.msra.mxu0 0
  %1262 = vmatprep.subr.bf16.mxu0 0
  %1263 = vmatpush1.bf16.msra.mxu0 0
  %1264 = vmatprep.subr.bf16.mxu0 0
  %1265 = vmatpush1.bf16.msra.mxu0 0
  %1266 = vmatprep.subr.bf16.mxu0 0
  %1267 = vmatpush1.bf16.msra.mxu0 0
  %1268 = vmatprep.subr.bf16.mxu0 0
  %1269 = vmatpush1.bf16.msra.mxu0 0
  %1270 = vmatprep.mubr.bf16.mxu0 0
  %1271 = vmatmul.mubr.bf16.gmra.mrb[0].mxu0 %v1237
  %v1272 = vpop.f32.mrb[0].mxu0
  %v1273 = vadd.f32 0.0, %v1272
  %v1274 = vpop.f32.mrb[0].mxu0
  %v1275 = vpop.f32.mrb[0].mxu0
  %v1276 = vpop.f32.mrb[0].mxu0
  %1277 = vdwg.mxu0
  %v1278 = vpack.c.bf16 %v1091, %v1091
  %1279 = vmatprep.subr.bf16.mxu0 0
  %1280 = vmatpush1.bf16.msra.mxu0 %v480
  %1281 = vmatprep.subr.bf16.mxu0 0
  %1282 = vmatpush1.bf16.msra.mxu0 %v481
  %1283 = vmatprep.subr.bf16.mxu0 0
  %1284 = vmatpush1.bf16.msra.mxu0 %v482
  %1285 = vmatprep.subr.bf16.mxu0 0
  %1286 = vmatpush1.bf16.msra.mxu0 %v483
  %1287 = vmatprep.subr.bf16.mxu0 0
  %1288 = vmatpush1.bf16.msra.mxu0 %v484
  %1289 = vmatprep.subr.bf16.mxu0 0
  %1290 = vmatpush1.bf16.msra.mxu0 %v485
  %1291 = vmatprep.subr.bf16.mxu0 0
  %1292 = vmatpush1.bf16.msra.mxu0 %v486
  %1293 = vmatprep.subr.bf16.mxu0 0
  %1294 = vmatpush1.bf16.msra.mxu0 %v487
  %1295 = vmatprep.subr.bf16.mxu0 0
  %1296 = vmatpush1.bf16.msra.mxu0 0
  %1297 = vmatprep.subr.bf16.mxu0 0
  %1298 = vmatpush1.bf16.msra.mxu0 0
  %1299 = vmatprep.subr.bf16.mxu0 0
  %1300 = vmatpush1.bf16.msra.mxu0 0
  %1301 = vmatprep.subr.bf16.mxu0 0
  %1302 = vmatpush1.bf16.msra.mxu0 0
  %1303 = vmatprep.subr.bf16.mxu0 0
  %1304 = vmatpush1.bf16.msra.mxu0 0
  %1305 = vmatprep.subr.bf16.mxu0 0
  %1306 = vmatpush1.bf16.msra.mxu0 0
  %1307 = vmatprep.subr.bf16.mxu0 0
  %1308 = vmatpush1.bf16.msra.mxu0 0
  %1309 = vmatprep.subr.bf16.mxu0 0
  %1310 = vmatpush1.bf16.msra.mxu0 0
  %1311 = vmatprep.mubr.bf16.mxu0 0
  %1312 = vmatmul.mubr.bf16.gmra.mrb[0].mxu0 %v1278
  %v1313 = vpop.f32.mrb[0].mxu0
  %v1314 = vadd.f32 0.0, %v1313
  %v1315 = vpop.f32.mrb[0].mxu0
  %v1316 = vpop.f32.mrb[0].mxu0
  %v1317 = vpop.f32.mrb[0].mxu0
  %1318 = vdwg.mxu0
  %v1319 = vadd.f32 %v1235, %v1273
  %v1320 = vsub.f32 0.0, %v1319
  %v1321 = vmul.f32 %v1320, 1.442695
  %v1322 = vpow.pop %v1321
  %v1323 = vadd.f32 %v1322, 1.0
  %v1324 = vrcp.pop %v1323
  %v1325 = vmul.f32 1.0, %v1324
  %v1326 = vadd.f32 %v1236, %v1314
  %v1327 = vsub.f32 0.0, %v1326
  %v1328 = vmul.f32 %v1327, 1.442695
  %v1329 = vpow.pop %v1328
  %v1330 = vadd.f32 %v1329, 1.0
  %v1331 = vrcp.pop %v1330
  %v1332 = vmul.f32 1.0, %v1331
  %v1333 = vmul.f32 %v1332, %v1091
  %v1334 = vsub.f32 1.0, %v1332
  %v1335 = vmul.f32 %v1334, %v1100
  %v1336 = vadd.f32 %v1333, %v1335
  %v1337 = vmul.f32 %v1336, 1.8
  %v1338 = vadd.f32 %v1337, 0.1
  %v1339 = vsub.f32 %v1234, %v1102
  %v1340 = vmul.f32 %v1339, %v1325
  %v1341 = vadd.f32 %v1102, %v1340
  %v1342 = vsub.f32 %v1341, %v1338
  %vm1343 = vcmp.gt.f32.partialorder %v1342, 0.0
  %v1344 = vsel %vm1343, 1, 0
  %v1345 = vcvt.s32.f32 %v1344
  %v1346 = vsub.f32 1.0, %v1345
  %v1347 = vmul.f32 %v1346, %v1341
  %v1348 = vpack.c.bf16 %v1345, %v1345
  %1349 = vmatprep.subr.bf16.mxu0 0
  %1350 = vmatpush1.bf16.msra.mxu0 %v598
  %1351 = vmatprep.subr.bf16.mxu0 0
  %1352 = vmatpush1.bf16.msra.mxu0 %v599
  %1353 = vmatprep.subr.bf16.mxu0 0
  %1354 = vmatpush1.bf16.msra.mxu0 %v600
  %1355 = vmatprep.subr.bf16.mxu0 0
  %1356 = vmatpush1.bf16.msra.mxu0 %v601
  %1357 = vmatprep.subr.bf16.mxu0 0
  %1358 = vmatpush1.bf16.msra.mxu0 %v602
  %1359 = vmatprep.subr.bf16.mxu0 0
  %1360 = vmatpush1.bf16.msra.mxu0 %v603
  %1361 = vmatprep.subr.bf16.mxu0 0
  %1362 = vmatpush1.bf16.msra.mxu0 %v604
  %1363 = vmatprep.subr.bf16.mxu0 0
  %1364 = vmatpush1.bf16.msra.mxu0 %v605
  %1365 = vmatprep.subr.bf16.mxu0 0
  %1366 = vmatpush1.bf16.msra.mxu0 0
  %1367 = vmatprep.subr.bf16.mxu0 0
  %1368 = vmatpush1.bf16.msra.mxu0 0
  %1369 = vmatprep.subr.bf16.mxu0 0
  %1370 = vmatpush1.bf16.msra.mxu0 0
  %1371 = vmatprep.subr.bf16.mxu0 0
  %1372 = vmatpush1.bf16.msra.mxu0 0
  %1373 = vmatprep.subr.bf16.mxu0 0
  %1374 = vmatpush1.bf16.msra.mxu0 0
  %1375 = vmatprep.subr.bf16.mxu0 0
  %1376 = vmatpush1.bf16.msra.mxu0 0
  %1377 = vmatprep.subr.bf16.mxu0 0
  %1378 = vmatpush1.bf16.msra.mxu0 0
  %1379 = vmatprep.subr.bf16.mxu0 0
  %1380 = vmatpush1.bf16.msra.mxu0 0
  %1381 = vmatprep.mubr.bf16.mxu0 0
  %1382 = vmatmul.mubr.bf16.gmra.mrb[0].mxu0 %v1348
  %v1383 = vpop.f32.mrb[0].mxu0
  %v1384 = vadd.f32 %v129, %v1383
  %v1385 = vpop.f32.mrb[0].mxu0
  %v1386 = vpop.f32.mrb[0].mxu0
  %v1387 = vpop.f32.mrb[0].mxu0
  %1388 = vdwg.mxu0
  %v1389 = vsub.f32 %v1384, %v1146
  %v1390 = vmul.f32 %v1389, %v136
  %v1391 = vadd.f32 %v1146, %v1390
  %s1392 = scalar_lea.vmem %s11, 24
  %1393 = vst.msk [vmem:[%s1392] sm:$0xff] %vm657, %v1391
  %s1394 = scalar_lea.vmem %s0, 96
  %v1395 = vld [vmem:[%s1394] sm:$0xff]
  %v1396 = vld [vmem:[%s1394 + $0x8] sm:$0xff]
  %v1397 = vld [vmem:[%s1394 + $0x10] sm:$0xff]
  %1398 = vmatprep.subr.bf16.mxu0 %v227
  %1399 = vmatpush1.bf16.msra.mxu0 %v226
  %1400 = vmatprep.subr.bf16.mxu0 %v230
  %1401 = vmatpush1.bf16.msra.mxu0 %v229
  %1402 = vmatprep.subr.bf16.mxu0 %v233
  %1403 = vmatpush1.bf16.msra.mxu0 %v232
  %1404 = vmatprep.subr.bf16.mxu0 %v236
  %1405 = vmatpush1.bf16.msra.mxu0 %v235
  %1406 = vmatprep.subr.bf16.mxu0 %v239
  %1407 = vmatpush1.bf16.msra.mxu0 %v238
  %1408 = vmatprep.subr.bf16.mxu0 %v242
  %1409 = vmatpush1.bf16.msra.mxu0 %v241
  %1410 = vmatprep.subr.bf16.mxu0 %v245
  %1411 = vmatpush1.bf16.msra.mxu0 %v244
  %1412 = vmatprep.subr.bf16.mxu0 %v248
  %1413 = vmatpush1.bf16.msra.mxu0 %v247
  %1414 = vmatprep.subr.bf16.mxu0 0
  %1415 = vmatpush1.bf16.msra.mxu0 0
  %1416 = vmatprep.subr.bf16.mxu0 0
  %1417 = vmatpush1.bf16.msra.mxu0 0
  %1418 = vmatprep.subr.bf16.mxu0 0
  %1419 = vmatpush1.bf16.msra.mxu0 0
  %1420 = vmatprep.subr.bf16.mxu0 0
  %1421 = vmatpush1.bf16.msra.mxu0 0
  %1422 = vmatprep.subr.bf16.mxu0 0
  %1423 = vmatpush1.bf16.msra.mxu0 0
  %1424 = vmatprep.subr.bf16.mxu0 0
  %1425 = vmatpush1.bf16.msra.mxu0 0
  %1426 = vmatprep.subr.bf16.mxu0 0
  %1427 = vmatpush1.bf16.msra.mxu0 0
  %1428 = vmatprep.subr.bf16.mxu0 0
  %1429 = vmatpush1.bf16.msra.mxu0 0
  %1430 = vmatprep.mubr.bf16.mxu0 0
  %1431 = vmatmul.mubr.bf16.gmra.mrb[0].mxu0 %v1348
  %v1432 = vpop.f32.mrb[0].mxu0
  %v1433 = vadd.f32 0.0, %v1432
  %v1434 = vpop.f32.mrb[0].mxu0
  %v1435 = vadd.f32 0.0, %v1434
  %v1436 = vpop.f32.mrb[0].mxu0
  %v1437 = vpop.f32.mrb[0].mxu0
  %1438 = vdwg.mxu0
  %1439 = vmatprep.subr.bf16.mxu0 0
  %1440 = vmatpush1.bf16.msra.mxu0 %v228
  %1441 = vmatprep.subr.bf16.mxu0 0
  %1442 = vmatpush1.bf16.msra.mxu0 %v231
  %1443 = vmatprep.subr.bf16.mxu0 0
  %1444 = vmatpush1.bf16.msra.mxu0 %v234
  %1445 = vmatprep.subr.bf16.mxu0 0
  %1446 = vmatpush1.bf16.msra.mxu0 %v237
  %1447 = vmatprep.subr.bf16.mxu0 0
  %1448 = vmatpush1.bf16.msra.mxu0 %v240
  %1449 = vmatprep.subr.bf16.mxu0 0
  %1450 = vmatpush1.bf16.msra.mxu0 %v243
  %1451 = vmatprep.subr.bf16.mxu0 0
  %1452 = vmatpush1.bf16.msra.mxu0 %v246
  %1453 = vmatprep.subr.bf16.mxu0 0
  %1454 = vmatpush1.bf16.msra.mxu0 %v249
  %1455 = vmatprep.subr.bf16.mxu0 0
  %1456 = vmatpush1.bf16.msra.mxu0 0
  %1457 = vmatprep.subr.bf16.mxu0 0
  %1458 = vmatpush1.bf16.msra.mxu0 0
  %1459 = vmatprep.subr.bf16.mxu0 0
  %1460 = vmatpush1.bf16.msra.mxu0 0
  %1461 = vmatprep.subr.bf16.mxu0 0
  %1462 = vmatpush1.bf16.msra.mxu0 0
  %1463 = vmatprep.subr.bf16.mxu0 0
  %1464 = vmatpush1.bf16.msra.mxu0 0
  %1465 = vmatprep.subr.bf16.mxu0 0
  %1466 = vmatpush1.bf16.msra.mxu0 0
  %1467 = vmatprep.subr.bf16.mxu0 0
  %1468 = vmatpush1.bf16.msra.mxu0 0
  %1469 = vmatprep.subr.bf16.mxu0 0
  %1470 = vmatpush1.bf16.msra.mxu0 0
  %1471 = vmatprep.mubr.bf16.mxu0 0
  %1472 = vmatmul.mubr.bf16.gmra.mrb[0].mxu0 %v1348
  %v1473 = vpop.f32.mrb[0].mxu0
  %v1474 = vadd.f32 0.0, %v1473
  %v1475 = vpop.f32.mrb[0].mxu0
  %v1476 = vpop.f32.mrb[0].mxu0
  %v1477 = vpop.f32.mrb[0].mxu0
  %1478 = vdwg.mxu0
  %v1479 = vadd.f32 %v1395, %v1433
  %v1480 = vadd.f32 %v1396, %v1435
  %v1481 = vadd.f32 %v1397, %v1474
  %v1482 = vpack.c.bf16 %v1347, %v1347
  %1483 = vmatprep.subr.bf16.mxu0 0
  %1484 = vmatpush1.bf16.msra.mxu0 %v391
  %1485 = vmatprep.subr.bf16.mxu0 0
  %1486 = vmatpush1.bf16.msra.mxu0 %v392
  %1487 = vmatprep.subr.bf16.mxu0 0
  %1488 = vmatpush1.bf16.msra.mxu0 %v393
  %1489 = vmatprep.subr.bf16.mxu0 0
  %1490 = vmatpush1.bf16.msra.mxu0 %v394
  %1491 = vmatprep.subr.bf16.mxu0 0
  %1492 = vmatpush1.bf16.msra.mxu0 %v395
  %1493 = vmatprep.subr.bf16.mxu0 0
  %1494 = vmatpush1.bf16.msra.mxu0 %v396
  %1495 = vmatprep.subr.bf16.mxu0 0
  %1496 = vmatpush1.bf16.msra.mxu0 %v397
  %1497 = vmatprep.subr.bf16.mxu0 0
  %1498 = vmatpush1.bf16.msra.mxu0 %v398
  %1499 = vmatprep.subr.bf16.mxu0 0
  %1500 = vmatpush1.bf16.msra.mxu0 0
  %1501 = vmatprep.subr.bf16.mxu0 0
  %1502 = vmatpush1.bf16.msra.mxu0 0
  %1503 = vmatprep.subr.bf16.mxu0 0
  %1504 = vmatpush1.bf16.msra.mxu0 0
  %1505 = vmatprep.subr.bf16.mxu0 0
  %1506 = vmatpush1.bf16.msra.mxu0 0
  %1507 = vmatprep.subr.bf16.mxu0 0
  %1508 = vmatpush1.bf16.msra.mxu0 0
  %1509 = vmatprep.subr.bf16.mxu0 0
  %1510 = vmatpush1.bf16.msra.mxu0 0
  %1511 = vmatprep.subr.bf16.mxu0 0
  %1512 = vmatpush1.bf16.msra.mxu0 0
  %1513 = vmatprep.subr.bf16.mxu0 0
  %1514 = vmatpush1.bf16.msra.mxu0 0
  %1515 = vmatprep.mubr.bf16.mxu0 0
  %1516 = vmatmul.mubr.bf16.gmra.mrb[0].mxu0 %v1482
  %v1517 = vpop.f32.mrb[0].mxu0
  %v1518 = vadd.f32 0.0, %v1517
  %v1519 = vpop.f32.mrb[0].mxu0
  %v1520 = vpop.f32.mrb[0].mxu0
  %v1521 = vpop.f32.mrb[0].mxu0
  %1522 = vdwg.mxu0
  %v1523 = vpack.c.bf16 %v1336, %v1336
  %1524 = vmatprep.subr.bf16.mxu0 0
  %1525 = vmatpush1.bf16.msra.mxu0 %v480
  %1526 = vmatprep.subr.bf16.mxu0 0
  %1527 = vmatpush1.bf16.msra.mxu0 %v481
  %1528 = vmatprep.subr.bf16.mxu0 0
  %1529 = vmatpush1.bf16.msra.mxu0 %v482
  %1530 = vmatprep.subr.bf16.mxu0 0
  %1531 = vmatpush1.bf16.msra.mxu0 %v483
  %1532 = vmatprep.subr.bf16.mxu0 0
  %1533 = vmatpush1.bf16.msra.mxu0 %v484
  %1534 = vmatprep.subr.bf16.mxu0 0
  %1535 = vmatpush1.bf16.msra.mxu0 %v485
  %1536 = vmatprep.subr.bf16.mxu0 0
  %1537 = vmatpush1.bf16.msra.mxu0 %v486
  %1538 = vmatprep.subr.bf16.mxu0 0
  %1539 = vmatpush1.bf16.msra.mxu0 %v487
  %1540 = vmatprep.subr.bf16.mxu0 0
  %1541 = vmatpush1.bf16.msra.mxu0 0
  %1542 = vmatprep.subr.bf16.mxu0 0
  %1543 = vmatpush1.bf16.msra.mxu0 0
  %1544 = vmatprep.subr.bf16.mxu0 0
  %1545 = vmatpush1.bf16.msra.mxu0 0
  %1546 = vmatprep.subr.bf16.mxu0 0
  %1547 = vmatpush1.bf16.msra.mxu0 0
  %1548 = vmatprep.subr.bf16.mxu0 0
  %1549 = vmatpush1.bf16.msra.mxu0 0
  %1550 = vmatprep.subr.bf16.mxu0 0
  %1551 = vmatpush1.bf16.msra.mxu0 0
  %1552 = vmatprep.subr.bf16.mxu0 0
  %1553 = vmatpush1.bf16.msra.mxu0 0
  %1554 = vmatprep.subr.bf16.mxu0 0
  %1555 = vmatpush1.bf16.msra.mxu0 0
  %1556 = vmatprep.mubr.bf16.mxu0 0
  %1557 = vmatmul.mubr.bf16.gmra.mrb[0].mxu0 %v1523
  %v1558 = vpop.f32.mrb[0].mxu0
  %v1559 = vadd.f32 0.0, %v1558
  %v1560 = vpop.f32.mrb[0].mxu0
  %v1561 = vpop.f32.mrb[0].mxu0
  %v1562 = vpop.f32.mrb[0].mxu0
  %1563 = vdwg.mxu0
  %v1564 = vadd.f32 %v1480, %v1518
  %v1565 = vsub.f32 0.0, %v1564
  %v1566 = vmul.f32 %v1565, 1.442695
  %v1567 = vpow.pop %v1566
  %v1568 = vadd.f32 %v1567, 1.0
  %v1569 = vrcp.pop %v1568
  %v1570 = vmul.f32 1.0, %v1569
  %v1571 = vadd.f32 %v1481, %v1559
  %v1572 = vsub.f32 0.0, %v1571
  %v1573 = vmul.f32 %v1572, 1.442695
  %v1574 = vpow.pop %v1573
  %v1575 = vadd.f32 %v1574, 1.0
  %v1576 = vrcp.pop %v1575
  %v1577 = vmul.f32 1.0, %v1576
  %v1578 = vmul.f32 %v1577, %v1336
  %v1579 = vsub.f32 1.0, %v1577
  %v1580 = vmul.f32 %v1579, %v1345
  %v1581 = vadd.f32 %v1578, %v1580
  %v1582 = vmul.f32 %v1581, 1.8
  %v1583 = vadd.f32 %v1582, 0.1
  %v1584 = vsub.f32 %v1479, %v1347
  %v1585 = vmul.f32 %v1584, %v1570
  %v1586 = vadd.f32 %v1347, %v1585
  %v1587 = vsub.f32 %v1586, %v1583
  %vm1588 = vcmp.gt.f32.partialorder %v1587, 0.0
  %v1589 = vsel %vm1588, 1, 0
  %v1590 = vcvt.s32.f32 %v1589
  %v1591 = vsub.f32 1.0, %v1590
  %v1592 = vmul.f32 %v1591, %v1586
  %v1593 = vpack.c.bf16 %v1590, %v1590
  %1594 = vmatprep.subr.bf16.mxu0 0
  %1595 = vmatpush1.bf16.msra.mxu0 %v598
  %1596 = vmatprep.subr.bf16.mxu0 0
  %1597 = vmatpush1.bf16.msra.mxu0 %v599
  %1598 = vmatprep.subr.bf16.mxu0 0
  %1599 = vmatpush1.bf16.msra.mxu0 %v600
  %1600 = vmatprep.subr.bf16.mxu0 0
  %1601 = vmatpush1.bf16.msra.mxu0 %v601
  %1602 = vmatprep.subr.bf16.mxu0 0
  %1603 = vmatpush1.bf16.msra.mxu0 %v602
  %1604 = vmatprep.subr.bf16.mxu0 0
  %1605 = vmatpush1.bf16.msra.mxu0 %v603
  %1606 = vmatprep.subr.bf16.mxu0 0
  %1607 = vmatpush1.bf16.msra.mxu0 %v604
  %1608 = vmatprep.subr.bf16.mxu0 0
  %1609 = vmatpush1.bf16.msra.mxu0 %v605
  %1610 = vmatprep.subr.bf16.mxu0 0
  %1611 = vmatpush1.bf16.msra.mxu0 0
  %1612 = vmatprep.subr.bf16.mxu0 0
  %1613 = vmatpush1.bf16.msra.mxu0 0
  %1614 = vmatprep.subr.bf16.mxu0 0
  %1615 = vmatpush1.bf16.msra.mxu0 0
  %1616 = vmatprep.subr.bf16.mxu0 0
  %1617 = vmatpush1.bf16.msra.mxu0 0
  %1618 = vmatprep.subr.bf16.mxu0 0
  %1619 = vmatpush1.bf16.msra.mxu0 0
  %1620 = vmatprep.subr.bf16.mxu0 0
  %1621 = vmatpush1.bf16.msra.mxu0 0
  %1622 = vmatprep.subr.bf16.mxu0 0
  %1623 = vmatpush1.bf16.msra.mxu0 0
  %1624 = vmatprep.subr.bf16.mxu0 0
  %1625 = vmatpush1.bf16.msra.mxu0 0
  %1626 = vmatprep.mubr.bf16.mxu0 0
  %1627 = vmatmul.mubr.bf16.gmra.mrb[0].mxu0 %v1593
  %v1628 = vpop.f32.mrb[0].mxu0
  %v1629 = vadd.f32 %v129, %v1628
  %v1630 = vpop.f32.mrb[0].mxu0
  %v1631 = vpop.f32.mrb[0].mxu0
  %v1632 = vpop.f32.mrb[0].mxu0
  %1633 = vdwg.mxu0
  %v1634 = vsub.f32 %v1629, %v1391
  %v1635 = vmul.f32 %v1634, %v136
  %v1636 = vadd.f32 %v1391, %v1635
  %s1637 = scalar_lea.vmem %s11, 32
  %1638 = vst.msk [vmem:[%s1637] sm:$0xff] %vm657, %v1636
  %s1639 = scalar_lea.vmem %s0, 120
  %v1640 = vld [vmem:[%s1639] sm:$0xff]
  %v1641 = vld [vmem:[%s1639 + $0x8] sm:$0xff]
  %v1642 = vld [vmem:[%s1639 + $0x10] sm:$0xff]
  %1643 = vmatprep.subr.bf16.mxu0 %v227
  %1644 = vmatpush1.bf16.msra.mxu0 %v226
  %1645 = vmatprep.subr.bf16.mxu0 %v230
  %1646 = vmatpush1.bf16.msra.mxu0 %v229
  %1647 = vmatprep.subr.bf16.mxu0 %v233
  %1648 = vmatpush1.bf16.msra.mxu0 %v232
  %1649 = vmatprep.subr.bf16.mxu0 %v236
  %1650 = vmatpush1.bf16.msra.mxu0 %v235
  %1651 = vmatprep.subr.bf16.mxu0 %v239
  %1652 = vmatpush1.bf16.msra.mxu0 %v238
  %1653 = vmatprep.subr.bf16.mxu0 %v242
  %1654 = vmatpush1.bf16.msra.mxu0 %v241
  %1655 = vmatprep.subr.bf16.mxu0 %v245
  %1656 = vmatpush1.bf16.msra.mxu0 %v244
  %1657 = vmatprep.subr.bf16.mxu0 %v248
  %1658 = vmatpush1.bf16.msra.mxu0 %v247
  %1659 = vmatprep.subr.bf16.mxu0 0
  %1660 = vmatpush1.bf16.msra.mxu0 0
  %1661 = vmatprep.subr.bf16.mxu0 0
  %1662 = vmatpush1.bf16.msra.mxu0 0
  %1663 = vmatprep.subr.bf16.mxu0 0
  %1664 = vmatpush1.bf16.msra.mxu0 0
  %1665 = vmatprep.subr.bf16.mxu0 0
  %1666 = vmatpush1.bf16.msra.mxu0 0
  %1667 = vmatprep.subr.bf16.mxu0 0
  %1668 = vmatpush1.bf16.msra.mxu0 0
  %1669 = vmatprep.subr.bf16.mxu0 0
  %1670 = vmatpush1.bf16.msra.mxu0 0
  %1671 = vmatprep.subr.bf16.mxu0 0
  %1672 = vmatpush1.bf16.msra.mxu0 0
  %1673 = vmatprep.subr.bf16.mxu0 0
  %1674 = vmatpush1.bf16.msra.mxu0 0
  %1675 = vmatprep.mubr.bf16.mxu0 0
  %1676 = vmatmul.mubr.bf16.gmra.mrb[0].mxu0 %v1593
  %v1677 = vpop.f32.mrb[0].mxu0
  %v1678 = vadd.f32 0.0, %v1677
  %v1679 = vpop.f32.mrb[0].mxu0
  %v1680 = vadd.f32 0.0, %v1679
  %v1681 = vpop.f32.mrb[0].mxu0
  %v1682 = vpop.f32.mrb[0].mxu0
  %1683 = vdwg.mxu0
  %1684 = vmatprep.subr.bf16.mxu0 0
  %1685 = vmatpush1.bf16.msra.mxu0 %v228
  %1686 = vmatprep.subr.bf16.mxu0 0
  %1687 = vmatpush1.bf16.msra.mxu0 %v231
  %1688 = vmatprep.subr.bf16.mxu0 0
  %1689 = vmatpush1.bf16.msra.mxu0 %v234
  %1690 = vmatprep.subr.bf16.mxu0 0
  %1691 = vmatpush1.bf16.msra.mxu0 %v237
  %1692 = vmatprep.subr.bf16.mxu0 0
  %1693 = vmatpush1.bf16.msra.mxu0 %v240
  %1694 = vmatprep.subr.bf16.mxu0 0
  %1695 = vmatpush1.bf16.msra.mxu0 %v243
  %1696 = vmatprep.subr.bf16.mxu0 0
  %1697 = vmatpush1.bf16.msra.mxu0 %v246
  %1698 = vmatprep.subr.bf16.mxu0 0
  %1699 = vmatpush1.bf16.msra.mxu0 %v249
  %1700 = vmatprep.subr.bf16.mxu0 0
  %1701 = vmatpush1.bf16.msra.mxu0 0
  %1702 = vmatprep.subr.bf16.mxu0 0
  %1703 = vmatpush1.bf16.msra.mxu0 0
  %1704 = vmatprep.subr.bf16.mxu0 0
  %1705 = vmatpush1.bf16.msra.mxu0 0
  %1706 = vmatprep.subr.bf16.mxu0 0
  %1707 = vmatpush1.bf16.msra.mxu0 0
  %1708 = vmatprep.subr.bf16.mxu0 0
  %1709 = vmatpush1.bf16.msra.mxu0 0
  %1710 = vmatprep.subr.bf16.mxu0 0
  %1711 = vmatpush1.bf16.msra.mxu0 0
  %1712 = vmatprep.subr.bf16.mxu0 0
  %1713 = vmatpush1.bf16.msra.mxu0 0
  %1714 = vmatprep.subr.bf16.mxu0 0
  %1715 = vmatpush1.bf16.msra.mxu0 0
  %1716 = vmatprep.mubr.bf16.mxu0 0
  %1717 = vmatmul.mubr.bf16.gmra.mrb[0].mxu0 %v1593
  %v1718 = vpop.f32.mrb[0].mxu0
  %v1719 = vadd.f32 0.0, %v1718
  %v1720 = vpop.f32.mrb[0].mxu0
  %v1721 = vpop.f32.mrb[0].mxu0
  %v1722 = vpop.f32.mrb[0].mxu0
  %1723 = vdwg.mxu0
  %v1724 = vadd.f32 %v1640, %v1678
  %v1725 = vadd.f32 %v1641, %v1680
  %v1726 = vadd.f32 %v1642, %v1719
  %v1727 = vpack.c.bf16 %v1592, %v1592
  %1728 = vmatprep.subr.bf16.mxu0 0
  %1729 = vmatpush1.bf16.msra.mxu0 %v391
  %1730 = vmatprep.subr.bf16.mxu0 0
  %1731 = vmatpush1.bf16.msra.mxu0 %v392
  %1732 = vmatprep.subr.bf16.mxu0 0
  %1733 = vmatpush1.bf16.msra.mxu0 %v393
  %1734 = vmatprep.subr.bf16.mxu0 0
  %1735 = vmatpush1.bf16.msra.mxu0 %v394
  %1736 = vmatprep.subr.bf16.mxu0 0
  %1737 = vmatpush1.bf16.msra.mxu0 %v395
  %1738 = vmatprep.subr.bf16.mxu0 0
  %1739 = vmatpush1.bf16.msra.mxu0 %v396
  %1740 = vmatprep.subr.bf16.mxu0 0
  %1741 = vmatpush1.bf16.msra.mxu0 %v397
  %1742 = vmatprep.subr.bf16.mxu0 0
  %1743 = vmatpush1.bf16.msra.mxu0 %v398
  %1744 = vmatprep.subr.bf16.mxu0 0
  %1745 = vmatpush1.bf16.msra.mxu0 0
  %1746 = vmatprep.subr.bf16.mxu0 0
  %1747 = vmatpush1.bf16.msra.mxu0 0
  %1748 = vmatprep.subr.bf16.mxu0 0
  %1749 = vmatpush1.bf16.msra.mxu0 0
  %1750 = vmatprep.subr.bf16.mxu0 0
  %1751 = vmatpush1.bf16.msra.mxu0 0
  %1752 = vmatprep.subr.bf16.mxu0 0
  %1753 = vmatpush1.bf16.msra.mxu0 0
  %1754 = vmatprep.subr.bf16.mxu0 0
  %1755 = vmatpush1.bf16.msra.mxu0 0
  %1756 = vmatprep.subr.bf16.mxu0 0
  %1757 = vmatpush1.bf16.msra.mxu0 0
  %1758 = vmatprep.subr.bf16.mxu0 0
  %1759 = vmatpush1.bf16.msra.mxu0 0
  %1760 = vmatprep.mubr.bf16.mxu0 0
  %1761 = vmatmul.mubr.bf16.gmra.mrb[0].mxu0 %v1727
  %v1762 = vpop.f32.mrb[0].mxu0
  %v1763 = vadd.f32 0.0, %v1762
  %v1764 = vpop.f32.mrb[0].mxu0
  %v1765 = vpop.f32.mrb[0].mxu0
  %v1766 = vpop.f32.mrb[0].mxu0
  %1767 = vdwg.mxu0
  %v1768 = vpack.c.bf16 %v1581, %v1581
  %1769 = vmatprep.subr.bf16.mxu0 0
  %1770 = vmatpush1.bf16.msra.mxu0 %v480
  %1771 = vmatprep.subr.bf16.mxu0 0
  %1772 = vmatpush1.bf16.msra.mxu0 %v481
  %1773 = vmatprep.subr.bf16.mxu0 0
  %1774 = vmatpush1.bf16.msra.mxu0 %v482
  %1775 = vmatprep.subr.bf16.mxu0 0
  %1776 = vmatpush1.bf16.msra.mxu0 %v483
  %1777 = vmatprep.subr.bf16.mxu0 0
  %1778 = vmatpush1.bf16.msra.mxu0 %v484
  %1779 = vmatprep.subr.bf16.mxu0 0
  %1780 = vmatpush1.bf16.msra.mxu0 %v485
  %1781 = vmatprep.subr.bf16.mxu0 0
  %1782 = vmatpush1.bf16.msra.mxu0 %v486
  %1783 = vmatprep.subr.bf16.mxu0 0
  %1784 = vmatpush1.bf16.msra.mxu0 %v487
  %1785 = vmatprep.subr.bf16.mxu0 0
  %1786 = vmatpush1.bf16.msra.mxu0 0
  %1787 = vmatprep.subr.bf16.mxu0 0
  %1788 = vmatpush1.bf16.msra.mxu0 0
  %1789 = vmatprep.subr.bf16.mxu0 0
  %1790 = vmatpush1.bf16.msra.mxu0 0
  %1791 = vmatprep.subr.bf16.mxu0 0
  %1792 = vmatpush1.bf16.msra.mxu0 0
  %1793 = vmatprep.subr.bf16.mxu0 0
  %1794 = vmatpush1.bf16.msra.mxu0 0
  %1795 = vmatprep.subr.bf16.mxu0 0
  %1796 = vmatpush1.bf16.msra.mxu0 0
  %1797 = vmatprep.subr.bf16.mxu0 0
  %1798 = vmatpush1.bf16.msra.mxu0 0
  %1799 = vmatprep.subr.bf16.mxu0 0
  %1800 = vmatpush1.bf16.msra.mxu0 0
  %1801 = vmatprep.mubr.bf16.mxu0 0
  %1802 = vmatmul.mubr.bf16.gmra.mrb[0].mxu0 %v1768
  %v1803 = vpop.f32.mrb[0].mxu0
  %v1804 = vadd.f32 0.0, %v1803
  %v1805 = vpop.f32.mrb[0].mxu0
  %v1806 = vpop.f32.mrb[0].mxu0
  %v1807 = vpop.f32.mrb[0].mxu0
  %1808 = vdwg.mxu0
  %v1809 = vadd.f32 %v1725, %v1763
  %v1810 = vsub.f32 0.0, %v1809
  %v1811 = vmul.f32 %v1810, 1.442695
  %v1812 = vpow.pop %v1811
  %v1813 = vadd.f32 %v1812, 1.0
  %v1814 = vrcp.pop %v1813
  %v1815 = vmul.f32 1.0, %v1814
  %v1816 = vadd.f32 %v1726, %v1804
  %v1817 = vsub.f32 0.0, %v1816
  %v1818 = vmul.f32 %v1817, 1.442695
  %v1819 = vpow.pop %v1818
  %v1820 = vadd.f32 %v1819, 1.0
  %v1821 = vrcp.pop %v1820
  %v1822 = vmul.f32 1.0, %v1821
  %v1823 = vmul.f32 %v1822, %v1581
  %v1824 = vsub.f32 1.0, %v1822
  %v1825 = vmul.f32 %v1824, %v1590
  %v1826 = vadd.f32 %v1823, %v1825
  %v1827 = vmul.f32 %v1826, 1.8
  %v1828 = vadd.f32 %v1827, 0.1
  %v1829 = vsub.f32 %v1724, %v1592
  %v1830 = vmul.f32 %v1829, %v1815
  %v1831 = vadd.f32 %v1592, %v1830
  %v1832 = vsub.f32 %v1831, %v1828
  %vm1833 = vcmp.gt.f32.partialorder %v1832, 0.0
  %v1834 = vsel %vm1833, 1, 0
  %v1835 = vcvt.s32.f32 %v1834
  %v1836 = vsub.f32 1.0, %v1835
  %v1837 = vmul.f32 %v1836, %v1831
  %v1838 = vpack.c.bf16 %v1835, %v1835
  %1839 = vmatprep.subr.bf16.mxu0 0
  %1840 = vmatpush1.bf16.msra.mxu0 %v598
  %1841 = vmatprep.subr.bf16.mxu0 0
  %1842 = vmatpush1.bf16.msra.mxu0 %v599
  %1843 = vmatprep.subr.bf16.mxu0 0
  %1844 = vmatpush1.bf16.msra.mxu0 %v600
  %1845 = vmatprep.subr.bf16.mxu0 0
  %1846 = vmatpush1.bf16.msra.mxu0 %v601
  %1847 = vmatprep.subr.bf16.mxu0 0
  %1848 = vmatpush1.bf16.msra.mxu0 %v602
  %1849 = vmatprep.subr.bf16.mxu0 0
  %1850 = vmatpush1.bf16.msra.mxu0 %v603
  %1851 = vmatprep.subr.bf16.mxu0 0
  %1852 = vmatpush1.bf16.msra.mxu0 %v604
  %1853 = vmatprep.subr.bf16.mxu0 0
  %1854 = vmatpush1.bf16.msra.mxu0 %v605
  %1855 = vmatprep.subr.bf16.mxu0 0
  %1856 = vmatpush1.bf16.msra.mxu0 0
  %1857 = vmatprep.subr.bf16.mxu0 0
  %1858 = vmatpush1.bf16.msra.mxu0 0
  %1859 = vmatprep.subr.bf16.mxu0 0
  %1860 = vmatpush1.bf16.msra.mxu0 0
  %1861 = vmatprep.subr.bf16.mxu0 0
  %1862 = vmatpush1.bf16.msra.mxu0 0
  %1863 = vmatprep.subr.bf16.mxu0 0
  %1864 = vmatpush1.bf16.msra.mxu0 0
  %1865 = vmatprep.subr.bf16.mxu0 0
  %1866 = vmatpush1.bf16.msra.mxu0 0
  %1867 = vmatprep.subr.bf16.mxu0 0
  %1868 = vmatpush1.bf16.msra.mxu0 0
  %1869 = vmatprep.subr.bf16.mxu0 0
  %1870 = vmatpush1.bf16.msra.mxu0 0
  %1871 = vmatprep.mubr.bf16.mxu0 0
  %1872 = vmatmul.mubr.bf16.gmra.mrb[0].mxu0 %v1838
  %v1873 = vpop.f32.mrb[0].mxu0
  %v1874 = vadd.f32 %v129, %v1873
  %v1875 = vpop.f32.mrb[0].mxu0
  %v1876 = vpop.f32.mrb[0].mxu0
  %v1877 = vpop.f32.mrb[0].mxu0
  %1878 = vdwg.mxu0
  %v1879 = vsub.f32 %v1874, %v1636
  %v1880 = vmul.f32 %v1879, %v136
  %v1881 = vadd.f32 %v1636, %v1880
  %s1882 = scalar_lea.vmem %s11, 40
  %1883 = vst.msk [vmem:[%s1882] sm:$0xff] %vm657, %v1881
  %s1884 = scalar_lea.vmem %s0, 144
  %v1885 = vld [vmem:[%s1884] sm:$0xff]
  %v1886 = vld [vmem:[%s1884 + $0x8] sm:$0xff]
  %v1887 = vld [vmem:[%s1884 + $0x10] sm:$0xff]
  %1888 = vmatprep.subr.bf16.mxu0 %v227
  %1889 = vmatpush1.bf16.msra.mxu0 %v226
  %1890 = vmatprep.subr.bf16.mxu0 %v230
  %1891 = vmatpush1.bf16.msra.mxu0 %v229
  %1892 = vmatprep.subr.bf16.mxu0 %v233
  %1893 = vmatpush1.bf16.msra.mxu0 %v232
  %1894 = vmatprep.subr.bf16.mxu0 %v236
  %1895 = vmatpush1.bf16.msra.mxu0 %v235
  %1896 = vmatprep.subr.bf16.mxu0 %v239
  %1897 = vmatpush1.bf16.msra.mxu0 %v238
  %1898 = vmatprep.subr.bf16.mxu0 %v242
  %1899 = vmatpush1.bf16.msra.mxu0 %v241
  %1900 = vmatprep.subr.bf16.mxu0 %v245
  %1901 = vmatpush1.bf16.msra.mxu0 %v244
  %1902 = vmatprep.subr.bf16.mxu0 %v248
  %1903 = vmatpush1.bf16.msra.mxu0 %v247
  %1904 = vmatprep.subr.bf16.mxu0 0
  %1905 = vmatpush1.bf16.msra.mxu0 0
  %1906 = vmatprep.subr.bf16.mxu0 0
  %1907 = vmatpush1.bf16.msra.mxu0 0
  %1908 = vmatprep.subr.bf16.mxu0 0
  %1909 = vmatpush1.bf16.msra.mxu0 0
  %1910 = vmatprep.subr.bf16.mxu0 0
  %1911 = vmatpush1.bf16.msra.mxu0 0
  %1912 = vmatprep.subr.bf16.mxu0 0
  %1913 = vmatpush1.bf16.msra.mxu0 0
  %1914 = vmatprep.subr.bf16.mxu0 0
  %1915 = vmatpush1.bf16.msra.mxu0 0
  %1916 = vmatprep.subr.bf16.mxu0 0
  %1917 = vmatpush1.bf16.msra.mxu0 0
  %1918 = vmatprep.subr.bf16.mxu0 0
  %1919 = vmatpush1.bf16.msra.mxu0 0
  %1920 = vmatprep.mubr.bf16.mxu0 0
  %1921 = vmatmul.mubr.bf16.gmra.mrb[0].mxu0 %v1838
  %v1922 = vpop.f32.mrb[0].mxu0
  %v1923 = vadd.f32 0.0, %v1922
  %v1924 = vpop.f32.mrb[0].mxu0
  %v1925 = vadd.f32 0.0, %v1924
  %v1926 = vpop.f32.mrb[0].mxu0
  %v1927 = vpop.f32.mrb[0].mxu0
  %1928 = vdwg.mxu0
  %1929 = vmatprep.subr.bf16.mxu0 0
  %1930 = vmatpush1.bf16.msra.mxu0 %v228
  %1931 = vmatprep.subr.bf16.mxu0 0
  %1932 = vmatpush1.bf16.msra.mxu0 %v231
  %1933 = vmatprep.subr.bf16.mxu0 0
  %1934 = vmatpush1.bf16.msra.mxu0 %v234
  %1935 = vmatprep.subr.bf16.mxu0 0
  %1936 = vmatpush1.bf16.msra.mxu0 %v237
  %1937 = vmatprep.subr.bf16.mxu0 0
  %1938 = vmatpush1.bf16.msra.mxu0 %v240
  %1939 = vmatprep.subr.bf16.mxu0 0
  %1940 = vmatpush1.bf16.msra.mxu0 %v243
  %1941 = vmatprep.subr.bf16.mxu0 0
  %1942 = vmatpush1.bf16.msra.mxu0 %v246
  %1943 = vmatprep.subr.bf16.mxu0 0
  %1944 = vmatpush1.bf16.msra.mxu0 %v249
  %1945 = vmatprep.subr.bf16.mxu0 0
  %1946 = vmatpush1.bf16.msra.mxu0 0
  %1947 = vmatprep.subr.bf16.mxu0 0
  %1948 = vmatpush1.bf16.msra.mxu0 0
  %1949 = vmatprep.subr.bf16.mxu0 0
  %1950 = vmatpush1.bf16.msra.mxu0 0
  %1951 = vmatprep.subr.bf16.mxu0 0
  %1952 = vmatpush1.bf16.msra.mxu0 0
  %1953 = vmatprep.subr.bf16.mxu0 0
  %1954 = vmatpush1.bf16.msra.mxu0 0
  %1955 = vmatprep.subr.bf16.mxu0 0
  %1956 = vmatpush1.bf16.msra.mxu0 0
  %1957 = vmatprep.subr.bf16.mxu0 0
  %1958 = vmatpush1.bf16.msra.mxu0 0
  %1959 = vmatprep.subr.bf16.mxu0 0
  %1960 = vmatpush1.bf16.msra.mxu0 0
  %1961 = vmatprep.mubr.bf16.mxu0 0
  %1962 = vmatmul.mubr.bf16.gmra.mrb[0].mxu0 %v1838
  %v1963 = vpop.f32.mrb[0].mxu0
  %v1964 = vadd.f32 0.0, %v1963
  %v1965 = vpop.f32.mrb[0].mxu0
  %v1966 = vpop.f32.mrb[0].mxu0
  %v1967 = vpop.f32.mrb[0].mxu0
  %1968 = vdwg.mxu0
  %v1969 = vadd.f32 %v1885, %v1923
  %v1970 = vadd.f32 %v1886, %v1925
  %v1971 = vadd.f32 %v1887, %v1964
  %v1972 = vpack.c.bf16 %v1837, %v1837
  %1973 = vmatprep.subr.bf16.mxu0 0
  %1974 = vmatpush1.bf16.msra.mxu0 %v391
  %1975 = vmatprep.subr.bf16.mxu0 0
  %1976 = vmatpush1.bf16.msra.mxu0 %v392
  %1977 = vmatprep.subr.bf16.mxu0 0
  %1978 = vmatpush1.bf16.msra.mxu0 %v393
  %1979 = vmatprep.subr.bf16.mxu0 0
  %1980 = vmatpush1.bf16.msra.mxu0 %v394
  %1981 = vmatprep.subr.bf16.mxu0 0
  %1982 = vmatpush1.bf16.msra.mxu0 %v395
  %1983 = vmatprep.subr.bf16.mxu0 0
  %1984 = vmatpush1.bf16.msra.mxu0 %v396
  %1985 = vmatprep.subr.bf16.mxu0 0
  %1986 = vmatpush1.bf16.msra.mxu0 %v397
  %1987 = vmatprep.subr.bf16.mxu0 0
  %1988 = vmatpush1.bf16.msra.mxu0 %v398
  %1989 = vmatprep.subr.bf16.mxu0 0
  %1990 = vmatpush1.bf16.msra.mxu0 0
  %1991 = vmatprep.subr.bf16.mxu0 0
  %1992 = vmatpush1.bf16.msra.mxu0 0
  %1993 = vmatprep.subr.bf16.mxu0 0
  %1994 = vmatpush1.bf16.msra.mxu0 0
  %1995 = vmatprep.subr.bf16.mxu0 0
  %1996 = vmatpush1.bf16.msra.mxu0 0
  %1997 = vmatprep.subr.bf16.mxu0 0
  %1998 = vmatpush1.bf16.msra.mxu0 0
  %1999 = vmatprep.subr.bf16.mxu0 0
  %2000 = vmatpush1.bf16.msra.mxu0 0
  %2001 = vmatprep.subr.bf16.mxu0 0
  %2002 = vmatpush1.bf16.msra.mxu0 0
  %2003 = vmatprep.subr.bf16.mxu0 0
  %2004 = vmatpush1.bf16.msra.mxu0 0
  %2005 = vmatprep.mubr.bf16.mxu0 0
  %2006 = vmatmul.mubr.bf16.gmra.mrb[0].mxu0 %v1972
  %v2007 = vpop.f32.mrb[0].mxu0
  %v2008 = vadd.f32 0.0, %v2007
  %v2009 = vpop.f32.mrb[0].mxu0
  %v2010 = vpop.f32.mrb[0].mxu0
  %v2011 = vpop.f32.mrb[0].mxu0
  %2012 = vdwg.mxu0
  %v2013 = vpack.c.bf16 %v1826, %v1826
  %2014 = vmatprep.subr.bf16.mxu0 0
  %2015 = vmatpush1.bf16.msra.mxu0 %v480
  %2016 = vmatprep.subr.bf16.mxu0 0
  %2017 = vmatpush1.bf16.msra.mxu0 %v481
  %2018 = vmatprep.subr.bf16.mxu0 0
  %2019 = vmatpush1.bf16.msra.mxu0 %v482
  %2020 = vmatprep.subr.bf16.mxu0 0
  %2021 = vmatpush1.bf16.msra.mxu0 %v483
  %2022 = vmatprep.subr.bf16.mxu0 0
  %2023 = vmatpush1.bf16.msra.mxu0 %v484
  %2024 = vmatprep.subr.bf16.mxu0 0
  %2025 = vmatpush1.bf16.msra.mxu0 %v485
  %2026 = vmatprep.subr.bf16.mxu0 0
  %2027 = vmatpush1.bf16.msra.mxu0 %v486
  %2028 = vmatprep.subr.bf16.mxu0 0
  %2029 = vmatpush1.bf16.msra.mxu0 %v487
  %2030 = vmatprep.subr.bf16.mxu0 0
  %2031 = vmatpush1.bf16.msra.mxu0 0
  %2032 = vmatprep.subr.bf16.mxu0 0
  %2033 = vmatpush1.bf16.msra.mxu0 0
  %2034 = vmatprep.subr.bf16.mxu0 0
  %2035 = vmatpush1.bf16.msra.mxu0 0
  %2036 = vmatprep.subr.bf16.mxu0 0
  %2037 = vmatpush1.bf16.msra.mxu0 0
  %2038 = vmatprep.subr.bf16.mxu0 0
  %2039 = vmatpush1.bf16.msra.mxu0 0
  %2040 = vmatprep.subr.bf16.mxu0 0
  %2041 = vmatpush1.bf16.msra.mxu0 0
  %2042 = vmatprep.subr.bf16.mxu0 0
  %2043 = vmatpush1.bf16.msra.mxu0 0
  %2044 = vmatprep.subr.bf16.mxu0 0
  %2045 = vmatpush1.bf16.msra.mxu0 0
  %2046 = vmatprep.mubr.bf16.mxu0 0
  %2047 = vmatmul.mubr.bf16.gmra.mrb[0].mxu0 %v2013
  %v2048 = vpop.f32.mrb[0].mxu0
  %v2049 = vadd.f32 0.0, %v2048
  %v2050 = vpop.f32.mrb[0].mxu0
  %v2051 = vpop.f32.mrb[0].mxu0
  %v2052 = vpop.f32.mrb[0].mxu0
  %2053 = vdwg.mxu0
  %v2054 = vadd.f32 %v1970, %v2008
  %v2055 = vsub.f32 0.0, %v2054
  %v2056 = vmul.f32 %v2055, 1.442695
  %v2057 = vpow.pop %v2056
  %v2058 = vadd.f32 %v2057, 1.0
  %v2059 = vrcp.pop %v2058
  %v2060 = vmul.f32 1.0, %v2059
  %v2061 = vadd.f32 %v1971, %v2049
  %v2062 = vsub.f32 0.0, %v2061
  %v2063 = vmul.f32 %v2062, 1.442695
  %v2064 = vpow.pop %v2063
  %v2065 = vadd.f32 %v2064, 1.0
  %v2066 = vrcp.pop %v2065
  %v2067 = vmul.f32 1.0, %v2066
  %v2068 = vmul.f32 %v2067, %v1826
  %v2069 = vsub.f32 1.0, %v2067
  %v2070 = vmul.f32 %v2069, %v1835
  %v2071 = vadd.f32 %v2068, %v2070
  %v2072 = vmul.f32 %v2071, 1.8
  %v2073 = vadd.f32 %v2072, 0.1
  %v2074 = vsub.f32 %v1969, %v1837
  %v2075 = vmul.f32 %v2074, %v2060
  %v2076 = vadd.f32 %v1837, %v2075
  %v2077 = vsub.f32 %v2076, %v2073
  %vm2078 = vcmp.gt.f32.partialorder %v2077, 0.0
  %v2079 = vsel %vm2078, 1, 0
  %v2080 = vcvt.s32.f32 %v2079
  %v2081 = vsub.f32 1.0, %v2080
  %v2082 = vmul.f32 %v2081, %v2076
  %v2083 = vpack.c.bf16 %v2080, %v2080
  %2084 = vmatprep.subr.bf16.mxu0 0
  %2085 = vmatpush1.bf16.msra.mxu0 %v598
  %2086 = vmatprep.subr.bf16.mxu0 0
  %2087 = vmatpush1.bf16.msra.mxu0 %v599
  %2088 = vmatprep.subr.bf16.mxu0 0
  %2089 = vmatpush1.bf16.msra.mxu0 %v600
  %2090 = vmatprep.subr.bf16.mxu0 0
  %2091 = vmatpush1.bf16.msra.mxu0 %v601
  %2092 = vmatprep.subr.bf16.mxu0 0
  %2093 = vmatpush1.bf16.msra.mxu0 %v602
  %2094 = vmatprep.subr.bf16.mxu0 0
  %2095 = vmatpush1.bf16.msra.mxu0 %v603
  %2096 = vmatprep.subr.bf16.mxu0 0
  %2097 = vmatpush1.bf16.msra.mxu0 %v604
  %2098 = vmatprep.subr.bf16.mxu0 0
  %2099 = vmatpush1.bf16.msra.mxu0 %v605
  %2100 = vmatprep.subr.bf16.mxu0 0
  %2101 = vmatpush1.bf16.msra.mxu0 0
  %2102 = vmatprep.subr.bf16.mxu0 0
  %2103 = vmatpush1.bf16.msra.mxu0 0
  %2104 = vmatprep.subr.bf16.mxu0 0
  %2105 = vmatpush1.bf16.msra.mxu0 0
  %2106 = vmatprep.subr.bf16.mxu0 0
  %2107 = vmatpush1.bf16.msra.mxu0 0
  %2108 = vmatprep.subr.bf16.mxu0 0
  %2109 = vmatpush1.bf16.msra.mxu0 0
  %2110 = vmatprep.subr.bf16.mxu0 0
  %2111 = vmatpush1.bf16.msra.mxu0 0
  %2112 = vmatprep.subr.bf16.mxu0 0
  %2113 = vmatpush1.bf16.msra.mxu0 0
  %2114 = vmatprep.subr.bf16.mxu0 0
  %2115 = vmatpush1.bf16.msra.mxu0 0
  %2116 = vmatprep.mubr.bf16.mxu0 0
  %2117 = vmatmul.mubr.bf16.gmra.mrb[0].mxu0 %v2083
  %v2118 = vpop.f32.mrb[0].mxu0
  %v2119 = vadd.f32 %v129, %v2118
  %v2120 = vpop.f32.mrb[0].mxu0
  %v2121 = vpop.f32.mrb[0].mxu0
  %v2122 = vpop.f32.mrb[0].mxu0
  %2123 = vdwg.mxu0
  %v2124 = vsub.f32 %v2119, %v1881
  %v2125 = vmul.f32 %v2124, %v136
  %v2126 = vadd.f32 %v1881, %v2125
  %s2127 = scalar_lea.vmem %s11, 48
  %2128 = vst.msk [vmem:[%s2127] sm:$0xff] %vm657, %v2126
  %s2129 = scalar_lea.vmem %s0, 168
  %v2130 = vld [vmem:[%s2129] sm:$0xff]
  %v2131 = vld [vmem:[%s2129 + $0x8] sm:$0xff]
  %v2132 = vld [vmem:[%s2129 + $0x10] sm:$0xff]
  %2133 = vmatprep.subr.bf16.mxu0 %v227
  %2134 = vmatpush1.bf16.msra.mxu0 %v226
  %2135 = vmatprep.subr.bf16.mxu0 %v230
  %2136 = vmatpush1.bf16.msra.mxu0 %v229
  %2137 = vmatprep.subr.bf16.mxu0 %v233
  %2138 = vmatpush1.bf16.msra.mxu0 %v232
  %2139 = vmatprep.subr.bf16.mxu0 %v236
  %2140 = vmatpush1.bf16.msra.mxu0 %v235
  %2141 = vmatprep.subr.bf16.mxu0 %v239
  %2142 = vmatpush1.bf16.msra.mxu0 %v238
  %2143 = vmatprep.subr.bf16.mxu0 %v242
  %2144 = vmatpush1.bf16.msra.mxu0 %v241
  %2145 = vmatprep.subr.bf16.mxu0 %v245
  %2146 = vmatpush1.bf16.msra.mxu0 %v244
  %2147 = vmatprep.subr.bf16.mxu0 %v248
  %2148 = vmatpush1.bf16.msra.mxu0 %v247
  %2149 = vmatprep.subr.bf16.mxu0 0
  %2150 = vmatpush1.bf16.msra.mxu0 0
  %2151 = vmatprep.subr.bf16.mxu0 0
  %2152 = vmatpush1.bf16.msra.mxu0 0
  %2153 = vmatprep.subr.bf16.mxu0 0
  %2154 = vmatpush1.bf16.msra.mxu0 0
  %2155 = vmatprep.subr.bf16.mxu0 0
  %2156 = vmatpush1.bf16.msra.mxu0 0
  %2157 = vmatprep.subr.bf16.mxu0 0
  %2158 = vmatpush1.bf16.msra.mxu0 0
  %2159 = vmatprep.subr.bf16.mxu0 0
  %2160 = vmatpush1.bf16.msra.mxu0 0
  %2161 = vmatprep.subr.bf16.mxu0 0
  %2162 = vmatpush1.bf16.msra.mxu0 0
  %2163 = vmatprep.subr.bf16.mxu0 0
  %2164 = vmatpush1.bf16.msra.mxu0 0
  %2165 = vmatprep.mubr.bf16.mxu0 0
  %2166 = vmatmul.mubr.bf16.gmra.mrb[0].mxu0 %v2083
  %v2167 = vpop.f32.mrb[0].mxu0
  %v2168 = vadd.f32 0.0, %v2167
  %v2169 = vpop.f32.mrb[0].mxu0
  %v2170 = vadd.f32 0.0, %v2169
  %v2171 = vpop.f32.mrb[0].mxu0
  %v2172 = vpop.f32.mrb[0].mxu0
  %2173 = vdwg.mxu0
  %2174 = vmatprep.subr.bf16.mxu0 0
  %2175 = vmatpush1.bf16.msra.mxu0 %v228
  %2176 = vmatprep.subr.bf16.mxu0 0
  %2177 = vmatpush1.bf16.msra.mxu0 %v231
  %2178 = vmatprep.subr.bf16.mxu0 0
  %2179 = vmatpush1.bf16.msra.mxu0 %v234
  %2180 = vmatprep.subr.bf16.mxu0 0
  %2181 = vmatpush1.bf16.msra.mxu0 %v237
  %2182 = vmatprep.subr.bf16.mxu0 0
  %2183 = vmatpush1.bf16.msra.mxu0 %v240
  %2184 = vmatprep.subr.bf16.mxu0 0
  %2185 = vmatpush1.bf16.msra.mxu0 %v243
  %2186 = vmatprep.subr.bf16.mxu0 0
  %2187 = vmatpush1.bf16.msra.mxu0 %v246
  %2188 = vmatprep.subr.bf16.mxu0 0
  %2189 = vmatpush1.bf16.msra.mxu0 %v249
  %2190 = vmatprep.subr.bf16.mxu0 0
  %2191 = vmatpush1.bf16.msra.mxu0 0
  %2192 = vmatprep.subr.bf16.mxu0 0
  %2193 = vmatpush1.bf16.msra.mxu0 0
  %2194 = vmatprep.subr.bf16.mxu0 0
  %2195 = vmatpush1.bf16.msra.mxu0 0
  %2196 = vmatprep.subr.bf16.mxu0 0
  %2197 = vmatpush1.bf16.msra.mxu0 0
  %2198 = vmatprep.subr.bf16.mxu0 0
  %2199 = vmatpush1.bf16.msra.mxu0 0
  %2200 = vmatprep.subr.bf16.mxu0 0
  %2201 = vmatpush1.bf16.msra.mxu0 0
  %2202 = vmatprep.subr.bf16.mxu0 0
  %2203 = vmatpush1.bf16.msra.mxu0 0
  %2204 = vmatprep.subr.bf16.mxu0 0
  %2205 = vmatpush1.bf16.msra.mxu0 0
  %2206 = vmatprep.mubr.bf16.mxu0 0
  %2207 = vmatmul.mubr.bf16.gmra.mrb[0].mxu0 %v2083
  %v2208 = vpop.f32.mrb[0].mxu0
  %v2209 = vadd.f32 0.0, %v2208
  %v2210 = vpop.f32.mrb[0].mxu0
  %v2211 = vpop.f32.mrb[0].mxu0
  %v2212 = vpop.f32.mrb[0].mxu0
  %2213 = vdwg.mxu0
  %v2214 = vadd.f32 %v2130, %v2168
  %v2215 = vadd.f32 %v2131, %v2170
  %v2216 = vadd.f32 %v2132, %v2209
  %v2217 = vpack.c.bf16 %v2082, %v2082
  %2218 = vmatprep.subr.bf16.mxu0 0
  %2219 = vmatpush1.bf16.msra.mxu0 %v391
  %2220 = vmatprep.subr.bf16.mxu0 0
  %2221 = vmatpush1.bf16.msra.mxu0 %v392
  %2222 = vmatprep.subr.bf16.mxu0 0
  %2223 = vmatpush1.bf16.msra.mxu0 %v393
  %2224 = vmatprep.subr.bf16.mxu0 0
  %2225 = vmatpush1.bf16.msra.mxu0 %v394
  %2226 = vmatprep.subr.bf16.mxu0 0
  %2227 = vmatpush1.bf16.msra.mxu0 %v395
  %2228 = vmatprep.subr.bf16.mxu0 0
  %2229 = vmatpush1.bf16.msra.mxu0 %v396
  %2230 = vmatprep.subr.bf16.mxu0 0
  %2231 = vmatpush1.bf16.msra.mxu0 %v397
  %2232 = vmatprep.subr.bf16.mxu0 0
  %2233 = vmatpush1.bf16.msra.mxu0 %v398
  %2234 = vmatprep.subr.bf16.mxu0 0
  %2235 = vmatpush1.bf16.msra.mxu0 0
  %2236 = vmatprep.subr.bf16.mxu0 0
  %2237 = vmatpush1.bf16.msra.mxu0 0
  %2238 = vmatprep.subr.bf16.mxu0 0
  %2239 = vmatpush1.bf16.msra.mxu0 0
  %2240 = vmatprep.subr.bf16.mxu0 0
  %2241 = vmatpush1.bf16.msra.mxu0 0
  %2242 = vmatprep.subr.bf16.mxu0 0
  %2243 = vmatpush1.bf16.msra.mxu0 0
  %2244 = vmatprep.subr.bf16.mxu0 0
  %2245 = vmatpush1.bf16.msra.mxu0 0
  %2246 = vmatprep.subr.bf16.mxu0 0
  %2247 = vmatpush1.bf16.msra.mxu0 0
  %2248 = vmatprep.subr.bf16.mxu0 0
  %2249 = vmatpush1.bf16.msra.mxu0 0
  %2250 = vmatprep.mubr.bf16.mxu0 0
  %2251 = vmatmul.mubr.bf16.gmra.mrb[0].mxu0 %v2217
  %v2252 = vpop.f32.mrb[0].mxu0
  %v2253 = vadd.f32 0.0, %v2252
  %v2254 = vpop.f32.mrb[0].mxu0
  %v2255 = vpop.f32.mrb[0].mxu0
  %v2256 = vpop.f32.mrb[0].mxu0
  %2257 = vdwg.mxu0
  %v2258 = vpack.c.bf16 %v2071, %v2071
  %2259 = vmatprep.subr.bf16.mxu0 0
  %2260 = vmatpush1.bf16.msra.mxu0 %v480
  %2261 = vmatprep.subr.bf16.mxu0 0
  %2262 = vmatpush1.bf16.msra.mxu0 %v481
  %2263 = vmatprep.subr.bf16.mxu0 0
  %2264 = vmatpush1.bf16.msra.mxu0 %v482
  %2265 = vmatprep.subr.bf16.mxu0 0
  %2266 = vmatpush1.bf16.msra.mxu0 %v483
  %2267 = vmatprep.subr.bf16.mxu0 0
  %2268 = vmatpush1.bf16.msra.mxu0 %v484
  %2269 = vmatprep.subr.bf16.mxu0 0
  %2270 = vmatpush1.bf16.msra.mxu0 %v485
  %2271 = vmatprep.subr.bf16.mxu0 0
  %2272 = vmatpush1.bf16.msra.mxu0 %v486
  %2273 = vmatprep.subr.bf16.mxu0 0
  %2274 = vmatpush1.bf16.msra.mxu0 %v487
  %2275 = vmatprep.subr.bf16.mxu0 0
  %2276 = vmatpush1.bf16.msra.mxu0 0
  %2277 = vmatprep.subr.bf16.mxu0 0
  %2278 = vmatpush1.bf16.msra.mxu0 0
  %2279 = vmatprep.subr.bf16.mxu0 0
  %2280 = vmatpush1.bf16.msra.mxu0 0
  %2281 = vmatprep.subr.bf16.mxu0 0
  %2282 = vmatpush1.bf16.msra.mxu0 0
  %2283 = vmatprep.subr.bf16.mxu0 0
  %2284 = vmatpush1.bf16.msra.mxu0 0
  %2285 = vmatprep.subr.bf16.mxu0 0
  %2286 = vmatpush1.bf16.msra.mxu0 0
  %2287 = vmatprep.subr.bf16.mxu0 0
  %2288 = vmatpush1.bf16.msra.mxu0 0
  %2289 = vmatprep.subr.bf16.mxu0 0
  %2290 = vmatpush1.bf16.msra.mxu0 0
  %2291 = vmatprep.mubr.bf16.mxu0 0
  %2292 = vmatmul.mubr.bf16.gmra.mrb[0].mxu0 %v2258
  %v2293 = vpop.f32.mrb[0].mxu0
  %v2294 = vadd.f32 0.0, %v2293
  %v2295 = vpop.f32.mrb[0].mxu0
  %v2296 = vpop.f32.mrb[0].mxu0
  %v2297 = vpop.f32.mrb[0].mxu0
  %2298 = vdwg.mxu0
  %v2299 = vadd.f32 %v2215, %v2253
  %v2300 = vsub.f32 0.0, %v2299
  %v2301 = vmul.f32 %v2300, 1.442695
  %v2302 = vpow.pop %v2301
  %v2303 = vadd.f32 %v2302, 1.0
  %v2304 = vrcp.pop %v2303
  %v2305 = vmul.f32 1.0, %v2304
  %v2306 = vadd.f32 %v2216, %v2294
  %v2307 = vsub.f32 0.0, %v2306
  %v2308 = vmul.f32 %v2307, 1.442695
  %v2309 = vpow.pop %v2308
  %v2310 = vadd.f32 %v2309, 1.0
  %v2311 = vrcp.pop %v2310
  %v2312 = vmul.f32 1.0, %v2311
  %v2313 = vmul.f32 %v2312, %v2071
  %v2314 = vsub.f32 1.0, %v2312
  %v2315 = vmul.f32 %v2314, %v2080
  %v2316 = vadd.f32 %v2313, %v2315
  %v2317 = vmul.f32 %v2316, 1.8
  %v2318 = vadd.f32 %v2317, 0.1
  %v2319 = vsub.f32 %v2214, %v2082
  %v2320 = vmul.f32 %v2319, %v2305
  %v2321 = vadd.f32 %v2082, %v2320
  %v2322 = vsub.f32 %v2321, %v2318
  %vm2323 = vcmp.gt.f32.partialorder %v2322, 0.0
  %v2324 = vsel %vm2323, 1, 0
  %v2325 = vcvt.s32.f32 %v2324
  %v2326 = vsub.f32 1.0, %v2325
  %v2327 = vmul.f32 %v2326, %v2321
  %v2328 = vpack.c.bf16 %v2325, %v2325
  %2329 = vmatprep.subr.bf16.mxu0 0
  %2330 = vmatpush1.bf16.msra.mxu0 %v598
  %2331 = vmatprep.subr.bf16.mxu0 0
  %2332 = vmatpush1.bf16.msra.mxu0 %v599
  %2333 = vmatprep.subr.bf16.mxu0 0
  %2334 = vmatpush1.bf16.msra.mxu0 %v600
  %2335 = vmatprep.subr.bf16.mxu0 0
  %2336 = vmatpush1.bf16.msra.mxu0 %v601
  %2337 = vmatprep.subr.bf16.mxu0 0
  %2338 = vmatpush1.bf16.msra.mxu0 %v602
  %2339 = vmatprep.subr.bf16.mxu0 0
  %2340 = vmatpush1.bf16.msra.mxu0 %v603
  %2341 = vmatprep.subr.bf16.mxu0 0
  %2342 = vmatpush1.bf16.msra.mxu0 %v604
  %2343 = vmatprep.subr.bf16.mxu0 0
  %2344 = vmatpush1.bf16.msra.mxu0 %v605
  %2345 = vmatprep.subr.bf16.mxu0 0
  %2346 = vmatpush1.bf16.msra.mxu0 0
  %2347 = vmatprep.subr.bf16.mxu0 0
  %2348 = vmatpush1.bf16.msra.mxu0 0
  %2349 = vmatprep.subr.bf16.mxu0 0
  %2350 = vmatpush1.bf16.msra.mxu0 0
  %2351 = vmatprep.subr.bf16.mxu0 0
  %2352 = vmatpush1.bf16.msra.mxu0 0
  %2353 = vmatprep.subr.bf16.mxu0 0
  %2354 = vmatpush1.bf16.msra.mxu0 0
  %2355 = vmatprep.subr.bf16.mxu0 0
  %2356 = vmatpush1.bf16.msra.mxu0 0
  %2357 = vmatprep.subr.bf16.mxu0 0
  %2358 = vmatpush1.bf16.msra.mxu0 0
  %2359 = vmatprep.subr.bf16.mxu0 0
  %2360 = vmatpush1.bf16.msra.mxu0 0
  %2361 = vmatprep.mubr.bf16.mxu0 0
  %2362 = vmatmul.mubr.bf16.gmra.mrb[0].mxu0 %v2328
  %v2363 = vpop.f32.mrb[0].mxu0
  %v2364 = vadd.f32 %v129, %v2363
  %v2365 = vpop.f32.mrb[0].mxu0
  %v2366 = vpop.f32.mrb[0].mxu0
  %v2367 = vpop.f32.mrb[0].mxu0
  %2368 = vdwg.mxu0
  %v2369 = vsub.f32 %v2364, %v2126
  %v2370 = vmul.f32 %v2369, %v136
  %v2371 = vadd.f32 %v2126, %v2370
  %s2372 = scalar_lea.vmem %s11, 56
  %2373 = vst.msk [vmem:[%s2372] sm:$0xff] %vm657, %v2371
  %2374 = vst [vmem:[%s12] sm:$0xff] %v2327
  %2375 = vst [vmem:[%s13] sm:$0xff] %v2325
  %2376 = vst [vmem:[%s14] sm:$0xff] %v2316
  %2377 = vst.msk [vmem:[%s15] sm:$0xff] %vm657, %v2371
  %v2378 = vld [vmem:[%s11] sm:$0xff]
  %v2379 = vld [vmem:[%s11 + $0x8] sm:$0xff]
  %v2380 = vld [vmem:[%s11 + $0x10] sm:$0xff]
  %v2381 = vld [vmem:[%s11 + $0x18] sm:$0xff]
  %v2382 = vld [vmem:[%s11 + $0x20] sm:$0xff]
  %v2383 = vld [vmem:[%s11 + $0x28] sm:$0xff]
  %v2384 = vld [vmem:[%s11 + $0x30] sm:$0xff]
  %v2385 = vld [vmem:[%s11 + $0x38] sm:$0xff]
  %v2386 = vsel %vm657, %v2378, -inf
  %2387 = vmax.xlane.f32.xlu0 %v2386
  %v2388 = vpop.xlane.xlu0 %2387
  %v2389 = vsel %vm657, %v2379, -inf
  %2390 = vmax.xlane.f32.xlu0 %v2389
  %v2391 = vpop.xlane.xlu0 %2390
  %v2392 = vsel %vm657, %v2380, -inf
  %2393 = vmax.xlane.f32.xlu0 %v2392
  %v2394 = vpop.xlane.xlu0 %2393
  %v2395 = vsel %vm657, %v2381, -inf
  %2396 = vmax.xlane.f32.xlu0 %v2395
  %v2397 = vpop.xlane.xlu0 %2396
  %v2398 = vsel %vm657, %v2382, -inf
  %2399 = vmax.xlane.f32.xlu0 %v2398
  %v2400 = vpop.xlane.xlu0 %2399
  %v2401 = vsel %vm657, %v2383, -inf
  %2402 = vmax.xlane.f32.xlu0 %v2401
  %v2403 = vpop.xlane.xlu0 %2402
  %v2404 = vsel %vm657, %v2384, -inf
  %2405 = vmax.xlane.f32.xlu0 %v2404
  %v2406 = vpop.xlane.xlu0 %2405
  %v2407 = vsel %vm657, %v2385, -inf
  %2408 = vmax.xlane.f32.xlu0 %v2407
  %v2409 = vpop.xlane.xlu0 %2408
  %v2410 = vsub.f32 %v2378, %v2388
  %v2411 = vsub.f32 %v2379, %v2391
  %v2412 = vsub.f32 %v2380, %v2394
  %v2413 = vsub.f32 %v2381, %v2397
  %v2414 = vsub.f32 %v2382, %v2400
  %v2415 = vsub.f32 %v2383, %v2403
  %v2416 = vsub.f32 %v2384, %v2406
  %v2417 = vsub.f32 %v2385, %v2409
  %v2418 = vmul.f32 %v2410, 1.442695
  %v2419 = vpow.pop %v2418
  %v2420 = vmul.f32 %v2411, 1.442695
  %v2421 = vpow.pop %v2420
  %v2422 = vmul.f32 %v2412, 1.442695
  %v2423 = vpow.pop %v2422
  %v2424 = vmul.f32 %v2413, 1.442695
  %v2425 = vpow.pop %v2424
  %v2426 = vmul.f32 %v2414, 1.442695
  %v2427 = vpow.pop %v2426
  %v2428 = vmul.f32 %v2415, 1.442695
  %v2429 = vpow.pop %v2428
  %v2430 = vmul.f32 %v2416, 1.442695
  %v2431 = vpow.pop %v2430
  %v2432 = vmul.f32 %v2417, 1.442695
  %v2433 = vpow.pop %v2432
  %v2434 = vsel %vm657, %v2419, 0.0
  %2435 = vadd.xlane.f32.xlu0 %v2434
  %v2436 = vpop.xlane.xlu0 %2435
  %v2437 = vsel %vm657, %v2421, 0.0
  %2438 = vadd.xlane.f32.xlu0 %v2437
  %v2439 = vpop.xlane.xlu0 %2438
  %v2440 = vsel %vm657, %v2423, 0.0
  %2441 = vadd.xlane.f32.xlu0 %v2440
  %v2442 = vpop.xlane.xlu0 %2441
  %v2443 = vsel %vm657, %v2425, 0.0
  %2444 = vadd.xlane.f32.xlu0 %v2443
  %v2445 = vpop.xlane.xlu0 %2444
  %v2446 = vsel %vm657, %v2427, 0.0
  %2447 = vadd.xlane.f32.xlu0 %v2446
  %v2448 = vpop.xlane.xlu0 %2447
  %v2449 = vsel %vm657, %v2429, 0.0
  %2450 = vadd.xlane.f32.xlu0 %v2449
  %v2451 = vpop.xlane.xlu0 %2450
  %v2452 = vsel %vm657, %v2431, 0.0
  %2453 = vadd.xlane.f32.xlu0 %v2452
  %v2454 = vpop.xlane.xlu0 %2453
  %v2455 = vsel %vm657, %v2433, 0.0
  %2456 = vadd.xlane.f32.xlu0 %v2455
  %v2457 = vpop.xlane.xlu0 %2456
  %v2458 = vlog2.pop %v2436
  %v2459 = vmul.f32 %v2458, 0.6931472
  %v2460 = vlog2.pop %v2439
  %v2461 = vmul.f32 %v2460, 0.6931472
  %v2462 = vlog2.pop %v2442
  %v2463 = vmul.f32 %v2462, 0.6931472
  %v2464 = vlog2.pop %v2445
  %v2465 = vmul.f32 %v2464, 0.6931472
  %v2466 = vlog2.pop %v2448
  %v2467 = vmul.f32 %v2466, 0.6931472
  %v2468 = vlog2.pop %v2451
  %v2469 = vmul.f32 %v2468, 0.6931472
  %v2470 = vlog2.pop %v2454
  %v2471 = vmul.f32 %v2470, 0.6931472
  %v2472 = vlog2.pop %v2457
  %v2473 = vmul.f32 %v2472, 0.6931472
  %v2474 = vadd.f32 %v2388, %v2459
  %v2475 = vadd.f32 %v2391, %v2461
  %v2476 = vadd.f32 %v2394, %v2463
  %v2477 = vadd.f32 %v2397, %v2465
  %v2478 = vadd.f32 %v2400, %v2467
  %v2479 = vadd.f32 %v2403, %v2469
  %v2480 = vadd.f32 %v2406, %v2471
  %v2481 = vadd.f32 %v2409, %v2473
  %v2482 = vsub.f32 %v2378, %v2474
  %v2483 = vsub.f32 %v2379, %v2475
  %v2484 = vsub.f32 %v2380, %v2476
  %v2485 = vsub.f32 %v2381, %v2477
  %v2486 = vsub.f32 %v2382, %v2478
  %v2487 = vsub.f32 %v2383, %v2479
  %v2488 = vsub.f32 %v2384, %v2480
  %v2489 = vsub.f32 %v2385, %v2481
  %2490 = vst.msk [vmem:[%s11] sm:$0xff] %vm657, %v2482
  %2491 = vst.msk [vmem:[%s11 + $0x8] sm:$0xff] %vm657, %v2483
  %2492 = vst.msk [vmem:[%s11 + $0x10] sm:$0xff] %vm657, %v2484
  %2493 = vst.msk [vmem:[%s11 + $0x18] sm:$0xff] %vm657, %v2485
  %2494 = vst.msk [vmem:[%s11 + $0x20] sm:$0xff] %vm657, %v2486
  %2495 = vst.msk [vmem:[%s11 + $0x28] sm:$0xff] %vm657, %v2487
  %2496 = vst.msk [vmem:[%s11 + $0x30] sm:$0xff] %vm657, %v2488
  %2497 = vst.msk [vmem:[%s11 + $0x38] sm:$0xff] %vm657, %v2489
  // Predicated region
  $region46: #{snn_forward_sequence.1} parent=0 // pred_check
    _
  $region47: #{snn_forward_sequence.1} parent=0 // pred_check_branch
    %2499 = sbr.rel (0) target = $region49
  $region48: #{snn_forward_sequence.1} parent=0 // pred_region
    _
  $region49: #{snn_forward_sequence.1} parent=0 // pred_fallthru
    _
  // Predicated region
  $region50: #{snn_forward_sequence.1} parent=0 // pred_check
    _
  $region51: #{snn_forward_sequence.1} parent=0 // pred_check_branch
    %2501 = sbr.rel (0) target = $region53
  $region52: #{snn_forward_sequence.1} parent=0 // pred_region
    _
  $region53: #{snn_forward_sequence.1} parent=0 // pred_fallthru
    _
  // Predicated region
  $region54: #{snn_forward_sequence.1} parent=0 // pred_check
    _
  $region55: #{snn_forward_sequence.1} parent=0 // pred_check_branch
    %2503 = sbr.rel (0) target = $region57
  $region56: #{snn_forward_sequence.1} parent=0 // pred_region
    _
  $region57: #{snn_forward_sequence.1} parent=0 // pred_fallthru
    _
  // Predicated region
  $region58: #{snn_forward_sequence.1} parent=0 // pred_check
    _
  $region59: #{snn_forward_sequence.1} parent=0 // pred_check_branch
    %2505 = sbr.rel (0) target = $region61
  $region60: #{snn_forward_sequence.1} parent=0 // pred_region
    _
  $region61: #{snn_forward_sequence.1} parent=0 // pred_fallthru
    _
  // Predicated region
  $region62: #{snn_forward_sequence.1} parent=0 // pred_check
    _
  $region63: #{snn_forward_sequence.1} parent=0 // pred_check_branch
    %2507 = sbr.rel (0) target = $region65
  $region64: #{snn_forward_sequence.1} parent=0 // pred_region
    _
  $region65: #{snn_forward_sequence.1} parent=0 // pred_fallthru
    _
  // Predicated region
  $region66: #{snn_forward_sequence.1} parent=0 // pred_check
    _
  $region67: #{snn_forward_sequence.1} parent=0 // pred_check_branch
    %2509 = sbr.rel (0) target = $region69
  $region68: #{snn_forward_sequence.1} parent=0 // pred_region
    _
  $region69: #{snn_forward_sequence.1} parent=0 // pred_fallthru
    _
  // Predicated region
  $region70: #{snn_forward_sequence.1} parent=0 // pred_check
    _
  $region71: #{snn_forward_sequence.1} parent=0 // pred_check_branch
    %2511 = sbr.rel (0) target = $region73
  $region72: #{snn_forward_sequence.1} parent=0 // pred_region
    _
  $region73: #{snn_forward_sequence.1} parent=0 // pred_fallthru
    _
  // Predicated region
  $region74: #{snn_forward_sequence.1} parent=0 // pred_check
    _
  $region75: #{snn_forward_sequence.1} parent=0 // pred_check_branch
    %2513 = sbr.rel (0) target = $region77
  $region76: #{snn_forward_sequence.1} parent=0 // pred_region
    _
  $region77: #{snn_forward_sequence.1} parent=0 // pred_fallthru
    _
  // Predicated region
  $region78: #{snn_forward_sequence.1} parent=0 // pred_check
    _
  $region79: #{snn_forward_sequence.1} parent=0 // pred_check_branch
    %2515 = sbr.rel (0) target = $region81
  $region80: #{snn_forward_sequence.1} parent=0 // pred_region
    _
  $region81: #{snn_forward_sequence.1} parent=0 // pred_fallthru
    _
  // Predicated region
  $region82: #{snn_forward_sequence.1} parent=0 // pred_check
    _
  $region83: #{snn_forward_sequence.1} parent=0 // pred_check_branch
    %2517 = sbr.rel (0) target = $region85
  $region84: #{snn_forward_sequence.1} parent=0 // pred_region
    _
  $region85: #{snn_forward_sequence.1} parent=0 // pred_fallthru
    _

</llo_original>
